<compile_context>
chip_gen: v5e
topology: v5e:2x2
jax: 0.10.0
libtpu: 0.0.40
codegen_flags: <defaults>
</compile_context>

<pallas_src>
import jax
import jax.numpy as jnp
from jax.experimental import pallas as pl
from jax.experimental.pallas import tpu as pltpu

EPS = 1e-5
D_IN = 1024
D_HID = 1024
D_MID = 512
D_OUT = 2
D_OUT_PAD = 128   # lane-dense padded fc5 width; wrapper slices [:, :2]
TK = 256          # fc1 K-tile -> 4 double-buffered w1 DMAs overlapped w/ compute


def projection_nn_kernel(
    x_ref, bn_g_ref, bn_b_ref,
    w1_ref, b1_ref,
    w4_ref, b4_ref,
    ln_g_ref, ln_b_ref,
    w5_ref, b5_ref,
    o_ref,
    acc_ref,
):
    k = pl.program_id(0)

    @pl.when(k == 0)
    def _init():
        acc_ref[...] = jnp.zeros_like(acc_ref)

    # --- BatchNorm1d (training-mode batch stats) on this (B, TK) feature
    #     slice.  BN is per-feature, so slicing the feature axis is exact.
    #     Fused scale/shift form; all statistics math stays in f32.
    x = x_ref[...]                                            # (B, TK) f32
    mu = jnp.mean(x, axis=0, keepdims=True)
    var = jnp.mean((x - mu) ** 2, axis=0, keepdims=True)      # biased (1/N)
    scale = bn_g_ref[...] * jax.lax.rsqrt(var + EPS)          # (1, TK)
    shift = bn_b_ref[...] - mu * scale                        # (1, TK)
    xn = x * scale + shift

    # --- fc1 partial product: bf16 MXU inputs, f32 accumulation in VMEM.
    acc_ref[...] += jnp.dot(
        xn.astype(jnp.bfloat16), w1_ref[...],
        preferred_element_type=jnp.float32)

    # --- Epilogue on the last K step: bias+ReLU, fc4, LN, ReLU, fc5.
    @pl.when(k == pl.num_programs(0) - 1)
    def _finalize():
        h = jnp.maximum(acc_ref[...] + b1_ref[...], 0.0)      # (B, 1024) f32

        # fc4: Linear(1024 -> 512), bf16 MXU inputs, f32 accumulation.
        h4 = jnp.dot(h.astype(jnp.bfloat16), w4_ref[...],
                     preferred_element_type=jnp.float32) + b4_ref[...]

        # LayerNorm(512) in f32.
        mu2 = jnp.mean(h4, axis=-1, keepdims=True)
        var2 = jnp.mean((h4 - mu2) ** 2, axis=-1, keepdims=True)
        h4 = (h4 - mu2) * jax.lax.rsqrt(var2 + EPS)
        h4 = h4 * ln_g_ref[...] + ln_b_ref[...]
        h4 = jnp.maximum(h4, 0.0)

        # fc5: Linear(512 -> 2), zero-padded to 128 output lanes so the final
        # store is lane-dense (no masked vst).  Flatten on (B, 2) is a no-op.
        out = jnp.dot(h4.astype(jnp.bfloat16), w5_ref[...],
                      preferred_element_type=jnp.float32) + b5_ref[...]
        o_ref[...] = out.astype(o_ref.dtype)


def projection_nn_forward(x, params):
    """x: (B, 1024) f32 with B a multiple of 8.  Returns (B, 2) f32."""
    B = x.shape[0]
    assert B % 8 == 0, "batch must be a multiple of 8 (sublane alignment)"
    assert x.shape[1] == D_IN
    n_k = D_IN // TK

    flops = 2 * B * (D_IN * D_HID + D_HID * D_MID + D_MID * D_OUT_PAD)
    transcendentals = D_IN + B          # BN rsqrt per feature + LN rsqrt per row
    bytes_accessed = (
        x.size * 4
        + (params["w1"].size + params["w4"].size + params["w5"].size) * 2
        + (params["b1"].size + params["b4"].size + params["b5"].size
           + params["bn_g"].size + params["bn_b"].size
           + params["ln_g"].size + params["ln_b"].size) * 4
        + B * D_OUT_PAD * 4)

    out_padded = pl.pallas_call(
        projection_nn_kernel,
        out_shape=jax.ShapeDtypeStruct((B, D_OUT_PAD), jnp.float32),
        grid_spec=pltpu.PrefetchScalarGridSpec(
            num_scalar_prefetch=0,
            grid=(n_k,),
            in_specs=[
                pl.BlockSpec((B, TK), lambda k: (0, k)),             # x slice
                pl.BlockSpec((1, TK), lambda k: (0, k)),             # bn gamma
                pl.BlockSpec((1, TK), lambda k: (0, k)),             # bn beta
                pl.BlockSpec((TK, D_HID), lambda k: (k, 0)),         # w1 K-tile (streamed)
                pl.BlockSpec((1, D_HID), lambda k: (0, 0)),          # b1 (resident)
                pl.BlockSpec((D_HID, D_MID), lambda k: (0, 0)),      # w4 (resident)
                pl.BlockSpec((1, D_MID), lambda k: (0, 0)),          # b4
                pl.BlockSpec((1, D_MID), lambda k: (0, 0)),          # ln gamma
                pl.BlockSpec((1, D_MID), lambda k: (0, 0)),          # ln beta
                pl.BlockSpec((D_MID, D_OUT_PAD), lambda k: (0, 0)),  # w5 (padded)
                pl.BlockSpec((1, D_OUT_PAD), lambda k: (0, 0)),      # b5 (padded)
            ],
            out_specs=pl.BlockSpec((B, D_OUT_PAD), lambda k: (0, 0)),
            scratch_shapes=[pltpu.VMEM((B, D_HID), jnp.float32)],    # fc1 f32 acc
        ),
        compiler_params=pltpu.CompilerParams(
            dimension_semantics=("arbitrary",),       # K reduction, output revisited
            vmem_limit_bytes=32 * 1024 * 1024),
        cost_estimate=pl.CostEstimate(
            flops=flops, transcendentals=transcendentals,
            bytes_accessed=bytes_accessed),
    )(
        x,
        params["bn_g"], params["bn_b"],
        params["w1"], params["b1"],
        params["w4"], params["b4"],
        params["ln_g"], params["ln_b"],
        params["w5"], params["b5"],
    )
    return out_padded[:, :D_OUT]


def init_params(key):
    ks = jax.random.split(key, 3)
    # Linear weights stored as (in, out) == torch weight.T, in bfloat16.
    w1 = (0.02 * jax.random.normal(ks[0], (D_IN, D_HID))).astype(jnp.bfloat16)
    w4 = (0.02 * jax.random.normal(ks[1], (D_HID, D_MID))).astype(jnp.bfloat16)
    w5 = (0.02 * jax.random.normal(ks[2], (D_MID, D_OUT))).astype(jnp.bfloat16)
    w5_pad = jnp.zeros((D_MID, D_OUT_PAD), jnp.bfloat16).at[:, :D_OUT].set(w5)
    return {
        "bn_g": jnp.ones((1, D_IN), jnp.float32),
        "bn_b": jnp.zeros((1, D_IN), jnp.float32),
        "w1": w1,
        "b1": jnp.zeros((1, D_HID), jnp.float32),
        "w4": w4,
        "b4": jnp.zeros((1, D_MID), jnp.float32),
        "ln_g": jnp.ones((1, D_MID), jnp.float32),
        "ln_b": jnp.zeros((1, D_MID), jnp.float32),
        "w5": w5_pad,
        "b5": jnp.zeros((1, D_OUT_PAD), jnp.float32),
    }


def reference_forward(x, p):
    """Pure-JAX f32 reference of the same forward pass (weights upcast)."""
    w1 = p["w1"].astype(jnp.float32)
    w4 = p["w4"].astype(jnp.float32)
    w5 = p["w5"].astype(jnp.float32)[:, :D_OUT]
    b5 = p["b5"][:, :D_OUT]
    mu = jnp.mean(x, axis=0, keepdims=True)
    var = jnp.mean((x - mu) ** 2, axis=0, keepdims=True)
    h = (x - mu) / jnp.sqrt(var + EPS) * p["bn_g"] + p["bn_b"]
    h = jnp.maximum(h @ w1 + p["b1"], 0.0)
    h = h @ w4 + p["b4"]
    mu2 = jnp.mean(h, axis=-1, keepdims=True)
    var2 = jnp.mean((h - mu2) ** 2, axis=-1, keepdims=True)
    h = (h - mu2) / jnp.sqrt(var2 + EPS) * p["ln_g"] + p["ln_b"]
    h = jnp.maximum(h, 0.0)
    return h @ w5 + b5


if __name__ == "__main__":
    key = jax.random.PRNGKey(0)
    k_x, k_p = jax.random.split(key)

    B = 8
    x = jax.random.normal(k_x, (B, D_IN), dtype=jnp.float32)
    params = init_params(k_p)

    out = projection_nn_forward(x, params)
    out = jax.block_until_ready(out)

    ref = reference_forward(x, params)
    assert out.shape == (B, D_OUT), out.shape
    # bf16 matmul operands -> tolerance loosened vs. an all-f32 version.
    assert jnp.allclose(out, ref, atol=2e-2, rtol=2e-2), (
        float(jnp.max(jnp.abs(out - ref)))
    )
    print("KERNEL_OK")
</pallas_src>

<mosaic_0001>
module attributes {stable_mosaic.version = 11 : i64} {
  func.func @projection_nn_kernel(%arg0: i32, %arg1: memref<8x256xf32, #tpu.memory_space<vmem>>, %arg2: memref<1x256xf32, #tpu.memory_space<vmem>>, %arg3: memref<1x256xf32, #tpu.memory_space<vmem>>, %arg4: memref<256x1024xbf16, #tpu.memory_space<vmem>>, %arg5: memref<1x1024xf32, #tpu.memory_space<vmem>>, %arg6: memref<1024x512xbf16, #tpu.memory_space<vmem>>, %arg7: memref<1x512xf32, #tpu.memory_space<vmem>>, %arg8: memref<1x512xf32, #tpu.memory_space<vmem>>, %arg9: memref<1x512xf32, #tpu.memory_space<vmem>>, %arg10: memref<512x128xbf16, #tpu.memory_space<vmem>>, %arg11: memref<1x128xf32, #tpu.memory_space<vmem>>, %arg12: memref<8x128xf32, #tpu.memory_space<vmem>>, %arg13: memref<8x1024xf32, #tpu.memory_space<vmem>>) attributes {dimension_semantics = [#tpu.dimension_semantics<arbitrary>], iteration_bounds = array<i64: 4>, scalar_prefetch = 0 : i64, scratch_operands = 1 : i64, tpu.core_type = #tpu.core_type<tc>, window_params = [{transform_indices = @transform_0, window_bounds = array<i64: 8, 256>}, {transform_indices = @transform_1, window_bounds = array<i64: 1, 256>}, {transform_indices = @transform_2, window_bounds = array<i64: 1, 256>}, {transform_indices = @transform_3, window_bounds = array<i64: 256, 1024>}, {pipeline_mode = #tpu.pipeline_mode<synchronous>, transform_indices = @transform_4, window_bounds = array<i64: 1, 1024>}, {pipeline_mode = #tpu.pipeline_mode<synchronous>, transform_indices = @transform_5, window_bounds = array<i64: 1024, 512>}, {pipeline_mode = #tpu.pipeline_mode<synchronous>, transform_indices = @transform_6, window_bounds = array<i64: 1, 512>}, {pipeline_mode = #tpu.pipeline_mode<synchronous>, transform_indices = @transform_7, window_bounds = array<i64: 1, 512>}, {pipeline_mode = #tpu.pipeline_mode<synchronous>, transform_indices = @transform_8, window_bounds = array<i64: 1, 512>}, {pipeline_mode = #tpu.pipeline_mode<synchronous>, transform_indices = @transform_9, window_bounds = array<i64: 512, 128>}, {pipeline_mode = #tpu.pipeline_mode<synchronous>, transform_indices = @transform_10, window_bounds = array<i64: 1, 128>}, {pipeline_mode = #tpu.pipeline_mode<synchronous>, transform_indices = @transform_11, window_bounds = array<i64: 8, 128>}]} {
    %c0_i32 = arith.constant 0 : i32
    %0 = arith.cmpi eq, %arg0, %c0_i32 : i32
    %1 = arith.extui %0 : i1 to i32
    %c0_i32_0 = arith.constant 0 : i32
    %2 = arith.cmpi ne, %1, %c0_i32_0 : i32
    scf.if %2 {
      %cst_18 = arith.constant 0.000000e+00 : f32
      %36 = vector.broadcast %cst_18 : f32 to vector<8x1024xf32>
      %c0_19 = arith.constant 0 : index
      %c0_20 = arith.constant 0 : index
      %37 = vector.load %arg13[%c0_19, %c0_20] : memref<8x1024xf32, #tpu.memory_space<vmem>>, vector<8x1024xf32>
      tpu.vector_store %arg13[%c0_19, %c0_20], %36 {strides = array<i32>} : memref<8x1024xf32, #tpu.memory_space<vmem>>, vector<8x1024xf32>,
    } else {
    }
    %c0 = arith.constant 0 : index
    %c0_1 = arith.constant 0 : index
    %3 = vector.load %arg1[%c0, %c0_1] : memref<8x256xf32, #tpu.memory_space<vmem>>, vector<8x256xf32>
    %cst = arith.constant dense<0.000000e+00> : vector<256xf32>
    %4 = vector.multi_reduction <add>, %3, %cst [0] : vector<8x256xf32> to vector<256xf32>
    %5 = vector.shape_cast %4 : vector<256xf32> to vector<1x256xf32>
    %cst_2 = arith.constant 8.000000e+00 : f32
    %6 = vector.broadcast %cst_2 : f32 to vector<1x256xf32>
    %7 = arith.divf %5, %6 : vector<1x256xf32>
    %8 = vector.broadcast %7 : vector<1x256xf32> to vector<8x256xf32>
    %9 = arith.subf %3, %8 : vector<8x256xf32>
    %10 = arith.mulf %9, %9 : vector<8x256xf32>
    %cst_3 = arith.constant dense<0.000000e+00> : vector<256xf32>
    %11 = vector.multi_reduction <add>, %10, %cst_3 [0] : vector<8x256xf32> to vector<256xf32>
    %12 = vector.shape_cast %11 : vector<256xf32> to vector<1x256xf32>
    %cst_4 = arith.constant 8.000000e+00 : f32
    %13 = vector.broadcast %cst_4 : f32 to vector<1x256xf32>
    %14 = arith.divf %12, %13 : vector<1x256xf32>
    %c0_5 = arith.constant 0 : index
    %c0_6 = arith.constant 0 : index
    %15 = vector.load %arg2[%c0_5, %c0_6] : memref<1x256xf32, #tpu.memory_space<vmem>>, vector<1x256xf32>
    %cst_7 = arith.constant 9.99999974E-6 : f32
    %16 = vector.broadcast %cst_7 : f32 to vector<1x256xf32>
    %17 = arith.addf %14, %16 : vector<1x256xf32>
    %18 = math.rsqrt %17 : vector<1x256xf32>
    %19 = arith.mulf %15, %18 : vector<1x256xf32>
    %c0_8 = arith.constant 0 : index
    %c0_9 = arith.constant 0 : index
    %20 = vector.load %arg3[%c0_8, %c0_9] : memref<1x256xf32, #tpu.memory_space<vmem>>, vector<1x256xf32>
    %21 = arith.mulf %7, %19 : vector<1x256xf32>
    %22 = arith.subf %20, %21 : vector<1x256xf32>
    %23 = vector.broadcast %19 : vector<1x256xf32> to vector<8x256xf32>
    %24 = arith.mulf %3, %23 : vector<8x256xf32>
    %25 = vector.broadcast %22 : vector<1x256xf32> to vector<8x256xf32>
    %26 = arith.addf %24, %25 : vector<8x256xf32>
    %c0_10 = arith.constant 0 : index
    %c0_11 = arith.constant 0 : index
    %27 = vector.load %arg13[%c0_10, %c0_11] : memref<8x1024xf32, #tpu.memory_space<vmem>>, vector<8x1024xf32>
    %28 = arith.truncf %26 : vector<8x256xf32> to vector<8x256xbf16>
    %c0_12 = arith.constant 0 : index
    %c0_13 = arith.constant 0 : index
    %29 = vector.load %arg4[%c0_12, %c0_13] : memref<256x1024xbf16, #tpu.memory_space<vmem>>, vector<256x1024xbf16>
    %cst_14 = arith.constant dense<0.000000e+00> : vector<8x1024xf32>
    %30 = tpu.matmul %28, %29, %cst_14 {dimension_numbers = #tpu.dot_dimension_numbers<[1], [0], [0], [1], [0, 0, 1, 1], [], []>} : vector<8x256xbf16>, vector<256x1024xbf16>, vector<8x1024xf32> -> vector<8x1024xf32>
    %31 = arith.addf %27, %30 : vector<8x1024xf32>
    %c0_15 = arith.constant 0 : index
    %c0_16 = arith.constant 0 : index
    %32 = vector.load %arg13[%c0_15, %c0_16] : memref<8x1024xf32, #tpu.memory_space<vmem>>, vector<8x1024xf32>
    tpu.vector_store %arg13[%c0_15, %c0_16], %31 {strides = array<i32>} : memref<8x1024xf32, #tpu.memory_space<vmem>>, vector<8x1024xf32>,
    %c3_i32 = arith.constant 3 : i32
    %33 = arith.cmpi eq, %arg0, %c3_i32 : i32
    %34 = arith.extui %33 : i1 to i32
    %c0_i32_17 = arith.constant 0 : i32
    %35 = arith.cmpi ne, %34, %c0_i32_17 : i32
    scf.if %35 {
      %c0_18 = arith.constant 0 : index
      %c0_19 = arith.constant 0 : index
      %36 = vector.load %arg13[%c0_18, %c0_19] : memref<8x1024xf32, #tpu.memory_space<vmem>>, vector<8x1024xf32>
      %c0_20 = arith.constant 0 : index
      %c0_21 = arith.constant 0 : index
      %37 = vector.load %arg5[%c0_20, %c0_21] : memref<1x1024xf32, #tpu.memory_space<vmem>>, vector<1x1024xf32>
      %38 = vector.broadcast %37 : vector<1x1024xf32> to vector<8x1024xf32>
      %39 = arith.addf %36, %38 : vector<8x1024xf32>
      %cst_22 = arith.constant 0.000000e+00 : f32
      %40 = vector.broadcast %cst_22 : f32 to vector<8x1024xf32>
      %41 = arith.maximumf %39, %40 : vector<8x1024xf32>
      %42 = arith.truncf %41 : vector<8x1024xf32> to vector<8x1024xbf16>
      %c0_23 = arith.constant 0 : index
      %c0_24 = arith.constant 0 : index
      %43 = vector.load %arg6[%c0_23, %c0_24] : memref<1024x512xbf16, #tpu.memory_space<vmem>>, vector<1024x512xbf16>
      %cst_25 = arith.constant dense<0.000000e+00> : vector<8x512xf32>
      %44 = tpu.matmul %42, %43, %cst_25 {dimension_numbers = #tpu.dot_dimension_numbers<[1], [0], [0], [1], [0, 0, 1, 1], [], []>} : vector<8x1024xbf16>, vector<1024x512xbf16>, vector<8x512xf32> -> vector<8x512xf32>
      %c0_26 = arith.constant 0 : index
      %c0_27 = arith.constant 0 : index
      %45 = vector.load %arg7[%c0_26, %c0_27] : memref<1x512xf32, #tpu.memory_space<vmem>>, vector<1x512xf32>
      %46 = vector.broadcast %45 : vector<1x512xf32> to vector<8x512xf32>
      %47 = arith.addf %44, %46 : vector<8x512xf32>
      %cst_28 = arith.constant dense<0.000000e+00> : vector<8xf32>
      %48 = vector.multi_reduction <add>, %47, %cst_28 [1] : vector<8x512xf32> to vector<8xf32>
      %49 = vector.shape_cast %48 : vector<8xf32> to vector<8x1xf32>
      %cst_29 = arith.constant 5.120000e+02 : f32
      %50 = vector.broadcast %cst_29 : f32 to vector<8x1xf32>
      %51 = arith.divf %49, %50 : vector<8x1xf32>
      %52 = vector.broadcast %51 : vector<8x1xf32> to vector<8x512xf32>
      %53 = arith.subf %47, %52 : vector<8x512xf32>
      %54 = arith.mulf %53, %53 : vector<8x512xf32>
      %cst_30 = arith.constant dense<0.000000e+00> : vector<8xf32>
      %55 = vector.multi_reduction <add>, %54, %cst_30 [1] : vector<8x512xf32> to vector<8xf32>
      %56 = vector.shape_cast %55 : vector<8xf32> to vector<8x1xf32>
      %cst_31 = arith.constant 5.120000e+02 : f32
      %57 = vector.broadcast %cst_31 : f32 to vector<8x1xf32>
      %58 = arith.divf %56, %57 : vector<8x1xf32>
      %59 = vector.broadcast %51 : vector<8x1xf32> to vector<8x512xf32>
      %60 = arith.subf %47, %59 : vector<8x512xf32>
      %cst_32 = arith.constant 9.99999974E-6 : f32
      %61 = vector.broadcast %cst_32 : f32 to vector<8x1xf32>
      %62 = arith.addf %58, %61 : vector<8x1xf32>
      %63 = math.rsqrt %62 : vector<8x1xf32>
      %64 = vector.broadcast %63 : vector<8x1xf32> to vector<8x512xf32>
      %65 = arith.mulf %60, %64 : vector<8x512xf32>
      %c0_33 = arith.constant 0 : index
      %c0_34 = arith.constant 0 : index
      %66 = vector.load %arg8[%c0_33, %c0_34] : memref<1x512xf32, #tpu.memory_space<vmem>>, vector<1x512xf32>
      %67 = vector.broadcast %66 : vector<1x512xf32> to vector<8x512xf32>
      %68 = arith.mulf %65, %67 : vector<8x512xf32>
      %c0_35 = arith.constant 0 : index
      %c0_36 = arith.constant 0 : index
      %69 = vector.load %arg9[%c0_35, %c0_36] : memref<1x512xf32, #tpu.memory_space<vmem>>, vector<1x512xf32>
      %70 = vector.broadcast %69 : vector<1x512xf32> to vector<8x512xf32>
      %71 = arith.addf %68, %70 : vector<8x512xf32>
      %cst_37 = arith.constant 0.000000e+00 : f32
      %72 = vector.broadcast %cst_37 : f32 to vector<8x512xf32>
      %73 = arith.maximumf %71, %72 : vector<8x512xf32>
      %74 = arith.truncf %73 : vector<8x512xf32> to vector<8x512xbf16>
      %c0_38 = arith.constant 0 : index
      %c0_39 = arith.constant 0 : index
      %75 = vector.load %arg10[%c0_38, %c0_39] : memref<512x128xbf16, #tpu.memory_space<vmem>>, vector<512x128xbf16>
      %cst_40 = arith.constant dense<0.000000e+00> : vector<8x128xf32>
      %76 = tpu.matmul %74, %75, %cst_40 {dimension_numbers = #tpu.dot_dimension_numbers<[1], [0], [0], [1], [0, 0, 1, 1], [], []>} : vector<8x512xbf16>, vector<512x128xbf16>, vector<8x128xf32> -> vector<8x128xf32>
      %c0_41 = arith.constant 0 : index
      %c0_42 = arith.constant 0 : index
      %77 = vector.load %arg11[%c0_41, %c0_42] : memref<1x128xf32, #tpu.memory_space<vmem>>, vector<1x128xf32>
      %78 = vector.broadcast %77 : vector<1x128xf32> to vector<8x128xf32>
      %79 = arith.addf %76, %78 : vector<8x128xf32>
      %c0_43 = arith.constant 0 : index
      %c0_44 = arith.constant 0 : index
      %80 = vector.load %arg12[%c0_43, %c0_44] : memref<8x128xf32, #tpu.memory_space<vmem>>, vector<8x128xf32>
      tpu.vector_store %arg12[%c0_43, %c0_44], %79 {strides = array<i32>} : memref<8x128xf32, #tpu.memory_space<vmem>>, vector<8x128xf32>,
    } else {
    }
    return
  }
  func.func @transform_0(%arg0: i32) -> (i32, i32) {
    %c0_i32 = arith.constant 0 : i32
    %c0_i32_0 = arith.constant 0 : i32
    return %c0_i32, %arg0 : i32, i32
  }
  func.func @transform_1(%arg0: i32) -> (i32, i32) {
    %c0_i32 = arith.constant 0 : i32
    %c0_i32_0 = arith.constant 0 : i32
    return %c0_i32, %arg0 : i32, i32
  }
  func.func @transform_2(%arg0: i32) -> (i32, i32) {
    %c0_i32 = arith.constant 0 : i32
    %c0_i32_0 = arith.constant 0 : i32
    return %c0_i32, %arg0 : i32, i32
  }
  func.func @transform_3(%arg0: i32) -> (i32, i32) {
    %c0_i32 = arith.constant 0 : i32
    %c0_i32_0 = arith.constant 0 : i32
    return %arg0, %c0_i32 : i32, i32
  }
  func.func @transform_4(%arg0: i32) -> (i32, i32) {
    %c0_i32 = arith.constant 0 : i32
    %c0_i32_0 = arith.constant 0 : i32
    %c0_i32_1 = arith.constant 0 : i32
    return %c0_i32, %c0_i32_0 : i32, i32
  }
  func.func @transform_5(%arg0: i32) -> (i32, i32) {
    %c0_i32 = arith.constant 0 : i32
    %c0_i32_0 = arith.constant 0 : i32
    %c0_i32_1 = arith.constant 0 : i32
    return %c0_i32, %c0_i32_0 : i32, i32
  }
  func.func @transform_6(%arg0: i32) -> (i32, i32) {
    %c0_i32 = arith.constant 0 : i32
    %c0_i32_0 = arith.constant 0 : i32
    %c0_i32_1 = arith.constant 0 : i32
    return %c0_i32, %c0_i32_0 : i32, i32
  }
  func.func @transform_7(%arg0: i32) -> (i32, i32) {
    %c0_i32 = arith.constant 0 : i32
    %c0_i32_0 = arith.constant 0 : i32
    %c0_i32_1 = arith.constant 0 : i32
    return %c0_i32, %c0_i32_0 : i32, i32
  }
  func.func @transform_8(%arg0: i32) -> (i32, i32) {
    %c0_i32 = arith.constant 0 : i32
    %c0_i32_0 = arith.constant 0 : i32
    %c0_i32_1 = arith.constant 0 : i32
    return %c0_i32, %c0_i32_0 : i32, i32
  }
  func.func @transform_9(%arg0: i32) -> (i32, i32) {
    %c0_i32 = arith.constant 0 : i32
    %c0_i32_0 = arith.constant 0 : i32
    %c0_i32_1 = arith.constant 0 : i32
    return %c0_i32, %c0_i32_0 : i32, i32
  }
  func.func @transform_10(%arg0: i32) -> (i32, i32) {
    %c0_i32 = arith.constant 0 : i32
    %c0_i32_0 = arith.constant 0 : i32
    %c0_i32_1 = arith.constant 0 : i32
    return %c0_i32, %c0_i32_0 : i32, i32
  }
  func.func @transform_11(%arg0: i32) -> (i32, i32) {
    %c0_i32 = arith.constant 0 : i32
    %c0_i32_0 = arith.constant 0 : i32
    %c0_i32_1 = arith.constant 0 : i32
    return %c0_i32, %c0_i32_0 : i32, i32
  }
}

</mosaic_0001>

<llo_original>
// kernel: tpu_custom_call.1
$region0: #{tpu_custom_call.1}
  #allocation0 [shape = 'u32[]', space=smem, size = 0x4, offset = 0x4, fixed_abs, tag = 'smem constant byte address 0x4 - core index']
  #allocation1 [shape = 'u32[72,128]{1,0:T(1,128)}', space=vmem, size = 0x9000, scoped, tag = 'internal scratch']
  #allocation2 [shape = 'f32[8,1024]{1,0:T(8,128)}', space=vmem, size = 0x8000, scoped, tag = 'scratch operand']
  %s0 = inlined_call_operand.hbm [shape: f32[8,1024], index: 0, kind: input, shape index: {}]
  %s1 = inlined_call_operand.hbm [shape: f32[1,1024], index: 1, kind: input, shape index: {}]
  %s2 = inlined_call_operand.hbm [shape: f32[1,1024], index: 2, kind: input, shape index: {}]
  %s3 = inlined_call_operand.hbm [shape: bf16[1024,1024], index: 3, kind: input, shape index: {}]
  %s4 = inlined_call_operand.hbm [shape: f32[1,1024], index: 4, kind: input, shape index: {}]
  %s5 = inlined_call_operand.hbm [shape: bf16[1024,512], index: 5, kind: input, shape index: {}]
  %s6 = inlined_call_operand.hbm [shape: f32[1,512], index: 6, kind: input, shape index: {}]
  %s7 = inlined_call_operand.hbm [shape: f32[1,512], index: 7, kind: input, shape index: {}]
  %s8 = inlined_call_operand.hbm [shape: f32[1,512], index: 8, kind: input, shape index: {}]
  %s9 = inlined_call_operand.hbm [shape: bf16[512,128], index: 9, kind: input, shape index: {}]
  %s10 = inlined_call_operand.hbm [shape: f32[1,128], index: 10, kind: input, shape index: {}]
  %s11 = inlined_call_operand.hbm [shape: f32[8,128], index: 11, kind: output, shape index: {}]
  %s12 = sld [smem:[#allocation0]]
  $region129: #{tpu_custom_call.1} parent=0
    _
  %s14 = ssub.s32 1, %s12
  %s15 = scalar_select 0, %s14, %s12
  $region1: #{tpu_custom_call.1} parent=0
    #allocation3 [shape = 'u8[16384]{0}', space=vmem, size = 0x4000, scoped, tag = 'input window, operand 0']
    #allocation4 [shape = 's32[2]{0}', space=sflag, size = 0x8, scoped, tag = 'scoped memory for tpu_custom_call.1']
    #allocation5 [shape = 's32[2]{0}', space=sflag, size = 0x8, scoped, tag = 'scoped memory for tpu_custom_call.1']
    #allocation6 [shape = 'u8[2048]{0}', space=vmem, size = 0x800, scoped, tag = 'input window, operand 1']
    #allocation7 [shape = 's32[2]{0}', space=sflag, size = 0x8, scoped, tag = 'scoped memory for tpu_custom_call.1']
    #allocation8 [shape = 'u8[2048]{0}', space=vmem, size = 0x800, scoped, tag = 'input window, operand 2']
    #allocation9 [shape = 'u8[1048576]{0}', space=vmem, size = 0x100000, scoped, tag = 'input window, operand 3']
    #allocation10 [shape = 's32[2]{0}', space=sflag, size = 0x8, scoped, tag = 'scoped memory for tpu_custom_call.1']
    #allocation11 [shape = 'u8[4096]{0}', space=vmem, size = 0x1000, scoped, tag = 'input window, operand 4, single buffered']
    #allocation12 [shape = 'u8[1048576]{0}', space=vmem, size = 0x100000, scoped, tag = 'input window, operand 5, single buffered']
    #allocation13 [shape = 's32[1]{0}', space=sflag, size = 0x4, scoped, tag = 'scoped memory for tpu_custom_call.1']
    #allocation14 [shape = 'u8[2048]{0}', space=vmem, size = 0x800, scoped, tag = 'input window, operand 6, single buffered']
    #allocation15 [shape = 'u8[2048]{0}', space=vmem, size = 0x800, scoped, tag = 'input window, operand 7, single buffered']
    #allocation16 [shape = 's32[1]{0}', space=sflag, size = 0x4, scoped, tag = 'scoped memory for tpu_custom_call.1']
    #allocation17 [shape = 'u8[2048]{0}', space=vmem, size = 0x800, scoped, tag = 'input window, operand 8, single buffered']
    #allocation18 [shape = 'u8[131072]{0}', space=vmem, size = 0x20000, scoped, tag = 'input window, operand 9, single buffered']
    #allocation19 [shape = 's32[1]{0}', space=sflag, size = 0x4, scoped, tag = 'scoped memory for tpu_custom_call.1']
    #allocation20 [shape = 'u8[512]{0}', space=vmem, size = 0x400, scoped, tag = 'input window, operand 10, single buffered']
    #allocation21 [shape = 'u8[4096]{0}', space=vmem, size = 0x1000, scoped, tag = 'output window, operand 0, single buffered']
    %16 = vsyncpa [#allocation4], 0
    %s17 = scalar_lea.sflag [#allocation4], 1
    %18 = vsyncpa %s17, 0
    %19 = vsyncpa [#allocation7], 0
    %s20 = scalar_lea.sflag [#allocation7], 1
    %21 = vsyncpa %s20, 0
    %22 = vsyncpa [#allocation10], 0
    %s23 = scalar_lea.sflag [#allocation10], 1
    %24 = vsyncpa %s23, 0
    %25 = vsyncpa [#allocation13], 0
    %26 = vsyncpa [#allocation16], 0
    %27 = vsyncpa [#allocation19], 0
    %28 = vsyncpa [#allocation5], 0
    loop: start=0, step=1, limit=6
    $region2: #{tpu_custom_call.1} parent=1 // loop_pre_header
      _
    $region3: #{tpu_custom_call.1} parent=1 // loop_header
      %s30 = sphi 0, %s34
      %p31 = scmp.ge.s32.totalorder %s30, 6
      %s40 = sphi 0, %s42
      %s43 = sphi 0, %s40
      %s44 = sphi 0, %s43
      %s60 = sphi 0, %s44
      %s66 = sphi 0, %s68
      %s69 = sphi 0, %s66
      %s70 = sphi 0, %s69
      %s86 = sphi 0, %s70
      %s92 = sphi 0, %s94
      %s95 = sphi 0, %s92
      %s96 = sphi 0, %s95
      %s112 = sphi 0, %s96
      %s118 = sphi 0, %s120
      %s121 = sphi 0, %s118
      %s122 = sphi 0, %s121
      %s138 = sphi 0, %s122
      %s142 = sphi 0, %s142
      %s144 = sphi 0, %s142
      %s145 = sphi 0, %s144
      %s159 = sphi 0, %s145
      %s163 = sphi 0, %s163
      %s165 = sphi 0, %s163
      %s166 = sphi 0, %s165
      %s180 = sphi 0, %s166
      %s184 = sphi 0, %s184
      %s186 = sphi 0, %s184
      %s187 = sphi 0, %s186
      %s201 = sphi 0, %s187
      %s205 = sphi 0, %s205
      %s207 = sphi 0, %s205
      %s208 = sphi 0, %s207
      %s222 = sphi 0, %s208
      %s226 = sphi 0, %s226
      %s228 = sphi 0, %s226
      %s229 = sphi 0, %s228
      %s243 = sphi 0, %s229
      %s247 = sphi 0, %s247
      %s249 = sphi 0, %s247
      %s250 = sphi 0, %s249
      %s264 = sphi 0, %s250
      %s268 = sphi 0, %s268
      %s270 = sphi 0, %s268
      %s271 = sphi 0, %s270
      %s285 = sphi 0, %s271
      %s289 = sphi 0, %s289
      %s291 = sphi 0, %s289
      %s292 = sphi 0, %s291
      %s306 = sphi 0, %s292
    $region4: #{tpu_custom_call.1} parent=1 // loop_header_branch
      %33 = sbr.rel (%p31) target = $region8
    $region5: #{tpu_custom_call.1} parent=1 // loop_body
      %s35 = ssub.s32 %s30, 1
      %s36 = ssub.s32 %s30, 2
      %s37 = sadd.s32 %s30, 1
      %s38 = ssub.s32 %s30, %s37
      %p39 = scmp.eq.s32.totalorder %s38, 0
      %s41 = sadd.s32 %s40, 1
      %s42 = scalar_select %p39, %s40, %s41
      %p45 = pneg %p39
      %p46 = scmp.eq.s32.totalorder %s30, 3
      %p47 = por %p45, %p46
      %p48 = scmp.ne.s32.totalorder %s40, %s43
      %p49 = scmp.eq.s32.totalorder %s30, 0
      %p50 = por %p48, %p49
      %p51 = scmp.ne.s32.totalorder %s40, %s43
      %p52 = scmp.eq.s32.totalorder %s35, 3
      %p53 = por %p51, %p52
      %p54 = scmp.ne.s32.totalorder %s43, %s44
      %p55 = scmp.eq.s32.totalorder %s35, 0
      %p56 = por %p54, %p55
      %p57 = scmp.ne.s32.totalorder %s43, %s44
      %p58 = scmp.eq.s32.totalorder %s36, 3
      %p59 = por %p57, %p58
      %p61 = scmp.ne.s32.totalorder %s44, %s60
      %p62 = scmp.eq.s32.totalorder %s36, 0
      %p63 = por %p61, %p62
      %s64 = ssub.s32 %s30, %s37
      %p65 = scmp.eq.s32.totalorder %s64, 0
      %s67 = sadd.s32 %s66, 1
      %s68 = scalar_select %p65, %s66, %s67
      %p71 = pneg %p65
      %p72 = scmp.eq.s32.totalorder %s30, 3
      %p73 = por %p71, %p72
      %p74 = scmp.ne.s32.totalorder %s66, %s69
      %p75 = scmp.eq.s32.totalorder %s30, 0
      %p76 = por %p74, %p75
      %p77 = scmp.ne.s32.totalorder %s66, %s69
      %p78 = scmp.eq.s32.totalorder %s35, 3
      %p79 = por %p77, %p78
      %p80 = scmp.ne.s32.totalorder %s69, %s70
      %p81 = scmp.eq.s32.totalorder %s35, 0
      %p82 = por %p80, %p81
      %p83 = scmp.ne.s32.totalorder %s69, %s70
      %p84 = scmp.eq.s32.totalorder %s36, 3
      %p85 = por %p83, %p84
      %p87 = scmp.ne.s32.totalorder %s70, %s86
      %p88 = scmp.eq.s32.totalorder %s36, 0
      %p89 = por %p87, %p88
      %s90 = ssub.s32 %s30, %s37
      %p91 = scmp.eq.s32.totalorder %s90, 0
      %s93 = sadd.s32 %s92, 1
      %s94 = scalar_select %p91, %s92, %s93
      %p97 = pneg %p91
      %p98 = scmp.eq.s32.totalorder %s30, 3
      %p99 = por %p97, %p98
      %p100 = scmp.ne.s32.totalorder %s92, %s95
      %p101 = scmp.eq.s32.totalorder %s30, 0
      %p102 = por %p100, %p101
      %p103 = scmp.ne.s32.totalorder %s92, %s95
      %p104 = scmp.eq.s32.totalorder %s35, 3
      %p105 = por %p103, %p104
      %p106 = scmp.ne.s32.totalorder %s95, %s96
      %p107 = scmp.eq.s32.totalorder %s35, 0
      %p108 = por %p106, %p107
      %p109 = scmp.ne.s32.totalorder %s95, %s96
      %p110 = scmp.eq.s32.totalorder %s36, 3
      %p111 = por %p109, %p110
      %p113 = scmp.ne.s32.totalorder %s96, %s112
      %p114 = scmp.eq.s32.totalorder %s36, 0
      %p115 = por %p113, %p114
      %s116 = ssub.s32 %s30, %s37
      %p117 = scmp.eq.s32.totalorder %s116, 0
      %s119 = sadd.s32 %s118, 1
      %s120 = scalar_select %p117, %s118, %s119
      %p123 = pneg %p117
      %p124 = scmp.eq.s32.totalorder %s30, 3
      %p125 = por %p123, %p124
      %p126 = scmp.ne.s32.totalorder %s118, %s121
      %p127 = scmp.eq.s32.totalorder %s30, 0
      %p128 = por %p126, %p127
      %p129 = scmp.ne.s32.totalorder %s118, %s121
      %p130 = scmp.eq.s32.totalorder %s35, 3
      %p131 = por %p129, %p130
      %p132 = scmp.ne.s32.totalorder %s121, %s122
      %p133 = scmp.eq.s32.totalorder %s35, 0
      %p134 = por %p132, %p133
      %p135 = scmp.ne.s32.totalorder %s121, %s122
      %p136 = scmp.eq.s32.totalorder %s36, 3
      %p137 = por %p135, %p136
      %p139 = scmp.ne.s32.totalorder %s122, %s138
      %p140 = scmp.eq.s32.totalorder %s36, 0
      %p141 = por %p139, %p140
      %s143 = sadd.s32 %s142, 1
      %p146 = scmp.eq.s32.totalorder %s30, 3
      %p147 = scmp.ne.s32.totalorder %s142, %s144
      %p148 = scmp.eq.s32.totalorder %s30, 0
      %p149 = por %p147, %p148
      %p150 = scmp.ne.s32.totalorder %s142, %s144
      %p151 = scmp.eq.s32.totalorder %s35, 3
      %p152 = por %p150, %p151
      %p153 = scmp.ne.s32.totalorder %s144, %s145
      %p154 = scmp.eq.s32.totalorder %s35, 0
      %p155 = por %p153, %p154
      %p156 = scmp.ne.s32.totalorder %s144, %s145
      %p157 = scmp.eq.s32.totalorder %s36, 3
      %p158 = por %p156, %p157
      %p160 = scmp.ne.s32.totalorder %s145, %s159
      %p161 = scmp.eq.s32.totalorder %s36, 0
      %p162 = por %p160, %p161
      %s164 = sadd.s32 %s163, 1
      %p167 = scmp.eq.s32.totalorder %s30, 3
      %p168 = scmp.ne.s32.totalorder %s163, %s165
      %p169 = scmp.eq.s32.totalorder %s30, 0
      %p170 = por %p168, %p169
      %p171 = scmp.ne.s32.totalorder %s163, %s165
      %p172 = scmp.eq.s32.totalorder %s35, 3
      %p173 = por %p171, %p172
      %p174 = scmp.ne.s32.totalorder %s165, %s166
      %p175 = scmp.eq.s32.totalorder %s35, 0
      %p176 = por %p174, %p175
      %p177 = scmp.ne.s32.totalorder %s165, %s166
      %p178 = scmp.eq.s32.totalorder %s36, 3
      %p179 = por %p177, %p178
      %p181 = scmp.ne.s32.totalorder %s166, %s180
      %p182 = scmp.eq.s32.totalorder %s36, 0
      %p183 = por %p181, %p182
      %s185 = sadd.s32 %s184, 1
      %p188 = scmp.eq.s32.totalorder %s30, 3
      %p189 = scmp.ne.s32.totalorder %s184, %s186
      %p190 = scmp.eq.s32.totalorder %s30, 0
      %p191 = por %p189, %p190
      %p192 = scmp.ne.s32.totalorder %s184, %s186
      %p193 = scmp.eq.s32.totalorder %s35, 3
      %p194 = por %p192, %p193
      %p195 = scmp.ne.s32.totalorder %s186, %s187
      %p196 = scmp.eq.s32.totalorder %s35, 0
      %p197 = por %p195, %p196
      %p198 = scmp.ne.s32.totalorder %s186, %s187
      %p199 = scmp.eq.s32.totalorder %s36, 3
      %p200 = por %p198, %p199
      %p202 = scmp.ne.s32.totalorder %s187, %s201
      %p203 = scmp.eq.s32.totalorder %s36, 0
      %p204 = por %p202, %p203
      %s206 = sadd.s32 %s205, 1
      %p209 = scmp.eq.s32.totalorder %s30, 3
      %p210 = scmp.ne.s32.totalorder %s205, %s207
      %p211 = scmp.eq.s32.totalorder %s30, 0
      %p212 = por %p210, %p211
      %p213 = scmp.ne.s32.totalorder %s205, %s207
      %p214 = scmp.eq.s32.totalorder %s35, 3
      %p215 = por %p213, %p214
      %p216 = scmp.ne.s32.totalorder %s207, %s208
      %p217 = scmp.eq.s32.totalorder %s35, 0
      %p218 = por %p216, %p217
      %p219 = scmp.ne.s32.totalorder %s207, %s208
      %p220 = scmp.eq.s32.totalorder %s36, 3
      %p221 = por %p219, %p220
      %p223 = scmp.ne.s32.totalorder %s208, %s222
      %p224 = scmp.eq.s32.totalorder %s36, 0
      %p225 = por %p223, %p224
      %s227 = sadd.s32 %s226, 1
      %p230 = scmp.eq.s32.totalorder %s30, 3
      %p231 = scmp.ne.s32.totalorder %s226, %s228
      %p232 = scmp.eq.s32.totalorder %s30, 0
      %p233 = por %p231, %p232
      %p234 = scmp.ne.s32.totalorder %s226, %s228
      %p235 = scmp.eq.s32.totalorder %s35, 3
      %p236 = por %p234, %p235
      %p237 = scmp.ne.s32.totalorder %s228, %s229
      %p238 = scmp.eq.s32.totalorder %s35, 0
      %p239 = por %p237, %p238
      %p240 = scmp.ne.s32.totalorder %s228, %s229
      %p241 = scmp.eq.s32.totalorder %s36, 3
      %p242 = por %p240, %p241
      %p244 = scmp.ne.s32.totalorder %s229, %s243
      %p245 = scmp.eq.s32.totalorder %s36, 0
      %p246 = por %p244, %p245
      %s248 = sadd.s32 %s247, 1
      %p251 = scmp.eq.s32.totalorder %s30, 3
      %p252 = scmp.ne.s32.totalorder %s247, %s249
      %p253 = scmp.eq.s32.totalorder %s30, 0
      %p254 = por %p252, %p253
      %p255 = scmp.ne.s32.totalorder %s247, %s249
      %p256 = scmp.eq.s32.totalorder %s35, 3
      %p257 = por %p255, %p256
      %p258 = scmp.ne.s32.totalorder %s249, %s250
      %p259 = scmp.eq.s32.totalorder %s35, 0
      %p260 = por %p258, %p259
      %p261 = scmp.ne.s32.totalorder %s249, %s250
      %p262 = scmp.eq.s32.totalorder %s36, 3
      %p263 = por %p261, %p262
      %p265 = scmp.ne.s32.totalorder %s250, %s264
      %p266 = scmp.eq.s32.totalorder %s36, 0
      %p267 = por %p265, %p266
      %s269 = sadd.s32 %s268, 1
      %p272 = scmp.eq.s32.totalorder %s30, 3
      %p273 = scmp.ne.s32.totalorder %s268, %s270
      %p274 = scmp.eq.s32.totalorder %s30, 0
      %p275 = por %p273, %p274
      %p276 = scmp.ne.s32.totalorder %s268, %s270
      %p277 = scmp.eq.s32.totalorder %s35, 3
      %p278 = por %p276, %p277
      %p279 = scmp.ne.s32.totalorder %s270, %s271
      %p280 = scmp.eq.s32.totalorder %s35, 0
      %p281 = por %p279, %p280
      %p282 = scmp.ne.s32.totalorder %s270, %s271
      %p283 = scmp.eq.s32.totalorder %s36, 3
      %p284 = por %p282, %p283
      %p286 = scmp.ne.s32.totalorder %s271, %s285
      %p287 = scmp.eq.s32.totalorder %s36, 0
      %p288 = por %p286, %p287
      %s290 = sadd.s32 %s289, 1
      %p293 = scmp.eq.s32.totalorder %s30, 3
      %p294 = scmp.ne.s32.totalorder %s289, %s291
      %p295 = scmp.eq.s32.totalorder %s30, 0
      %p296 = por %p294, %p295
      %p297 = scmp.ne.s32.totalorder %s289, %s291
      %p298 = scmp.eq.s32.totalorder %s35, 3
      %p299 = por %p297, %p298
      %p300 = scmp.ne.s32.totalorder %s291, %s292
      %p301 = scmp.eq.s32.totalorder %s35, 0
      %p302 = por %p300, %p301
      %p303 = scmp.ne.s32.totalorder %s291, %s292
      %p304 = scmp.eq.s32.totalorder %s36, 3
      %p305 = por %p303, %p304
      %p307 = scmp.ne.s32.totalorder %s292, %s306
      %p308 = scmp.eq.s32.totalorder %s36, 0
      %p309 = por %p307, %p308
      %p310 = scmp.le.s32.totalorder 1, %s30
      %p311 = scmp.lt.s32.totalorder %s30, 5
      %p312 = pnand %p310, %p311
      %p313 = pneg %p312
      // Predicated region
      $region9: #{tpu_custom_call.1} parent=5 // pred_check
        _
      $region10: #{tpu_custom_call.1} parent=5 // pred_check_branch
        %315 = sbr.rel (%p312) target = $region12
      $region11: #{tpu_custom_call.1} parent=5 // pred_region
        %s316 = ssub.s32 %s30, 1
        // Predicated region
        $region13: #{tpu_custom_call.1} parent=11 // pred_check
          %p317 = pneg %p155
        $region14: #{tpu_custom_call.1} parent=11 // pred_check_branch
          %319 = sbr.rel (%p317) target = $region16
        $region15: #{tpu_custom_call.1} parent=11 // pred_region
          %321 = vsyncadd [#allocation10], 0
          %s323 = sshll.u32 %s4, 4
          %s324 = int_to_ptr.hbm [resolvable:$true] %s323
          %s325 = sshll.u32 [#allocation11], 4
          %s326 = int_to_ptr.vmem [resolvable:$true] %s325
          %328 = dma.hbm_to_vmem [thread:$0]  %s324, 128, %s326, [#allocation10]
        $region16: #{tpu_custom_call.1} parent=11 // pred_fallthru
          _
        // Predicated region
        $region17: #{tpu_custom_call.1} parent=11 // pred_check
          %p329 = pneg %p176
        $region18: #{tpu_custom_call.1} parent=11 // pred_check_branch
          %331 = sbr.rel (%p329) target = $region20
        $region19: #{tpu_custom_call.1} parent=11 // pred_region
          %333 = vsyncadd [#allocation13], 0
          %s334 = sshll.u32 %s5, 4
          %s335 = int_to_ptr.hbm [resolvable:$true] %s334
          %s336 = sshll.u32 [#allocation12], 4
          %s337 = int_to_ptr.vmem [resolvable:$true] %s336
          %342 = dma.hbm_to_vmem [thread:$0]  %s335, 32768, %s337, [#allocation13], 256, 256, 16
        $region20: #{tpu_custom_call.1} parent=11 // pred_fallthru
          _
        // Predicated region
        $region21: #{tpu_custom_call.1} parent=11 // pred_check
          %p343 = pneg %p197
        $region22: #{tpu_custom_call.1} parent=11 // pred_check_branch
          %345 = sbr.rel (%p343) target = $region24
        $region23: #{tpu_custom_call.1} parent=11 // pred_region
          %347 = vsyncadd [#allocation13], 0
          %s349 = sshll.u32 %s6, 4
          %s350 = int_to_ptr.hbm [resolvable:$true] %s349
          %s351 = sshll.u32 [#allocation14], 4
          %s352 = int_to_ptr.vmem [resolvable:$true] %s351
          %354 = dma.hbm_to_vmem [thread:$0]  %s350, 64, %s352, [#allocation13]
        $region24: #{tpu_custom_call.1} parent=11 // pred_fallthru
          _
        // Predicated region
        $region25: #{tpu_custom_call.1} parent=11 // pred_check
          %p355 = pneg %p218
        $region26: #{tpu_custom_call.1} parent=11 // pred_check_branch
          %357 = sbr.rel (%p355) target = $region28
        $region27: #{tpu_custom_call.1} parent=11 // pred_region
          %359 = vsyncadd [#allocation16], 0
          %s361 = sshll.u32 %s7, 4
          %s362 = int_to_ptr.hbm [resolvable:$true] %s361
          %s363 = sshll.u32 [#allocation15], 4
          %s364 = int_to_ptr.vmem [resolvable:$true] %s363
          %366 = dma.hbm_to_vmem [thread:$0]  %s362, 64, %s364, [#allocation16]
        $region28: #{tpu_custom_call.1} parent=11 // pred_fallthru
          _
        // Predicated region
        $region29: #{tpu_custom_call.1} parent=11 // pred_check
          %p367 = pneg %p239
        $region30: #{tpu_custom_call.1} parent=11 // pred_check_branch
          %369 = sbr.rel (%p367) target = $region32
        $region31: #{tpu_custom_call.1} parent=11 // pred_region
          %371 = vsyncadd [#allocation16], 0
          %s373 = sshll.u32 %s8, 4
          %s374 = int_to_ptr.hbm [resolvable:$true] %s373
          %s375 = sshll.u32 [#allocation17], 4
          %s376 = int_to_ptr.vmem [resolvable:$true] %s375
          %378 = dma.hbm_to_vmem [thread:$0]  %s374, 64, %s376, [#allocation16]
        $region32: #{tpu_custom_call.1} parent=11 // pred_fallthru
          _
        // Predicated region
        $region33: #{tpu_custom_call.1} parent=11 // pred_check
          %p379 = pneg %p260
        $region34: #{tpu_custom_call.1} parent=11 // pred_check_branch
          %381 = sbr.rel (%p379) target = $region36
        $region35: #{tpu_custom_call.1} parent=11 // pred_region
          %383 = vsyncadd [#allocation19], 0
          %s384 = sshll.u32 %s9, 4
          %s385 = int_to_ptr.hbm [resolvable:$true] %s384
          %s386 = sshll.u32 [#allocation18], 4
          %s387 = int_to_ptr.vmem [resolvable:$true] %s386
          %392 = dma.hbm_to_vmem [thread:$0]  %s385, 4096, %s387, [#allocation19], 64, 64, 4
        $region36: #{tpu_custom_call.1} parent=11 // pred_fallthru
          _
        // Predicated region
        $region37: #{tpu_custom_call.1} parent=11 // pred_check
          %p393 = pneg %p281
        $region38: #{tpu_custom_call.1} parent=11 // pred_check_branch
          %395 = sbr.rel (%p393) target = $region40
        $region39: #{tpu_custom_call.1} parent=11 // pred_region
          %397 = vsyncadd [#allocation19], 0
          %s399 = sshll.u32 %s10, 4
          %s400 = int_to_ptr.hbm [resolvable:$true] %s399
          %s401 = sshll.u32 [#allocation20], 4
          %s402 = int_to_ptr.vmem [resolvable:$true] %s401
          %404 = dma.hbm_to_vmem [thread:$0]  %s400, 16, %s402, [#allocation19]
        $region40: #{tpu_custom_call.1} parent=11 // pred_fallthru
          _
      $region12: #{tpu_custom_call.1} parent=5 // pred_fallthru
        _
      %p405 = scmp.lt.s32.totalorder %s30, 4
      // Predicated region
      $region41: #{tpu_custom_call.1} parent=5 // pred_check
        %p406 = pneg %p405
      $region42: #{tpu_custom_call.1} parent=5 // pred_check_branch
        %408 = sbr.rel (%p406) target = $region44
      $region43: #{tpu_custom_call.1} parent=5 // pred_region
        // Predicated region
        $region45: #{tpu_custom_call.1} parent=43 // pred_check
          %p409 = pneg %p50
        $region46: #{tpu_custom_call.1} parent=43 // pred_check_branch
          %411 = sbr.rel (%p409) target = $region48
        $region47: #{tpu_custom_call.1} parent=43 // pred_region
          %s412 = sand.u32 %s40, 1
          %s413 = scalar_lea.sflag [#allocation4], %s412
          %s414 = sand.u32 %s40, 1
          %s415 = smul.addr %s414, 16
          %s416 = scalar_lea.vmem [#allocation3], %s415
          %s417 = smul.u32 2, %s30
          %419 = vsyncadd %s413, 0
          %s420 = smul.addr %s417, 8
          %s421 = scalar_lea.hbm %s0, %s420
          %s423 = sshll.u32 %s421, 4
          %s424 = int_to_ptr.hbm [resolvable:$true] %s423
          %s425 = sshll.u32 %s416, 4
          %s426 = int_to_ptr.vmem [resolvable:$true] %s425
          %428 = dma.hbm_to_vmem [thread:$0]  %s424, 256, %s426, %s413
        $region48: #{tpu_custom_call.1} parent=43 // pred_fallthru
          _
        // Predicated region
        $region49: #{tpu_custom_call.1} parent=43 // pred_check
          %p429 = pneg %p76
        $region50: #{tpu_custom_call.1} parent=43 // pred_check_branch
          %431 = sbr.rel (%p429) target = $region52
        $region51: #{tpu_custom_call.1} parent=43 // pred_region
          %s432 = sand.u32 %s30, 1
          %s433 = scalar_lea.sflag [#allocation7], %s432
          %s434 = sand.u32 %s66, 1
          %s435 = smul.addr %s434, 2
          %s436 = scalar_lea.vmem [#allocation6], %s435
          %s437 = smul.u32 2, %s30
          %439 = vsyncadd %s433, 0
          %s440 = scalar_lea.hbm %s1, %s437
          %s442 = sshll.u32 %s440, 4
          %s443 = int_to_ptr.hbm [resolvable:$true] %s442
          %s444 = sshll.u32 %s436, 4
          %s445 = int_to_ptr.vmem [resolvable:$true] %s444
          %447 = dma.hbm_to_vmem [thread:$0]  %s443, 32, %s445, %s433
        $region52: #{tpu_custom_call.1} parent=43 // pred_fallthru
          _
        // Predicated region
        $region53: #{tpu_custom_call.1} parent=43 // pred_check
          %p448 = pneg %p102
        $region54: #{tpu_custom_call.1} parent=43 // pred_check_branch
          %450 = sbr.rel (%p448) target = $region56
        $region55: #{tpu_custom_call.1} parent=43 // pred_region
          %s451 = sand.u32 %s30, 1
          %s452 = scalar_lea.sflag [#allocation7], %s451
          %s453 = sand.u32 %s92, 1
          %s454 = smul.addr %s453, 2
          %s455 = scalar_lea.vmem [#allocation8], %s454
          %s456 = smul.u32 2, %s30
          %458 = vsyncadd %s452, 0
          %s459 = scalar_lea.hbm %s2, %s456
          %s461 = sshll.u32 %s459, 4
          %s462 = int_to_ptr.hbm [resolvable:$true] %s461
          %s463 = sshll.u32 %s455, 4
          %s464 = int_to_ptr.vmem [resolvable:$true] %s463
          %466 = dma.hbm_to_vmem [thread:$0]  %s462, 32, %s464, %s452
        $region56: #{tpu_custom_call.1} parent=43 // pred_fallthru
          _
        // Predicated region
        $region57: #{tpu_custom_call.1} parent=43 // pred_check
          %p467 = pneg %p128
        $region58: #{tpu_custom_call.1} parent=43 // pred_check_branch
          %469 = sbr.rel (%p467) target = $region60
        $region59: #{tpu_custom_call.1} parent=43 // pred_region
          %s470 = sand.u32 %s30, 1
          %s471 = scalar_lea.sflag [#allocation10], %s470
          %s472 = sand.u32 %s118, 1
          %s473 = smul.addr %s472, 1024
          %s474 = scalar_lea.vmem [#allocation9], %s473
          %s475 = smul.u32 32, %s30
          %477 = vsyncadd %s471, 0
          %s478 = smul.addr %s475, 8
          %s479 = smul.addr %s478, 4
          %s480 = scalar_lea.hbm %s3, %s479
          %s481 = sshll.u32 %s480, 4
          %s482 = int_to_ptr.hbm [resolvable:$true] %s481
          %s483 = sshll.u32 %s474, 4
          %s484 = int_to_ptr.vmem [resolvable:$true] %s483
          %489 = dma.hbm_to_vmem [thread:$0]  %s482, 16384, %s484, %s471, 512, 512, 32
        $region60: #{tpu_custom_call.1} parent=43 // pred_fallthru
          _
      $region44: #{tpu_custom_call.1} parent=5 // pred_fallthru
        _
      %p490 = scmp.le.s32.totalorder 1, %s30
      %p491 = scmp.lt.s32.totalorder %s30, 5
      %p492 = pnand %p490, %p491
      %p493 = pneg %p492
      // Predicated region
      $region61: #{tpu_custom_call.1} parent=5 // pred_check
        _
      $region62: #{tpu_custom_call.1} parent=5 // pred_check_branch
        %495 = sbr.rel (%p492) target = $region64
      $region63: #{tpu_custom_call.1} parent=5 // pred_region
        %s496 = ssub.s32 %s30, 1
        %s497 = sand.u32 %s43, 1
        %s498 = scalar_lea.sflag [#allocation4], %s497
        %s499 = sand.u32 %s43, 1
        %s500 = smul.addr %s499, 16
        %s501 = scalar_lea.vmem [#allocation3], %s500
        // Predicated region
        $region65: #{tpu_custom_call.1} parent=63 // pred_check
          %p502 = pneg %p56
        $region66: #{tpu_custom_call.1} parent=63 // pred_check_branch
          %504 = sbr.rel (%p502) target = $region68
        $region67: #{tpu_custom_call.1} parent=63 // pred_region
          %506 = dma.done %s498, 256
        $region68: #{tpu_custom_call.1} parent=63 // pred_fallthru
          _
        %s507 = sand.u32 %s35, 1
        %s508 = scalar_lea.sflag [#allocation7], %s507
        %s509 = sand.u32 %s69, 1
        %s510 = smul.addr %s509, 2
        %s511 = scalar_lea.vmem [#allocation6], %s510
        // Predicated region
        $region69: #{tpu_custom_call.1} parent=63 // pred_check
          %p512 = pneg %p82
        $region70: #{tpu_custom_call.1} parent=63 // pred_check_branch
          %514 = sbr.rel (%p512) target = $region72
        $region71: #{tpu_custom_call.1} parent=63 // pred_region
          %516 = dma.done %s508, 32
        $region72: #{tpu_custom_call.1} parent=63 // pred_fallthru
          _
        %s517 = sand.u32 %s35, 1
        %s518 = scalar_lea.sflag [#allocation7], %s517
        %s519 = sand.u32 %s95, 1
        %s520 = smul.addr %s519, 2
        %s521 = scalar_lea.vmem [#allocation8], %s520
        // Predicated region
        $region73: #{tpu_custom_call.1} parent=63 // pred_check
          %p522 = pneg %p108
        $region74: #{tpu_custom_call.1} parent=63 // pred_check_branch
          %524 = sbr.rel (%p522) target = $region76
        $region75: #{tpu_custom_call.1} parent=63 // pred_region
          %526 = dma.done %s518, 32
        $region76: #{tpu_custom_call.1} parent=63 // pred_fallthru
          _
        %s527 = sand.u32 %s35, 1
        %s528 = scalar_lea.sflag [#allocation10], %s527
        %s529 = sand.u32 %s121, 1
        %s530 = smul.addr %s529, 1024
        %s531 = scalar_lea.vmem [#allocation9], %s530
        // Predicated region
        $region77: #{tpu_custom_call.1} parent=63 // pred_check
          %p532 = pneg %p134
        $region78: #{tpu_custom_call.1} parent=63 // pred_check_branch
          %534 = sbr.rel (%p532) target = $region80
        $region79: #{tpu_custom_call.1} parent=63 // pred_region
          %536 = dma.done %s528, 16384
        $region80: #{tpu_custom_call.1} parent=63 // pred_fallthru
          _
        // Predicated region
        $region81: #{tpu_custom_call.1} parent=63 // pred_check
          %p537 = pneg %p155
        $region82: #{tpu_custom_call.1} parent=63 // pred_check_branch
          %539 = sbr.rel (%p537) target = $region84
        $region83: #{tpu_custom_call.1} parent=63 // pred_region
          %541 = dma.done [#allocation10], 128
        $region84: #{tpu_custom_call.1} parent=63 // pred_fallthru
          _
        // Predicated region
        $region85: #{tpu_custom_call.1} parent=63 // pred_check
          %p542 = pneg %p176
        $region86: #{tpu_custom_call.1} parent=63 // pred_check_branch
          %544 = sbr.rel (%p542) target = $region88
        $region87: #{tpu_custom_call.1} parent=63 // pred_region
          %546 = dma.done [#allocation13], 32768
        $region88: #{tpu_custom_call.1} parent=63 // pred_fallthru
          _
        // Predicated region
        $region89: #{tpu_custom_call.1} parent=63 // pred_check
          %p547 = pneg %p197
        $region90: #{tpu_custom_call.1} parent=63 // pred_check_branch
          %549 = sbr.rel (%p547) target = $region92
        $region91: #{tpu_custom_call.1} parent=63 // pred_region
          %551 = dma.done [#allocation13], 64
        $region92: #{tpu_custom_call.1} parent=63 // pred_fallthru
          _
        // Predicated region
        $region93: #{tpu_custom_call.1} parent=63 // pred_check
          %p552 = pneg %p218
        $region94: #{tpu_custom_call.1} parent=63 // pred_check_branch
          %554 = sbr.rel (%p552) target = $region96
        $region95: #{tpu_custom_call.1} parent=63 // pred_region
          %556 = dma.done [#allocation16], 64
        $region96: #{tpu_custom_call.1} parent=63 // pred_fallthru
          _
        // Predicated region
        $region97: #{tpu_custom_call.1} parent=63 // pred_check
          %p557 = pneg %p239
        $region98: #{tpu_custom_call.1} parent=63 // pred_check_branch
          %559 = sbr.rel (%p557) target = $region100
        $region99: #{tpu_custom_call.1} parent=63 // pred_region
          %561 = dma.done [#allocation16], 64
        $region100: #{tpu_custom_call.1} parent=63 // pred_fallthru
          _
        // Predicated region
        $region101: #{tpu_custom_call.1} parent=63 // pred_check
          %p562 = pneg %p260
        $region102: #{tpu_custom_call.1} parent=63 // pred_check_branch
          %564 = sbr.rel (%p562) target = $region104
        $region103: #{tpu_custom_call.1} parent=63 // pred_region
          %566 = dma.done [#allocation19], 4096
        $region104: #{tpu_custom_call.1} parent=63 // pred_fallthru
          _
        // Predicated region
        $region105: #{tpu_custom_call.1} parent=63 // pred_check
          %p567 = pneg %p281
        $region106: #{tpu_custom_call.1} parent=63 // pred_check_branch
          %569 = sbr.rel (%p567) target = $region108
        $region107: #{tpu_custom_call.1} parent=63 // pred_region
          %571 = dma.done [#allocation19], 16
        $region108: #{tpu_custom_call.1} parent=63 // pred_fallthru
          _
        %s572 = sand.u32 %s43, 1
        %s573 = scalar_lea.sflag [#allocation4], %s572
        %s574 = sand.u32 %s43, 1
        %s575 = smul.addr %s574, 16
        %s576 = scalar_lea.vmem [#allocation3], %s575
        %p577 = pneg %p56
        %p578 = pneg %p53
        %s579 = sand.u32 %s35, 1
        %s580 = scalar_lea.sflag [#allocation7], %s579
        %s581 = sand.u32 %s69, 1
        %s582 = smul.addr %s581, 2
        %s583 = scalar_lea.vmem [#allocation6], %s582
        %p584 = pneg %p82
        %p585 = pneg %p79
        %s586 = sand.u32 %s35, 1
        %s587 = scalar_lea.sflag [#allocation7], %s586
        %s588 = sand.u32 %s95, 1
        %s589 = smul.addr %s588, 2
        %s590 = scalar_lea.vmem [#allocation8], %s589
        %p591 = pneg %p108
        %p592 = pneg %p105
        %s593 = sand.u32 %s35, 1
        %s594 = scalar_lea.sflag [#allocation10], %s593
        %s595 = sand.u32 %s121, 1
        %s596 = smul.addr %s595, 1024
        %s597 = scalar_lea.vmem [#allocation9], %s596
        %p598 = pneg %p134
        %p599 = pneg %p131
        %p600 = pneg %p155
        %p601 = pneg %p152
        %p602 = pneg %p176
        %p603 = pneg %p173
        %p604 = pneg %p197
        %p605 = pneg %p194
        %p606 = pneg %p218
        %p607 = pneg %p215
        %p608 = pneg %p239
        %p609 = pneg %p236
        %p610 = pneg %p260
        %p611 = pneg %p257
        %p612 = pneg %p281
        %p613 = pneg %p278
        %p614 = pneg %p302
        %p615 = pneg %p299
        %s616 = smul.u32 2, %s35
        %s617 = smul.u32 2, %s35
        %s618 = smul.u32 2, %s35
        %s619 = smul.u32 32, %s35
        %p620 = scmp.eq.s32.totalorder %s35, 0
        // Predicated region
        $region109: #{tpu_custom_call.1} parent=63 // pred_check
          %p621 = pneg %p620
        $region110: #{tpu_custom_call.1} parent=63 // pred_check_branch
          %623 = sbr.rel (%p621) target = $region112
        $region111: #{tpu_custom_call.1} parent=63 // pred_region
          %624 = vst [vmem:[#allocation2] sm:$0xff] 0.0
          %625 = vst [vmem:[#allocation2 + $0x8] sm:$0xff] 0.0
          %626 = vst [vmem:[#allocation2 + $0x10] sm:$0xff] 0.0
          %627 = vst [vmem:[#allocation2 + $0x18] sm:$0xff] 0.0
          %628 = vst [vmem:[#allocation2 + $0x20] sm:$0xff] 0.0
          %629 = vst [vmem:[#allocation2 + $0x28] sm:$0xff] 0.0
          %630 = vst [vmem:[#allocation2 + $0x30] sm:$0xff] 0.0
          %631 = vst [vmem:[#allocation2 + $0x38] sm:$0xff] 0.0
        $region112: #{tpu_custom_call.1} parent=63 // pred_fallthru
          _
        %v632 = vld [vmem:[%s501] sm:$0xff]
        %v633 = vld [vmem:[%s501 + $0x8] sm:$0xff]
        %v634 = vrot.slane %v632, 4
        %v635 = vadd.f32 %v632, %v634
        %v636 = vrot.slane %v635, 2
        %v637 = vadd.f32 %v635, %v636
        %v638 = vrot.slane %v637, 1
        %v639 = vadd.f32 %v637, %v638
        %v640 = vrot.slane %v633, 4
        %v641 = vadd.f32 %v633, %v640
        %v642 = vrot.slane %v641, 2
        %v643 = vadd.f32 %v641, %v642
        %v644 = vrot.slane %v643, 1
        %v645 = vadd.f32 %v643, %v644
        %v646 = vrcp.pop 8.0
        %v647 = vmul.f32 8.0, %v646
        %v648 = vsub.f32 1.0, %v647
        %v649 = vmul.f32 %v646, %v648
        %v650 = vadd.f32 %v646, %v649
        %vm651 = vweird.f32 %v646
        %v652 = vsel %vm651, %v646, %v650
        %v653 = vmul.f32 %v639, %v652
        %v654 = vmul.f32 %v645, %v652
        %v655 = vsub.f32 %v632, %v653
        %v656 = vsub.f32 %v633, %v654
        %v657 = vmul.f32 %v655, %v655
        %v658 = vmul.f32 %v656, %v656
        %v659 = vrot.slane %v657, 4
        %v660 = vadd.f32 %v657, %v659
        %v661 = vrot.slane %v660, 2
        %v662 = vadd.f32 %v660, %v661
        %v663 = vrot.slane %v662, 1
        %v664 = vadd.f32 %v662, %v663
        %v665 = vrot.slane %v658, 4
        %v666 = vadd.f32 %v658, %v665
        %v667 = vrot.slane %v666, 2
        %v668 = vadd.f32 %v666, %v667
        %v669 = vrot.slane %v668, 1
        %v670 = vadd.f32 %v668, %v669
        %v671 = vmul.f32 %v664, %v652
        %v672 = vmul.f32 %v670, %v652
        %v673 = vld [vmem:[%s511] sm:$0x3]
        %v674 = vadd.f32 %v671, 1e-05
        %v675 = vadd.f32 %v672, 1e-05
        %v676 = vrsqrt.pop %v674
        %v677 = vmul.f32 %v676, %v674
        %v678 = vmul.f32 %v677, %v676
        %v679 = vmul.f32 0.5, %v678
        %v680 = vsub.f32 1.5, %v679
        %v681 = vmul.f32 %v676, %v680
        %vm682 = vweird.f32 %v674
        %vm683 = vweird.f32 %v676
        %vm684 = vmor %vm682, %vm683
        %v685 = vsel %vm684, %v676, %v681
        %v686 = vrsqrt.pop %v675
        %v687 = vmul.f32 %v686, %v675
        %v688 = vmul.f32 %v687, %v686
        %v689 = vmul.f32 0.5, %v688
        %v690 = vsub.f32 1.5, %v689
        %v691 = vmul.f32 %v686, %v690
        %vm692 = vweird.f32 %v675
        %vm693 = vweird.f32 %v686
        %vm694 = vmor %vm692, %vm693
        %v695 = vsel %vm694, %v686, %v691
        %v698 = vrot.slane %v695, 7
        %vm699 = vcmask 1040384
        %v700 = vsel %vm699, %v685, %v698
        %v702 = vmul.f32 %v673, %v700
        %v703 = vld [vmem:[%s521] sm:$0x3]
        %v705 = vperm.slane %v702, 0
        %v706 = vperm.slane %v702, 1
        %v709 = vmul.f32 %v653, %v705
        %v710 = vmul.f32 %v654, %v706
        %v713 = vrot.slane %v710, 7
        %v714 = vsel %vm699, %v709, %v713
        %v716 = vsub.f32 %v703, %v714
        %v717 = vmul.f32 %v632, %v705
        %v718 = vmul.f32 %v633, %v706
        %v720 = vperm.slane %v716, 0
        %v721 = vperm.slane %v716, 1
        %v724 = vadd.f32 %v717, %v720
        %v725 = vadd.f32 %v718, %v721
        %v726 = vld [vmem:[#allocation2] sm:$0xff]
        %v727 = vld [vmem:[#allocation2 + $0x8] sm:$0xff]
        %v728 = vld [vmem:[#allocation2 + $0x10] sm:$0xff]
        %v729 = vld [vmem:[#allocation2 + $0x18] sm:$0xff]
        %v730 = vld [vmem:[#allocation2 + $0x20] sm:$0xff]
        %v731 = vld [vmem:[#allocation2 + $0x28] sm:$0xff]
        %v732 = vld [vmem:[#allocation2 + $0x30] sm:$0xff]
        %v733 = vld [vmem:[#allocation2 + $0x38] sm:$0xff]
        %v734 = vpack.c.bf16 %v724, %v724
        %v735 = vpack.c.bf16 %v725, %v725
        %v736 = vld [vmem:[%s531] sm:$0xff]
        %v737 = vld [vmem:[%s531 + $0x8] sm:$0xff]
        %v738 = vld [vmem:[%s531 + $0x10] sm:$0xff]
        %v739 = vld [vmem:[%s531 + $0x18] sm:$0xff]
        %v740 = vld [vmem:[%s531 + $0x20] sm:$0xff]
        %v741 = vld [vmem:[%s531 + $0x28] sm:$0xff]
        %v742 = vld [vmem:[%s531 + $0x30] sm:$0xff]
        %v743 = vld [vmem:[%s531 + $0x38] sm:$0xff]
        %v744 = vld [vmem:[%s531 + $0x40] sm:$0xff]
        %v745 = vld [vmem:[%s531 + $0x48] sm:$0xff]
        %v746 = vld [vmem:[%s531 + $0x50] sm:$0xff]
        %v747 = vld [vmem:[%s531 + $0x58] sm:$0xff]
        %v748 = vld [vmem:[%s531 + $0x60] sm:$0xff]
        %v749 = vld [vmem:[%s531 + $0x68] sm:$0xff]
        %v750 = vld [vmem:[%s531 + $0x70] sm:$0xff]
        %v751 = vld [vmem:[%s531 + $0x78] sm:$0xff]
        %v752 = vld [vmem:[%s531 + $0x80] sm:$0xff]
        %v753 = vld [vmem:[%s531 + $0x88] sm:$0xff]
        %v754 = vld [vmem:[%s531 + $0x90] sm:$0xff]
        %v755 = vld [vmem:[%s531 + $0x98] sm:$0xff]
        %v756 = vld [vmem:[%s531 + $0xa0] sm:$0xff]
        %v757 = vld [vmem:[%s531 + $0xa8] sm:$0xff]
        %v758 = vld [vmem:[%s531 + $0xb0] sm:$0xff]
        %v759 = vld [vmem:[%s531 + $0xb8] sm:$0xff]
        %v760 = vld [vmem:[%s531 + $0xc0] sm:$0xff]
        %v761 = vld [vmem:[%s531 + $0xc8] sm:$0xff]
        %v762 = vld [vmem:[%s531 + $0xd0] sm:$0xff]
        %v763 = vld [vmem:[%s531 + $0xd8] sm:$0xff]
        %v764 = vld [vmem:[%s531 + $0xe0] sm:$0xff]
        %v765 = vld [vmem:[%s531 + $0xe8] sm:$0xff]
        %v766 = vld [vmem:[%s531 + $0xf0] sm:$0xff]
        %v767 = vld [vmem:[%s531 + $0xf8] sm:$0xff]
        %v768 = vld [vmem:[%s531 + $0x100] sm:$0xff]
        %v769 = vld [vmem:[%s531 + $0x108] sm:$0xff]
        %v770 = vld [vmem:[%s531 + $0x110] sm:$0xff]
        %v771 = vld [vmem:[%s531 + $0x118] sm:$0xff]
        %v772 = vld [vmem:[%s531 + $0x120] sm:$0xff]
        %v773 = vld [vmem:[%s531 + $0x128] sm:$0xff]
        %v774 = vld [vmem:[%s531 + $0x130] sm:$0xff]
        %v775 = vld [vmem:[%s531 + $0x138] sm:$0xff]
        %v776 = vld [vmem:[%s531 + $0x140] sm:$0xff]
        %v777 = vld [vmem:[%s531 + $0x148] sm:$0xff]
        %v778 = vld [vmem:[%s531 + $0x150] sm:$0xff]
        %v779 = vld [vmem:[%s531 + $0x158] sm:$0xff]
        %v780 = vld [vmem:[%s531 + $0x160] sm:$0xff]
        %v781 = vld [vmem:[%s531 + $0x168] sm:$0xff]
        %v782 = vld [vmem:[%s531 + $0x170] sm:$0xff]
        %v783 = vld [vmem:[%s531 + $0x178] sm:$0xff]
        %v784 = vld [vmem:[%s531 + $0x180] sm:$0xff]
        %v785 = vld [vmem:[%s531 + $0x188] sm:$0xff]
        %v786 = vld [vmem:[%s531 + $0x190] sm:$0xff]
        %v787 = vld [vmem:[%s531 + $0x198] sm:$0xff]
        %v788 = vld [vmem:[%s531 + $0x1a0] sm:$0xff]
        %v789 = vld [vmem:[%s531 + $0x1a8] sm:$0xff]
        %v790 = vld [vmem:[%s531 + $0x1b0] sm:$0xff]
        %v791 = vld [vmem:[%s531 + $0x1b8] sm:$0xff]
        %v792 = vld [vmem:[%s531 + $0x1c0] sm:$0xff]
        %v793 = vld [vmem:[%s531 + $0x1c8] sm:$0xff]
        %v794 = vld [vmem:[%s531 + $0x1d0] sm:$0xff]
        %v795 = vld [vmem:[%s531 + $0x1d8] sm:$0xff]
        %v796 = vld [vmem:[%s531 + $0x1e0] sm:$0xff]
        %v797 = vld [vmem:[%s531 + $0x1e8] sm:$0xff]
        %v798 = vld [vmem:[%s531 + $0x1f0] sm:$0xff]
        %v799 = vld [vmem:[%s531 + $0x1f8] sm:$0xff]
        %v800 = vld [vmem:[%s531 + $0x200] sm:$0xff]
        %v801 = vld [vmem:[%s531 + $0x208] sm:$0xff]
        %v802 = vld [vmem:[%s531 + $0x210] sm:$0xff]
        %v803 = vld [vmem:[%s531 + $0x218] sm:$0xff]
        %v804 = vld [vmem:[%s531 + $0x220] sm:$0xff]
        %v805 = vld [vmem:[%s531 + $0x228] sm:$0xff]
        %v806 = vld [vmem:[%s531 + $0x230] sm:$0xff]
        %v807 = vld [vmem:[%s531 + $0x238] sm:$0xff]
        %v808 = vld [vmem:[%s531 + $0x240] sm:$0xff]
        %v809 = vld [vmem:[%s531 + $0x248] sm:$0xff]
        %v810 = vld [vmem:[%s531 + $0x250] sm:$0xff]
        %v811 = vld [vmem:[%s531 + $0x258] sm:$0xff]
        %v812 = vld [vmem:[%s531 + $0x260] sm:$0xff]
        %v813 = vld [vmem:[%s531 + $0x268] sm:$0xff]
        %v814 = vld [vmem:[%s531 + $0x270] sm:$0xff]
        %v815 = vld [vmem:[%s531 + $0x278] sm:$0xff]
        %v816 = vld [vmem:[%s531 + $0x280] sm:$0xff]
        %v817 = vld [vmem:[%s531 + $0x288] sm:$0xff]
        %v818 = vld [vmem:[%s531 + $0x290] sm:$0xff]
        %v819 = vld [vmem:[%s531 + $0x298] sm:$0xff]
        %v820 = vld [vmem:[%s531 + $0x2a0] sm:$0xff]
        %v821 = vld [vmem:[%s531 + $0x2a8] sm:$0xff]
        %v822 = vld [vmem:[%s531 + $0x2b0] sm:$0xff]
        %v823 = vld [vmem:[%s531 + $0x2b8] sm:$0xff]
        %v824 = vld [vmem:[%s531 + $0x2c0] sm:$0xff]
        %v825 = vld [vmem:[%s531 + $0x2c8] sm:$0xff]
        %v826 = vld [vmem:[%s531 + $0x2d0] sm:$0xff]
        %v827 = vld [vmem:[%s531 + $0x2d8] sm:$0xff]
        %v828 = vld [vmem:[%s531 + $0x2e0] sm:$0xff]
        %v829 = vld [vmem:[%s531 + $0x2e8] sm:$0xff]
        %v830 = vld [vmem:[%s531 + $0x2f0] sm:$0xff]
        %v831 = vld [vmem:[%s531 + $0x2f8] sm:$0xff]
        %v832 = vld [vmem:[%s531 + $0x300] sm:$0xff]
        %v833 = vld [vmem:[%s531 + $0x308] sm:$0xff]
        %v834 = vld [vmem:[%s531 + $0x310] sm:$0xff]
        %v835 = vld [vmem:[%s531 + $0x318] sm:$0xff]
        %v836 = vld [vmem:[%s531 + $0x320] sm:$0xff]
        %v837 = vld [vmem:[%s531 + $0x328] sm:$0xff]
        %v838 = vld [vmem:[%s531 + $0x330] sm:$0xff]
        %v839 = vld [vmem:[%s531 + $0x338] sm:$0xff]
        %v840 = vld [vmem:[%s531 + $0x340] sm:$0xff]
        %v841 = vld [vmem:[%s531 + $0x348] sm:$0xff]
        %v842 = vld [vmem:[%s531 + $0x350] sm:$0xff]
        %v843 = vld [vmem:[%s531 + $0x358] sm:$0xff]
        %v844 = vld [vmem:[%s531 + $0x360] sm:$0xff]
        %v845 = vld [vmem:[%s531 + $0x368] sm:$0xff]
        %v846 = vld [vmem:[%s531 + $0x370] sm:$0xff]
        %v847 = vld [vmem:[%s531 + $0x378] sm:$0xff]
        %v848 = vld [vmem:[%s531 + $0x380] sm:$0xff]
        %v849 = vld [vmem:[%s531 + $0x388] sm:$0xff]
        %v850 = vld [vmem:[%s531 + $0x390] sm:$0xff]
        %v851 = vld [vmem:[%s531 + $0x398] sm:$0xff]
        %v852 = vld [vmem:[%s531 + $0x3a0] sm:$0xff]
        %v853 = vld [vmem:[%s531 + $0x3a8] sm:$0xff]
        %v854 = vld [vmem:[%s531 + $0x3b0] sm:$0xff]
        %v855 = vld [vmem:[%s531 + $0x3b8] sm:$0xff]
        %v856 = vld [vmem:[%s531 + $0x3c0] sm:$0xff]
        %v857 = vld [vmem:[%s531 + $0x3c8] sm:$0xff]
        %v858 = vld [vmem:[%s531 + $0x3d0] sm:$0xff]
        %v859 = vld [vmem:[%s531 + $0x3d8] sm:$0xff]
        %v860 = vld [vmem:[%s531 + $0x3e0] sm:$0xff]
        %v861 = vld [vmem:[%s531 + $0x3e8] sm:$0xff]
        %v862 = vld [vmem:[%s531 + $0x3f0] sm:$0xff]
        %v863 = vld [vmem:[%s531 + $0x3f8] sm:$0xff]
        %v992 = vunpack.c.l.b16 %v736
        %v993 = vunpack.c.h.b16 %v736
        %v994 = vunpack.c.l.b16 %v737
        %v995 = vunpack.c.h.b16 %v737
        %v996 = vunpack.c.l.b16 %v738
        %v997 = vunpack.c.h.b16 %v738
        %v998 = vunpack.c.l.b16 %v739
        %v999 = vunpack.c.h.b16 %v739
        %v1000 = vunpack.c.l.b16 %v740
        %v1001 = vunpack.c.h.b16 %v740
        %v1002 = vunpack.c.l.b16 %v741
        %v1003 = vunpack.c.h.b16 %v741
        %v1004 = vunpack.c.l.b16 %v742
        %v1005 = vunpack.c.h.b16 %v742
        %v1006 = vunpack.c.l.b16 %v743
        %v1007 = vunpack.c.h.b16 %v743
        %v1008 = vunpack.c.l.b16 %v744
        %v1009 = vunpack.c.h.b16 %v744
        %v1010 = vunpack.c.l.b16 %v745
        %v1011 = vunpack.c.h.b16 %v745
        %v1012 = vunpack.c.l.b16 %v746
        %v1013 = vunpack.c.h.b16 %v746
        %v1014 = vunpack.c.l.b16 %v747
        %v1015 = vunpack.c.h.b16 %v747
        %v1016 = vunpack.c.l.b16 %v748
        %v1017 = vunpack.c.h.b16 %v748
        %v1018 = vunpack.c.l.b16 %v749
        %v1019 = vunpack.c.h.b16 %v749
        %v1020 = vunpack.c.l.b16 %v750
        %v1021 = vunpack.c.h.b16 %v750
        %v1022 = vunpack.c.l.b16 %v751
        %v1023 = vunpack.c.h.b16 %v751
        %v1024 = vunpack.c.l.b16 %v752
        %v1025 = vunpack.c.h.b16 %v752
        %v1026 = vunpack.c.l.b16 %v753
        %v1027 = vunpack.c.h.b16 %v753
        %v1028 = vunpack.c.l.b16 %v754
        %v1029 = vunpack.c.h.b16 %v754
        %v1030 = vunpack.c.l.b16 %v755
        %v1031 = vunpack.c.h.b16 %v755
        %v1032 = vunpack.c.l.b16 %v756
        %v1033 = vunpack.c.h.b16 %v756
        %v1034 = vunpack.c.l.b16 %v757
        %v1035 = vunpack.c.h.b16 %v757
        %v1036 = vunpack.c.l.b16 %v758
        %v1037 = vunpack.c.h.b16 %v758
        %v1038 = vunpack.c.l.b16 %v759
        %v1039 = vunpack.c.h.b16 %v759
        %v1040 = vunpack.c.l.b16 %v760
        %v1041 = vunpack.c.h.b16 %v760
        %v1042 = vunpack.c.l.b16 %v761
        %v1043 = vunpack.c.h.b16 %v761
        %v1044 = vunpack.c.l.b16 %v762
        %v1045 = vunpack.c.h.b16 %v762
        %v1046 = vunpack.c.l.b16 %v763
        %v1047 = vunpack.c.h.b16 %v763
        %v1048 = vunpack.c.l.b16 %v764
        %v1049 = vunpack.c.h.b16 %v764
        %v1050 = vunpack.c.l.b16 %v765
        %v1051 = vunpack.c.h.b16 %v765
        %v1052 = vunpack.c.l.b16 %v766
        %v1053 = vunpack.c.h.b16 %v766
        %v1054 = vunpack.c.l.b16 %v767
        %v1055 = vunpack.c.h.b16 %v767
        %v1056 = vunpack.c.l.b16 %v768
        %v1057 = vunpack.c.h.b16 %v768
        %v1058 = vunpack.c.l.b16 %v769
        %v1059 = vunpack.c.h.b16 %v769
        %v1060 = vunpack.c.l.b16 %v770
        %v1061 = vunpack.c.h.b16 %v770
        %v1062 = vunpack.c.l.b16 %v771
        %v1063 = vunpack.c.h.b16 %v771
        %v1064 = vunpack.c.l.b16 %v772
        %v1065 = vunpack.c.h.b16 %v772
        %v1066 = vunpack.c.l.b16 %v773
        %v1067 = vunpack.c.h.b16 %v773
        %v1068 = vunpack.c.l.b16 %v774
        %v1069 = vunpack.c.h.b16 %v774
        %v1070 = vunpack.c.l.b16 %v775
        %v1071 = vunpack.c.h.b16 %v775
        %v1072 = vunpack.c.l.b16 %v776
        %v1073 = vunpack.c.h.b16 %v776
        %v1074 = vunpack.c.l.b16 %v777
        %v1075 = vunpack.c.h.b16 %v777
        %v1076 = vunpack.c.l.b16 %v778
        %v1077 = vunpack.c.h.b16 %v778
        %v1078 = vunpack.c.l.b16 %v779
        %v1079 = vunpack.c.h.b16 %v779
        %v1080 = vunpack.c.l.b16 %v780
        %v1081 = vunpack.c.h.b16 %v780
        %v1082 = vunpack.c.l.b16 %v781
        %v1083 = vunpack.c.h.b16 %v781
        %v1084 = vunpack.c.l.b16 %v782
        %v1085 = vunpack.c.h.b16 %v782
        %v1086 = vunpack.c.l.b16 %v783
        %v1087 = vunpack.c.h.b16 %v783
        %v1088 = vunpack.c.l.b16 %v784
        %v1089 = vunpack.c.h.b16 %v784
        %v1090 = vunpack.c.l.b16 %v785
        %v1091 = vunpack.c.h.b16 %v785
        %v1092 = vunpack.c.l.b16 %v786
        %v1093 = vunpack.c.h.b16 %v786
        %v1094 = vunpack.c.l.b16 %v787
        %v1095 = vunpack.c.h.b16 %v787
        %v1096 = vunpack.c.l.b16 %v788
        %v1097 = vunpack.c.h.b16 %v788
        %v1098 = vunpack.c.l.b16 %v789
        %v1099 = vunpack.c.h.b16 %v789
        %v1100 = vunpack.c.l.b16 %v790
        %v1101 = vunpack.c.h.b16 %v790
        %v1102 = vunpack.c.l.b16 %v791
        %v1103 = vunpack.c.h.b16 %v791
        %v1104 = vunpack.c.l.b16 %v792
        %v1105 = vunpack.c.h.b16 %v792
        %v1106 = vunpack.c.l.b16 %v793
        %v1107 = vunpack.c.h.b16 %v793
        %v1108 = vunpack.c.l.b16 %v794
        %v1109 = vunpack.c.h.b16 %v794
        %v1110 = vunpack.c.l.b16 %v795
        %v1111 = vunpack.c.h.b16 %v795
        %v1112 = vunpack.c.l.b16 %v796
        %v1113 = vunpack.c.h.b16 %v796
        %v1114 = vunpack.c.l.b16 %v797
        %v1115 = vunpack.c.h.b16 %v797
        %v1116 = vunpack.c.l.b16 %v798
        %v1117 = vunpack.c.h.b16 %v798
        %v1118 = vunpack.c.l.b16 %v799
        %v1119 = vunpack.c.h.b16 %v799
        %v1120 = vunpack.c.l.b16 %v800
        %v1121 = vunpack.c.h.b16 %v800
        %v1122 = vunpack.c.l.b16 %v801
        %v1123 = vunpack.c.h.b16 %v801
        %v1124 = vunpack.c.l.b16 %v802
        %v1125 = vunpack.c.h.b16 %v802
        %v1126 = vunpack.c.l.b16 %v803
        %v1127 = vunpack.c.h.b16 %v803
        %v1128 = vunpack.c.l.b16 %v804
        %v1129 = vunpack.c.h.b16 %v804
        %v1130 = vunpack.c.l.b16 %v805
        %v1131 = vunpack.c.h.b16 %v805
        %v1132 = vunpack.c.l.b16 %v806
        %v1133 = vunpack.c.h.b16 %v806
        %v1134 = vunpack.c.l.b16 %v807
        %v1135 = vunpack.c.h.b16 %v807
        %v1136 = vunpack.c.l.b16 %v808
        %v1137 = vunpack.c.h.b16 %v808
        %v1138 = vunpack.c.l.b16 %v809
        %v1139 = vunpack.c.h.b16 %v809
        %v1140 = vunpack.c.l.b16 %v810
        %v1141 = vunpack.c.h.b16 %v810
        %v1142 = vunpack.c.l.b16 %v811
        %v1143 = vunpack.c.h.b16 %v811
        %v1144 = vunpack.c.l.b16 %v812
        %v1145 = vunpack.c.h.b16 %v812
        %v1146 = vunpack.c.l.b16 %v813
        %v1147 = vunpack.c.h.b16 %v813
        %v1148 = vunpack.c.l.b16 %v814
        %v1149 = vunpack.c.h.b16 %v814
        %v1150 = vunpack.c.l.b16 %v815
        %v1151 = vunpack.c.h.b16 %v815
        %v1152 = vunpack.c.l.b16 %v816
        %v1153 = vunpack.c.h.b16 %v816
        %v1154 = vunpack.c.l.b16 %v817
        %v1155 = vunpack.c.h.b16 %v817
        %v1156 = vunpack.c.l.b16 %v818
        %v1157 = vunpack.c.h.b16 %v818
        %v1158 = vunpack.c.l.b16 %v819
        %v1159 = vunpack.c.h.b16 %v819
        %v1160 = vunpack.c.l.b16 %v820
        %v1161 = vunpack.c.h.b16 %v820
        %v1162 = vunpack.c.l.b16 %v821
        %v1163 = vunpack.c.h.b16 %v821
        %v1164 = vunpack.c.l.b16 %v822
        %v1165 = vunpack.c.h.b16 %v822
        %v1166 = vunpack.c.l.b16 %v823
        %v1167 = vunpack.c.h.b16 %v823
        %v1168 = vunpack.c.l.b16 %v824
        %v1169 = vunpack.c.h.b16 %v824
        %v1170 = vunpack.c.l.b16 %v825
        %v1171 = vunpack.c.h.b16 %v825
        %v1172 = vunpack.c.l.b16 %v826
        %v1173 = vunpack.c.h.b16 %v826
        %v1174 = vunpack.c.l.b16 %v827
        %v1175 = vunpack.c.h.b16 %v827
        %v1176 = vunpack.c.l.b16 %v828
        %v1177 = vunpack.c.h.b16 %v828
        %v1178 = vunpack.c.l.b16 %v829
        %v1179 = vunpack.c.h.b16 %v829
        %v1180 = vunpack.c.l.b16 %v830
        %v1181 = vunpack.c.h.b16 %v830
        %v1182 = vunpack.c.l.b16 %v831
        %v1183 = vunpack.c.h.b16 %v831
        %v1184 = vunpack.c.l.b16 %v832
        %v1185 = vunpack.c.h.b16 %v832
        %v1186 = vunpack.c.l.b16 %v833
        %v1187 = vunpack.c.h.b16 %v833
        %v1188 = vunpack.c.l.b16 %v834
        %v1189 = vunpack.c.h.b16 %v834
        %v1190 = vunpack.c.l.b16 %v835
        %v1191 = vunpack.c.h.b16 %v835
        %v1192 = vunpack.c.l.b16 %v836
        %v1193 = vunpack.c.h.b16 %v836
        %v1194 = vunpack.c.l.b16 %v837
        %v1195 = vunpack.c.h.b16 %v837
        %v1196 = vunpack.c.l.b16 %v838
        %v1197 = vunpack.c.h.b16 %v838
        %v1198 = vunpack.c.l.b16 %v839
        %v1199 = vunpack.c.h.b16 %v839
        %v1200 = vunpack.c.l.b16 %v840
        %v1201 = vunpack.c.h.b16 %v840
        %v1202 = vunpack.c.l.b16 %v841
        %v1203 = vunpack.c.h.b16 %v841
        %v1204 = vunpack.c.l.b16 %v842
        %v1205 = vunpack.c.h.b16 %v842
        %v1206 = vunpack.c.l.b16 %v843
        %v1207 = vunpack.c.h.b16 %v843
        %v1208 = vunpack.c.l.b16 %v844
        %v1209 = vunpack.c.h.b16 %v844
        %v1210 = vunpack.c.l.b16 %v845
        %v1211 = vunpack.c.h.b16 %v845
        %v1212 = vunpack.c.l.b16 %v846
        %v1213 = vunpack.c.h.b16 %v846
        %v1214 = vunpack.c.l.b16 %v847
        %v1215 = vunpack.c.h.b16 %v847
        %v1216 = vunpack.c.l.b16 %v848
        %v1217 = vunpack.c.h.b16 %v848
        %v1218 = vunpack.c.l.b16 %v849
        %v1219 = vunpack.c.h.b16 %v849
        %v1220 = vunpack.c.l.b16 %v850
        %v1221 = vunpack.c.h.b16 %v850
        %v1222 = vunpack.c.l.b16 %v851
        %v1223 = vunpack.c.h.b16 %v851
        %v1224 = vunpack.c.l.b16 %v852
        %v1225 = vunpack.c.h.b16 %v852
        %v1226 = vunpack.c.l.b16 %v853
        %v1227 = vunpack.c.h.b16 %v853
        %v1228 = vunpack.c.l.b16 %v854
        %v1229 = vunpack.c.h.b16 %v854
        %v1230 = vunpack.c.l.b16 %v855
        %v1231 = vunpack.c.h.b16 %v855
        %v1232 = vunpack.c.l.b16 %v856
        %v1233 = vunpack.c.h.b16 %v856
        %v1234 = vunpack.c.l.b16 %v857
        %v1235 = vunpack.c.h.b16 %v857
        %v1236 = vunpack.c.l.b16 %v858
        %v1237 = vunpack.c.h.b16 %v858
        %v1238 = vunpack.c.l.b16 %v859
        %v1239 = vunpack.c.h.b16 %v859
        %v1240 = vunpack.c.l.b16 %v860
        %v1241 = vunpack.c.h.b16 %v860
        %v1242 = vunpack.c.l.b16 %v861
        %v1243 = vunpack.c.h.b16 %v861
        %v1244 = vunpack.c.l.b16 %v862
        %v1245 = vunpack.c.h.b16 %v862
        %v1246 = vunpack.c.l.b16 %v863
        %v1247 = vunpack.c.h.b16 %v863
        %v1248 = vpack.c.b16 %v1000, %v992
        %v1249 = vpack.c.b16 %v1001, %v993
        %v1250 = vpack.c.b16 %v1002, %v994
        %v1251 = vpack.c.b16 %v1003, %v995
        %v1252 = vpack.c.b16 %v1004, %v996
        %v1253 = vpack.c.b16 %v1005, %v997
        %v1254 = vpack.c.b16 %v1006, %v998
        %v1255 = vpack.c.b16 %v1007, %v999
        %v1256 = vpack.c.b16 %v1016, %v1008
        %v1257 = vpack.c.b16 %v1017, %v1009
        %v1258 = vpack.c.b16 %v1018, %v1010
        %v1259 = vpack.c.b16 %v1019, %v1011
        %v1260 = vpack.c.b16 %v1020, %v1012
        %v1261 = vpack.c.b16 %v1021, %v1013
        %v1262 = vpack.c.b16 %v1022, %v1014
        %v1263 = vpack.c.b16 %v1023, %v1015
        %v1264 = vpack.c.b16 %v1032, %v1024
        %v1265 = vpack.c.b16 %v1033, %v1025
        %v1266 = vpack.c.b16 %v1034, %v1026
        %v1267 = vpack.c.b16 %v1035, %v1027
        %v1268 = vpack.c.b16 %v1036, %v1028
        %v1269 = vpack.c.b16 %v1037, %v1029
        %v1270 = vpack.c.b16 %v1038, %v1030
        %v1271 = vpack.c.b16 %v1039, %v1031
        %v1272 = vpack.c.b16 %v1048, %v1040
        %v1273 = vpack.c.b16 %v1049, %v1041
        %v1274 = vpack.c.b16 %v1050, %v1042
        %v1275 = vpack.c.b16 %v1051, %v1043
        %v1276 = vpack.c.b16 %v1052, %v1044
        %v1277 = vpack.c.b16 %v1053, %v1045
        %v1278 = vpack.c.b16 %v1054, %v1046
        %v1279 = vpack.c.b16 %v1055, %v1047
        %v1280 = vpack.c.b16 %v1064, %v1056
        %v1281 = vpack.c.b16 %v1065, %v1057
        %v1282 = vpack.c.b16 %v1066, %v1058
        %v1283 = vpack.c.b16 %v1067, %v1059
        %v1284 = vpack.c.b16 %v1068, %v1060
        %v1285 = vpack.c.b16 %v1069, %v1061
        %v1286 = vpack.c.b16 %v1070, %v1062
        %v1287 = vpack.c.b16 %v1071, %v1063
        %v1288 = vpack.c.b16 %v1080, %v1072
        %v1289 = vpack.c.b16 %v1081, %v1073
        %v1290 = vpack.c.b16 %v1082, %v1074
        %v1291 = vpack.c.b16 %v1083, %v1075
        %v1292 = vpack.c.b16 %v1084, %v1076
        %v1293 = vpack.c.b16 %v1085, %v1077
        %v1294 = vpack.c.b16 %v1086, %v1078
        %v1295 = vpack.c.b16 %v1087, %v1079
        %v1296 = vpack.c.b16 %v1096, %v1088
        %v1297 = vpack.c.b16 %v1097, %v1089
        %v1298 = vpack.c.b16 %v1098, %v1090
        %v1299 = vpack.c.b16 %v1099, %v1091
        %v1300 = vpack.c.b16 %v1100, %v1092
        %v1301 = vpack.c.b16 %v1101, %v1093
        %v1302 = vpack.c.b16 %v1102, %v1094
        %v1303 = vpack.c.b16 %v1103, %v1095
        %v1304 = vpack.c.b16 %v1112, %v1104
        %v1305 = vpack.c.b16 %v1113, %v1105
        %v1306 = vpack.c.b16 %v1114, %v1106
        %v1307 = vpack.c.b16 %v1115, %v1107
        %v1308 = vpack.c.b16 %v1116, %v1108
        %v1309 = vpack.c.b16 %v1117, %v1109
        %v1310 = vpack.c.b16 %v1118, %v1110
        %v1311 = vpack.c.b16 %v1119, %v1111
        %v1312 = vpack.c.b16 %v1128, %v1120
        %v1313 = vpack.c.b16 %v1129, %v1121
        %v1314 = vpack.c.b16 %v1130, %v1122
        %v1315 = vpack.c.b16 %v1131, %v1123
        %v1316 = vpack.c.b16 %v1132, %v1124
        %v1317 = vpack.c.b16 %v1133, %v1125
        %v1318 = vpack.c.b16 %v1134, %v1126
        %v1319 = vpack.c.b16 %v1135, %v1127
        %v1320 = vpack.c.b16 %v1144, %v1136
        %v1321 = vpack.c.b16 %v1145, %v1137
        %v1322 = vpack.c.b16 %v1146, %v1138
        %v1323 = vpack.c.b16 %v1147, %v1139
        %v1324 = vpack.c.b16 %v1148, %v1140
        %v1325 = vpack.c.b16 %v1149, %v1141
        %v1326 = vpack.c.b16 %v1150, %v1142
        %v1327 = vpack.c.b16 %v1151, %v1143
        %v1328 = vpack.c.b16 %v1160, %v1152
        %v1329 = vpack.c.b16 %v1161, %v1153
        %v1330 = vpack.c.b16 %v1162, %v1154
        %v1331 = vpack.c.b16 %v1163, %v1155
        %v1332 = vpack.c.b16 %v1164, %v1156
        %v1333 = vpack.c.b16 %v1165, %v1157
        %v1334 = vpack.c.b16 %v1166, %v1158
        %v1335 = vpack.c.b16 %v1167, %v1159
        %v1336 = vpack.c.b16 %v1176, %v1168
        %v1337 = vpack.c.b16 %v1177, %v1169
        %v1338 = vpack.c.b16 %v1178, %v1170
        %v1339 = vpack.c.b16 %v1179, %v1171
        %v1340 = vpack.c.b16 %v1180, %v1172
        %v1341 = vpack.c.b16 %v1181, %v1173
        %v1342 = vpack.c.b16 %v1182, %v1174
        %v1343 = vpack.c.b16 %v1183, %v1175
        %v1344 = vpack.c.b16 %v1192, %v1184
        %v1345 = vpack.c.b16 %v1193, %v1185
        %v1346 = vpack.c.b16 %v1194, %v1186
        %v1347 = vpack.c.b16 %v1195, %v1187
        %v1348 = vpack.c.b16 %v1196, %v1188
        %v1349 = vpack.c.b16 %v1197, %v1189
        %v1350 = vpack.c.b16 %v1198, %v1190
        %v1351 = vpack.c.b16 %v1199, %v1191
        %v1352 = vpack.c.b16 %v1208, %v1200
        %v1353 = vpack.c.b16 %v1209, %v1201
        %v1354 = vpack.c.b16 %v1210, %v1202
        %v1355 = vpack.c.b16 %v1211, %v1203
        %v1356 = vpack.c.b16 %v1212, %v1204
        %v1357 = vpack.c.b16 %v1213, %v1205
        %v1358 = vpack.c.b16 %v1214, %v1206
        %v1359 = vpack.c.b16 %v1215, %v1207
        %v1360 = vpack.c.b16 %v1224, %v1216
        %v1361 = vpack.c.b16 %v1225, %v1217
        %v1362 = vpack.c.b16 %v1226, %v1218
        %v1363 = vpack.c.b16 %v1227, %v1219
        %v1364 = vpack.c.b16 %v1228, %v1220
        %v1365 = vpack.c.b16 %v1229, %v1221
        %v1366 = vpack.c.b16 %v1230, %v1222
        %v1367 = vpack.c.b16 %v1231, %v1223
        %v1368 = vpack.c.b16 %v1240, %v1232
        %v1369 = vpack.c.b16 %v1241, %v1233
        %v1370 = vpack.c.b16 %v1242, %v1234
        %v1371 = vpack.c.b16 %v1243, %v1235
        %v1372 = vpack.c.b16 %v1244, %v1236
        %v1373 = vpack.c.b16 %v1245, %v1237
        %v1374 = vpack.c.b16 %v1246, %v1238
        %v1375 = vpack.c.b16 %v1247, %v1239
        %1504 = vmatpush.bf16.msra.mxu0 %v1304
        %1505 = vmatpush.bf16.msra.mxu0 %v1296
        %1506 = vmatpush.bf16.msra.mxu0 %v1288
        %1507 = vmatpush.bf16.msra.mxu0 %v1280
        %1508 = vmatpush.bf16.msra.mxu0 %v1272
        %1509 = vmatpush.bf16.msra.mxu0 %v1264
        %1510 = vmatpush.bf16.msra.mxu0 %v1256
        %1511 = vmatpush.bf16.msra.mxu0 %v1248
        %1512 = vmatmul.bf16.gmra.mxu0 %v734
        %v1513 = vpop.f32.mrf.mxu0
        %v1514 = vadd.f32 0.0, %v1513
        %v1515 = vpop.f32.mrf.mxu0
        %1516 = vdwg.mxu0
        %1517 = vmatpush.bf16.msra.mxu0 %v1368
        %1518 = vmatpush.bf16.msra.mxu0 %v1360
        %1519 = vmatpush.bf16.msra.mxu0 %v1352
        %1520 = vmatpush.bf16.msra.mxu0 %v1344
        %1521 = vmatpush.bf16.msra.mxu0 %v1336
        %1522 = vmatpush.bf16.msra.mxu0 %v1328
        %1523 = vmatpush.bf16.msra.mxu0 %v1320
        %1524 = vmatpush.bf16.msra.mxu0 %v1312
        %1525 = vmatmul.bf16.gmra.mxu0 %v735
        %v1526 = vpop.f32.mrf.mxu0
        %v1527 = vadd.f32 %v1514, %v1526
        %v1528 = vpop.f32.mrf.mxu0
        %1529 = vdwg.mxu0
        %1530 = vmatpush.bf16.msra.mxu0 %v1305
        %1531 = vmatpush.bf16.msra.mxu0 %v1297
        %1532 = vmatpush.bf16.msra.mxu0 %v1289
        %1533 = vmatpush.bf16.msra.mxu0 %v1281
        %1534 = vmatpush.bf16.msra.mxu0 %v1273
        %1535 = vmatpush.bf16.msra.mxu0 %v1265
        %1536 = vmatpush.bf16.msra.mxu0 %v1257
        %1537 = vmatpush.bf16.msra.mxu0 %v1249
        %1538 = vmatmul.bf16.gmra.mxu0 %v734
        %v1539 = vpop.f32.mrf.mxu0
        %v1540 = vadd.f32 0.0, %v1539
        %v1541 = vpop.f32.mrf.mxu0
        %1542 = vdwg.mxu0
        %1543 = vmatpush.bf16.msra.mxu0 %v1369
        %1544 = vmatpush.bf16.msra.mxu0 %v1361
        %1545 = vmatpush.bf16.msra.mxu0 %v1353
        %1546 = vmatpush.bf16.msra.mxu0 %v1345
        %1547 = vmatpush.bf16.msra.mxu0 %v1337
        %1548 = vmatpush.bf16.msra.mxu0 %v1329
        %1549 = vmatpush.bf16.msra.mxu0 %v1321
        %1550 = vmatpush.bf16.msra.mxu0 %v1313
        %1551 = vmatmul.bf16.gmra.mxu0 %v735
        %v1552 = vpop.f32.mrf.mxu0
        %v1553 = vadd.f32 %v1540, %v1552
        %v1554 = vpop.f32.mrf.mxu0
        %1555 = vdwg.mxu0
        %1556 = vmatpush.bf16.msra.mxu0 %v1306
        %1557 = vmatpush.bf16.msra.mxu0 %v1298
        %1558 = vmatpush.bf16.msra.mxu0 %v1290
        %1559 = vmatpush.bf16.msra.mxu0 %v1282
        %1560 = vmatpush.bf16.msra.mxu0 %v1274
        %1561 = vmatpush.bf16.msra.mxu0 %v1266
        %1562 = vmatpush.bf16.msra.mxu0 %v1258
        %1563 = vmatpush.bf16.msra.mxu0 %v1250
        %1564 = vmatmul.bf16.gmra.mxu0 %v734
        %v1565 = vpop.f32.mrf.mxu0
        %v1566 = vadd.f32 0.0, %v1565
        %v1567 = vpop.f32.mrf.mxu0
        %1568 = vdwg.mxu0
        %1569 = vmatpush.bf16.msra.mxu0 %v1370
        %1570 = vmatpush.bf16.msra.mxu0 %v1362
        %1571 = vmatpush.bf16.msra.mxu0 %v1354
        %1572 = vmatpush.bf16.msra.mxu0 %v1346
        %1573 = vmatpush.bf16.msra.mxu0 %v1338
        %1574 = vmatpush.bf16.msra.mxu0 %v1330
        %1575 = vmatpush.bf16.msra.mxu0 %v1322
        %1576 = vmatpush.bf16.msra.mxu0 %v1314
        %1577 = vmatmul.bf16.gmra.mxu0 %v735
        %v1578 = vpop.f32.mrf.mxu0
        %v1579 = vadd.f32 %v1566, %v1578
        %v1580 = vpop.f32.mrf.mxu0
        %1581 = vdwg.mxu0
        %1582 = vmatpush.bf16.msra.mxu0 %v1307
        %1583 = vmatpush.bf16.msra.mxu0 %v1299
        %1584 = vmatpush.bf16.msra.mxu0 %v1291
        %1585 = vmatpush.bf16.msra.mxu0 %v1283
        %1586 = vmatpush.bf16.msra.mxu0 %v1275
        %1587 = vmatpush.bf16.msra.mxu0 %v1267
        %1588 = vmatpush.bf16.msra.mxu0 %v1259
        %1589 = vmatpush.bf16.msra.mxu0 %v1251
        %1590 = vmatmul.bf16.gmra.mxu0 %v734
        %v1591 = vpop.f32.mrf.mxu0
        %v1592 = vadd.f32 0.0, %v1591
        %v1593 = vpop.f32.mrf.mxu0
        %1594 = vdwg.mxu0
        %1595 = vmatpush.bf16.msra.mxu0 %v1371
        %1596 = vmatpush.bf16.msra.mxu0 %v1363
        %1597 = vmatpush.bf16.msra.mxu0 %v1355
        %1598 = vmatpush.bf16.msra.mxu0 %v1347
        %1599 = vmatpush.bf16.msra.mxu0 %v1339
        %1600 = vmatpush.bf16.msra.mxu0 %v1331
        %1601 = vmatpush.bf16.msra.mxu0 %v1323
        %1602 = vmatpush.bf16.msra.mxu0 %v1315
        %1603 = vmatmul.bf16.gmra.mxu0 %v735
        %v1604 = vpop.f32.mrf.mxu0
        %v1605 = vadd.f32 %v1592, %v1604
        %v1606 = vpop.f32.mrf.mxu0
        %1607 = vdwg.mxu0
        %1608 = vmatpush.bf16.msra.mxu0 %v1308
        %1609 = vmatpush.bf16.msra.mxu0 %v1300
        %1610 = vmatpush.bf16.msra.mxu0 %v1292
        %1611 = vmatpush.bf16.msra.mxu0 %v1284
        %1612 = vmatpush.bf16.msra.mxu0 %v1276
        %1613 = vmatpush.bf16.msra.mxu0 %v1268
        %1614 = vmatpush.bf16.msra.mxu0 %v1260
        %1615 = vmatpush.bf16.msra.mxu0 %v1252
        %1616 = vmatmul.bf16.gmra.mxu0 %v734
        %v1617 = vpop.f32.mrf.mxu0
        %v1618 = vadd.f32 0.0, %v1617
        %v1619 = vpop.f32.mrf.mxu0
        %1620 = vdwg.mxu0
        %1621 = vmatpush.bf16.msra.mxu0 %v1372
        %1622 = vmatpush.bf16.msra.mxu0 %v1364
        %1623 = vmatpush.bf16.msra.mxu0 %v1356
        %1624 = vmatpush.bf16.msra.mxu0 %v1348
        %1625 = vmatpush.bf16.msra.mxu0 %v1340
        %1626 = vmatpush.bf16.msra.mxu0 %v1332
        %1627 = vmatpush.bf16.msra.mxu0 %v1324
        %1628 = vmatpush.bf16.msra.mxu0 %v1316
        %1629 = vmatmul.bf16.gmra.mxu0 %v735
        %v1630 = vpop.f32.mrf.mxu0
        %v1631 = vadd.f32 %v1618, %v1630
        %v1632 = vpop.f32.mrf.mxu0
        %1633 = vdwg.mxu0
        %1634 = vmatpush.bf16.msra.mxu0 %v1309
        %1635 = vmatpush.bf16.msra.mxu0 %v1301
        %1636 = vmatpush.bf16.msra.mxu0 %v1293
        %1637 = vmatpush.bf16.msra.mxu0 %v1285
        %1638 = vmatpush.bf16.msra.mxu0 %v1277
        %1639 = vmatpush.bf16.msra.mxu0 %v1269
        %1640 = vmatpush.bf16.msra.mxu0 %v1261
        %1641 = vmatpush.bf16.msra.mxu0 %v1253
        %1642 = vmatmul.bf16.gmra.mxu0 %v734
        %v1643 = vpop.f32.mrf.mxu0
        %v1644 = vadd.f32 0.0, %v1643
        %v1645 = vpop.f32.mrf.mxu0
        %1646 = vdwg.mxu0
        %1647 = vmatpush.bf16.msra.mxu0 %v1373
        %1648 = vmatpush.bf16.msra.mxu0 %v1365
        %1649 = vmatpush.bf16.msra.mxu0 %v1357
        %1650 = vmatpush.bf16.msra.mxu0 %v1349
        %1651 = vmatpush.bf16.msra.mxu0 %v1341
        %1652 = vmatpush.bf16.msra.mxu0 %v1333
        %1653 = vmatpush.bf16.msra.mxu0 %v1325
        %1654 = vmatpush.bf16.msra.mxu0 %v1317
        %1655 = vmatmul.bf16.gmra.mxu0 %v735
        %v1656 = vpop.f32.mrf.mxu0
        %v1657 = vadd.f32 %v1644, %v1656
        %v1658 = vpop.f32.mrf.mxu0
        %1659 = vdwg.mxu0
        %1660 = vmatpush.bf16.msra.mxu0 %v1310
        %1661 = vmatpush.bf16.msra.mxu0 %v1302
        %1662 = vmatpush.bf16.msra.mxu0 %v1294
        %1663 = vmatpush.bf16.msra.mxu0 %v1286
        %1664 = vmatpush.bf16.msra.mxu0 %v1278
        %1665 = vmatpush.bf16.msra.mxu0 %v1270
        %1666 = vmatpush.bf16.msra.mxu0 %v1262
        %1667 = vmatpush.bf16.msra.mxu0 %v1254
        %1668 = vmatmul.bf16.gmra.mxu0 %v734
        %v1669 = vpop.f32.mrf.mxu0
        %v1670 = vadd.f32 0.0, %v1669
        %v1671 = vpop.f32.mrf.mxu0
        %1672 = vdwg.mxu0
        %1673 = vmatpush.bf16.msra.mxu0 %v1374
        %1674 = vmatpush.bf16.msra.mxu0 %v1366
        %1675 = vmatpush.bf16.msra.mxu0 %v1358
        %1676 = vmatpush.bf16.msra.mxu0 %v1350
        %1677 = vmatpush.bf16.msra.mxu0 %v1342
        %1678 = vmatpush.bf16.msra.mxu0 %v1334
        %1679 = vmatpush.bf16.msra.mxu0 %v1326
        %1680 = vmatpush.bf16.msra.mxu0 %v1318
        %1681 = vmatmul.bf16.gmra.mxu0 %v735
        %v1682 = vpop.f32.mrf.mxu0
        %v1683 = vadd.f32 %v1670, %v1682
        %v1684 = vpop.f32.mrf.mxu0
        %1685 = vdwg.mxu0
        %1686 = vmatpush.bf16.msra.mxu0 %v1311
        %1687 = vmatpush.bf16.msra.mxu0 %v1303
        %1688 = vmatpush.bf16.msra.mxu0 %v1295
        %1689 = vmatpush.bf16.msra.mxu0 %v1287
        %1690 = vmatpush.bf16.msra.mxu0 %v1279
        %1691 = vmatpush.bf16.msra.mxu0 %v1271
        %1692 = vmatpush.bf16.msra.mxu0 %v1263
        %1693 = vmatpush.bf16.msra.mxu0 %v1255
        %1694 = vmatmul.bf16.gmra.mxu0 %v734
        %v1695 = vpop.f32.mrf.mxu0
        %v1696 = vadd.f32 0.0, %v1695
        %v1697 = vpop.f32.mrf.mxu0
        %1698 = vdwg.mxu0
        %1699 = vmatpush.bf16.msra.mxu0 %v1375
        %1700 = vmatpush.bf16.msra.mxu0 %v1367
        %1701 = vmatpush.bf16.msra.mxu0 %v1359
        %1702 = vmatpush.bf16.msra.mxu0 %v1351
        %1703 = vmatpush.bf16.msra.mxu0 %v1343
        %1704 = vmatpush.bf16.msra.mxu0 %v1335
        %1705 = vmatpush.bf16.msra.mxu0 %v1327
        %1706 = vmatpush.bf16.msra.mxu0 %v1319
        %1707 = vmatmul.bf16.gmra.mxu0 %v735
        %v1708 = vpop.f32.mrf.mxu0
        %v1709 = vadd.f32 %v1696, %v1708
        %v1710 = vpop.f32.mrf.mxu0
        %1711 = vdwg.mxu0
        %v1712 = vadd.f32 %v726, %v1527
        %v1713 = vadd.f32 %v727, %v1553
        %v1714 = vadd.f32 %v728, %v1579
        %v1715 = vadd.f32 %v729, %v1605
        %v1716 = vadd.f32 %v730, %v1631
        %v1717 = vadd.f32 %v731, %v1657
        %v1718 = vadd.f32 %v732, %v1683
        %v1719 = vadd.f32 %v733, %v1709
        %1720 = vst [vmem:[#allocation2] sm:$0xff] %v1712
        %1721 = vst [vmem:[#allocation2 + $0x8] sm:$0xff] %v1713
        %1722 = vst [vmem:[#allocation2 + $0x10] sm:$0xff] %v1714
        %1723 = vst [vmem:[#allocation2 + $0x18] sm:$0xff] %v1715
        %1724 = vst [vmem:[#allocation2 + $0x20] sm:$0xff] %v1716
        %1725 = vst [vmem:[#allocation2 + $0x28] sm:$0xff] %v1717
        %1726 = vst [vmem:[#allocation2 + $0x30] sm:$0xff] %v1718
        %1727 = vst [vmem:[#allocation2 + $0x38] sm:$0xff] %v1719
        %p1728 = scmp.eq.s32.totalorder %s35, 3
        // Predicated region
        $region113: #{tpu_custom_call.1} parent=63 // pred_check
          %p1729 = pneg %p1728
        $region114: #{tpu_custom_call.1} parent=63 // pred_check_branch
          %1731 = sbr.rel (%p1729) target = $region116
        $region115: #{tpu_custom_call.1} parent=63 // pred_region
          %v1732 = vld [vmem:[#allocation2] sm:$0xff]
          %v1733 = vld [vmem:[#allocation2 + $0x8] sm:$0xff]
          %v1734 = vld [vmem:[#allocation2 + $0x10] sm:$0xff]
          %v1735 = vld [vmem:[#allocation2 + $0x18] sm:$0xff]
          %v1736 = vld [vmem:[#allocation2 + $0x20] sm:$0xff]
          %v1737 = vld [vmem:[#allocation2 + $0x28] sm:$0xff]
          %v1738 = vld [vmem:[#allocation2 + $0x30] sm:$0xff]
          %v1739 = vld [vmem:[#allocation2 + $0x38] sm:$0xff]
          %v1740 = vld [vmem:[#allocation11] sm:$0xff]
          %v1742 = vperm.slane %v1740, 0
          %v1743 = vperm.slane %v1740, 1
          %v1744 = vperm.slane %v1740, 2
          %v1745 = vperm.slane %v1740, 3
          %v1746 = vperm.slane %v1740, 4
          %v1747 = vperm.slane %v1740, 5
          %v1748 = vperm.slane %v1740, 6
          %v1749 = vperm.slane %v1740, 7
          %v1758 = vadd.f32 %v1732, %v1742
          %v1759 = vadd.f32 %v1733, %v1743
          %v1760 = vadd.f32 %v1734, %v1744
          %v1761 = vadd.f32 %v1735, %v1745
          %v1762 = vadd.f32 %v1736, %v1746
          %v1763 = vadd.f32 %v1737, %v1747
          %v1764 = vadd.f32 %v1738, %v1748
          %v1765 = vadd.f32 %v1739, %v1749
          %v1766 = vmax.f32 %v1758, 0.0
          %v1767 = vmax.f32 %v1759, 0.0
          %v1768 = vmax.f32 %v1760, 0.0
          %v1769 = vmax.f32 %v1761, 0.0
          %v1770 = vmax.f32 %v1762, 0.0
          %v1771 = vmax.f32 %v1763, 0.0
          %v1772 = vmax.f32 %v1764, 0.0
          %v1773 = vmax.f32 %v1765, 0.0
          %v1774 = vpack.c.bf16 %v1766, %v1766
          %v1775 = vpack.c.bf16 %v1767, %v1767
          %v1776 = vpack.c.bf16 %v1768, %v1768
          %v1777 = vpack.c.bf16 %v1769, %v1769
          %v1778 = vpack.c.bf16 %v1770, %v1770
          %v1779 = vpack.c.bf16 %v1771, %v1771
          %v1780 = vpack.c.bf16 %v1772, %v1772
          %v1781 = vpack.c.bf16 %v1773, %v1773
          %v1782 = vld [vmem:[#allocation12] sm:$0xff]
          %v1783 = vld [vmem:[#allocation12 + $0x8] sm:$0xff]
          %v1784 = vld [vmem:[#allocation12 + $0x10] sm:$0xff]
          %v1785 = vld [vmem:[#allocation12 + $0x18] sm:$0xff]
          %v1786 = vld [vmem:[#allocation12 + $0x20] sm:$0xff]
          %v1787 = vld [vmem:[#allocation12 + $0x28] sm:$0xff]
          %v1788 = vld [vmem:[#allocation12 + $0x30] sm:$0xff]
          %v1789 = vld [vmem:[#allocation12 + $0x38] sm:$0xff]
          %v1790 = vld [vmem:[#allocation12 + $0x40] sm:$0xff]
          %v1791 = vld [vmem:[#allocation12 + $0x48] sm:$0xff]
          %v1792 = vld [vmem:[#allocation12 + $0x50] sm:$0xff]
          %v1793 = vld [vmem:[#allocation12 + $0x58] sm:$0xff]
          %v1794 = vld [vmem:[#allocation12 + $0x60] sm:$0xff]
          %v1795 = vld [vmem:[#allocation12 + $0x68] sm:$0xff]
          %v1796 = vld [vmem:[#allocation12 + $0x70] sm:$0xff]
          %v1797 = vld [vmem:[#allocation12 + $0x78] sm:$0xff]
          %v1798 = vld [vmem:[#allocation12 + $0x80] sm:$0xff]
          %v1799 = vld [vmem:[#allocation12 + $0x88] sm:$0xff]
          %v1800 = vld [vmem:[#allocation12 + $0x90] sm:$0xff]
          %v1801 = vld [vmem:[#allocation12 + $0x98] sm:$0xff]
          %v1802 = vld [vmem:[#allocation12 + $0xa0] sm:$0xff]
          %v1803 = vld [vmem:[#allocation12 + $0xa8] sm:$0xff]
          %v1804 = vld [vmem:[#allocation12 + $0xb0] sm:$0xff]
          %v1805 = vld [vmem:[#allocation12 + $0xb8] sm:$0xff]
          %v1806 = vld [vmem:[#allocation12 + $0xc0] sm:$0xff]
          %v1807 = vld [vmem:[#allocation12 + $0xc8] sm:$0xff]
          %v1808 = vld [vmem:[#allocation12 + $0xd0] sm:$0xff]
          %v1809 = vld [vmem:[#allocation12 + $0xd8] sm:$0xff]
          %v1810 = vld [vmem:[#allocation12 + $0xe0] sm:$0xff]
          %v1811 = vld [vmem:[#allocation12 + $0xe8] sm:$0xff]
          %v1812 = vld [vmem:[#allocation12 + $0xf0] sm:$0xff]
          %v1813 = vld [vmem:[#allocation12 + $0xf8] sm:$0xff]
          %v1814 = vld [vmem:[#allocation12 + $0x100] sm:$0xff]
          %v1815 = vld [vmem:[#allocation12 + $0x108] sm:$0xff]
          %v1816 = vld [vmem:[#allocation12 + $0x110] sm:$0xff]
          %v1817 = vld [vmem:[#allocation12 + $0x118] sm:$0xff]
          %v1818 = vld [vmem:[#allocation12 + $0x120] sm:$0xff]
          %v1819 = vld [vmem:[#allocation12 + $0x128] sm:$0xff]
          %v1820 = vld [vmem:[#allocation12 + $0x130] sm:$0xff]
          %v1821 = vld [vmem:[#allocation12 + $0x138] sm:$0xff]
          %v1822 = vld [vmem:[#allocation12 + $0x140] sm:$0xff]
          %v1823 = vld [vmem:[#allocation12 + $0x148] sm:$0xff]
          %v1824 = vld [vmem:[#allocation12 + $0x150] sm:$0xff]
          %v1825 = vld [vmem:[#allocation12 + $0x158] sm:$0xff]
          %v1826 = vld [vmem:[#allocation12 + $0x160] sm:$0xff]
          %v1827 = vld [vmem:[#allocation12 + $0x168] sm:$0xff]
          %v1828 = vld [vmem:[#allocation12 + $0x170] sm:$0xff]
          %v1829 = vld [vmem:[#allocation12 + $0x178] sm:$0xff]
          %v1830 = vld [vmem:[#allocation12 + $0x180] sm:$0xff]
          %v1831 = vld [vmem:[#allocation12 + $0x188] sm:$0xff]
          %v1832 = vld [vmem:[#allocation12 + $0x190] sm:$0xff]
          %v1833 = vld [vmem:[#allocation12 + $0x198] sm:$0xff]
          %v1834 = vld [vmem:[#allocation12 + $0x1a0] sm:$0xff]
          %v1835 = vld [vmem:[#allocation12 + $0x1a8] sm:$0xff]
          %v1836 = vld [vmem:[#allocation12 + $0x1b0] sm:$0xff]
          %v1837 = vld [vmem:[#allocation12 + $0x1b8] sm:$0xff]
          %v1838 = vld [vmem:[#allocation12 + $0x1c0] sm:$0xff]
          %v1839 = vld [vmem:[#allocation12 + $0x1c8] sm:$0xff]
          %v1840 = vld [vmem:[#allocation12 + $0x1d0] sm:$0xff]
          %v1841 = vld [vmem:[#allocation12 + $0x1d8] sm:$0xff]
          %v1842 = vld [vmem:[#allocation12 + $0x1e0] sm:$0xff]
          %v1843 = vld [vmem:[#allocation12 + $0x1e8] sm:$0xff]
          %v1844 = vld [vmem:[#allocation12 + $0x1f0] sm:$0xff]
          %v1845 = vld [vmem:[#allocation12 + $0x1f8] sm:$0xff]
          %v1846 = vld [vmem:[#allocation12 + $0x200] sm:$0xff]
          %v1847 = vld [vmem:[#allocation12 + $0x208] sm:$0xff]
          %v1848 = vld [vmem:[#allocation12 + $0x210] sm:$0xff]
          %v1849 = vld [vmem:[#allocation12 + $0x218] sm:$0xff]
          %v1850 = vld [vmem:[#allocation12 + $0x220] sm:$0xff]
          %v1851 = vld [vmem:[#allocation12 + $0x228] sm:$0xff]
          %v1852 = vld [vmem:[#allocation12 + $0x230] sm:$0xff]
          %v1853 = vld [vmem:[#allocation12 + $0x238] sm:$0xff]
          %v1854 = vld [vmem:[#allocation12 + $0x240] sm:$0xff]
          %v1855 = vld [vmem:[#allocation12 + $0x248] sm:$0xff]
          %v1856 = vld [vmem:[#allocation12 + $0x250] sm:$0xff]
          %v1857 = vld [vmem:[#allocation12 + $0x258] sm:$0xff]
          %v1858 = vld [vmem:[#allocation12 + $0x260] sm:$0xff]
          %v1859 = vld [vmem:[#allocation12 + $0x268] sm:$0xff]
          %v1860 = vld [vmem:[#allocation12 + $0x270] sm:$0xff]
          %v1861 = vld [vmem:[#allocation12 + $0x278] sm:$0xff]
          %v1862 = vld [vmem:[#allocation12 + $0x280] sm:$0xff]
          %v1863 = vld [vmem:[#allocation12 + $0x288] sm:$0xff]
          %v1864 = vld [vmem:[#allocation12 + $0x290] sm:$0xff]
          %v1865 = vld [vmem:[#allocation12 + $0x298] sm:$0xff]
          %v1866 = vld [vmem:[#allocation12 + $0x2a0] sm:$0xff]
          %v1867 = vld [vmem:[#allocation12 + $0x2a8] sm:$0xff]
          %v1868 = vld [vmem:[#allocation12 + $0x2b0] sm:$0xff]
          %v1869 = vld [vmem:[#allocation12 + $0x2b8] sm:$0xff]
          %v1870 = vld [vmem:[#allocation12 + $0x2c0] sm:$0xff]
          %v1871 = vld [vmem:[#allocation12 + $0x2c8] sm:$0xff]
          %v1872 = vld [vmem:[#allocation12 + $0x2d0] sm:$0xff]
          %v1873 = vld [vmem:[#allocation12 + $0x2d8] sm:$0xff]
          %v1874 = vld [vmem:[#allocation12 + $0x2e0] sm:$0xff]
          %v1875 = vld [vmem:[#allocation12 + $0x2e8] sm:$0xff]
          %v1876 = vld [vmem:[#allocation12 + $0x2f0] sm:$0xff]
          %v1877 = vld [vmem:[#allocation12 + $0x2f8] sm:$0xff]
          %v1878 = vld [vmem:[#allocation12 + $0x300] sm:$0xff]
          %v1879 = vld [vmem:[#allocation12 + $0x308] sm:$0xff]
          %v1880 = vld [vmem:[#allocation12 + $0x310] sm:$0xff]
          %v1881 = vld [vmem:[#allocation12 + $0x318] sm:$0xff]
          %v1882 = vld [vmem:[#allocation12 + $0x320] sm:$0xff]
          %v1883 = vld [vmem:[#allocation12 + $0x328] sm:$0xff]
          %v1884 = vld [vmem:[#allocation12 + $0x330] sm:$0xff]
          %v1885 = vld [vmem:[#allocation12 + $0x338] sm:$0xff]
          %v1886 = vld [vmem:[#allocation12 + $0x340] sm:$0xff]
          %v1887 = vld [vmem:[#allocation12 + $0x348] sm:$0xff]
          %v1888 = vld [vmem:[#allocation12 + $0x350] sm:$0xff]
          %v1889 = vld [vmem:[#allocation12 + $0x358] sm:$0xff]
          %v1890 = vld [vmem:[#allocation12 + $0x360] sm:$0xff]
          %v1891 = vld [vmem:[#allocation12 + $0x368] sm:$0xff]
          %v1892 = vld [vmem:[#allocation12 + $0x370] sm:$0xff]
          %v1893 = vld [vmem:[#allocation12 + $0x378] sm:$0xff]
          %v1894 = vld [vmem:[#allocation12 + $0x380] sm:$0xff]
          %v1895 = vld [vmem:[#allocation12 + $0x388] sm:$0xff]
          %v1896 = vld [vmem:[#allocation12 + $0x390] sm:$0xff]
          %v1897 = vld [vmem:[#allocation12 + $0x398] sm:$0xff]
          %v1898 = vld [vmem:[#allocation12 + $0x3a0] sm:$0xff]
          %v1899 = vld [vmem:[#allocation12 + $0x3a8] sm:$0xff]
          %v1900 = vld [vmem:[#allocation12 + $0x3b0] sm:$0xff]
          %v1901 = vld [vmem:[#allocation12 + $0x3b8] sm:$0xff]
          %v1902 = vld [vmem:[#allocation12 + $0x3c0] sm:$0xff]
          %v1903 = vld [vmem:[#allocation12 + $0x3c8] sm:$0xff]
          %v1904 = vld [vmem:[#allocation12 + $0x3d0] sm:$0xff]
          %v1905 = vld [vmem:[#allocation12 + $0x3d8] sm:$0xff]
          %v1906 = vld [vmem:[#allocation12 + $0x3e0] sm:$0xff]
          %v1907 = vld [vmem:[#allocation12 + $0x3e8] sm:$0xff]
          %v1908 = vld [vmem:[#allocation12 + $0x3f0] sm:$0xff]
          %v1909 = vld [vmem:[#allocation12 + $0x3f8] sm:$0xff]
          %v1910 = vld [vmem:[#allocation12 + $0x400] sm:$0xff]
          %v1911 = vld [vmem:[#allocation12 + $0x408] sm:$0xff]
          %v1912 = vld [vmem:[#allocation12 + $0x410] sm:$0xff]
          %v1913 = vld [vmem:[#allocation12 + $0x418] sm:$0xff]
          %v1914 = vld [vmem:[#allocation12 + $0x420] sm:$0xff]
          %v1915 = vld [vmem:[#allocation12 + $0x428] sm:$0xff]
          %v1916 = vld [vmem:[#allocation12 + $0x430] sm:$0xff]
          %v1917 = vld [vmem:[#allocation12 + $0x438] sm:$0xff]
          %v1918 = vld [vmem:[#allocation12 + $0x440] sm:$0xff]
          %v1919 = vld [vmem:[#allocation12 + $0x448] sm:$0xff]
          %v1920 = vld [vmem:[#allocation12 + $0x450] sm:$0xff]
          %v1921 = vld [vmem:[#allocation12 + $0x458] sm:$0xff]
          %v1922 = vld [vmem:[#allocation12 + $0x460] sm:$0xff]
          %v1923 = vld [vmem:[#allocation12 + $0x468] sm:$0xff]
          %v1924 = vld [vmem:[#allocation12 + $0x470] sm:$0xff]
          %v1925 = vld [vmem:[#allocation12 + $0x478] sm:$0xff]
          %v1926 = vld [vmem:[#allocation12 + $0x480] sm:$0xff]
          %v1927 = vld [vmem:[#allocation12 + $0x488] sm:$0xff]
          %v1928 = vld [vmem:[#allocation12 + $0x490] sm:$0xff]
          %v1929 = vld [vmem:[#allocation12 + $0x498] sm:$0xff]
          %v1930 = vld [vmem:[#allocation12 + $0x4a0] sm:$0xff]
          %v1931 = vld [vmem:[#allocation12 + $0x4a8] sm:$0xff]
          %v1932 = vld [vmem:[#allocation12 + $0x4b0] sm:$0xff]
          %v1933 = vld [vmem:[#allocation12 + $0x4b8] sm:$0xff]
          %v1934 = vld [vmem:[#allocation12 + $0x4c0] sm:$0xff]
          %v1935 = vld [vmem:[#allocation12 + $0x4c8] sm:$0xff]
          %v1936 = vld [vmem:[#allocation12 + $0x4d0] sm:$0xff]
          %v1937 = vld [vmem:[#allocation12 + $0x4d8] sm:$0xff]
          %v1938 = vld [vmem:[#allocation12 + $0x4e0] sm:$0xff]
          %v1939 = vld [vmem:[#allocation12 + $0x4e8] sm:$0xff]
          %v1940 = vld [vmem:[#allocation12 + $0x4f0] sm:$0xff]
          %v1941 = vld [vmem:[#allocation12 + $0x4f8] sm:$0xff]
          %v1942 = vld [vmem:[#allocation12 + $0x500] sm:$0xff]
          %v1943 = vld [vmem:[#allocation12 + $0x508] sm:$0xff]
          %v1944 = vld [vmem:[#allocation12 + $0x510] sm:$0xff]
          %v1945 = vld [vmem:[#allocation12 + $0x518] sm:$0xff]
          %v1946 = vld [vmem:[#allocation12 + $0x520] sm:$0xff]
          %v1947 = vld [vmem:[#allocation12 + $0x528] sm:$0xff]
          %v1948 = vld [vmem:[#allocation12 + $0x530] sm:$0xff]
          %v1949 = vld [vmem:[#allocation12 + $0x538] sm:$0xff]
          %v1950 = vld [vmem:[#allocation12 + $0x540] sm:$0xff]
          %v1951 = vld [vmem:[#allocation12 + $0x548] sm:$0xff]
          %v1952 = vld [vmem:[#allocation12 + $0x550] sm:$0xff]
          %v1953 = vld [vmem:[#allocation12 + $0x558] sm:$0xff]
          %v1954 = vld [vmem:[#allocation12 + $0x560] sm:$0xff]
          %v1955 = vld [vmem:[#allocation12 + $0x568] sm:$0xff]
          %v1956 = vld [vmem:[#allocation12 + $0x570] sm:$0xff]
          %v1957 = vld [vmem:[#allocation12 + $0x578] sm:$0xff]
          %v1958 = vld [vmem:[#allocation12 + $0x580] sm:$0xff]
          %v1959 = vld [vmem:[#allocation12 + $0x588] sm:$0xff]
          %v1960 = vld [vmem:[#allocation12 + $0x590] sm:$0xff]
          %v1961 = vld [vmem:[#allocation12 + $0x598] sm:$0xff]
          %v1962 = vld [vmem:[#allocation12 + $0x5a0] sm:$0xff]
          %v1963 = vld [vmem:[#allocation12 + $0x5a8] sm:$0xff]
          %v1964 = vld [vmem:[#allocation12 + $0x5b0] sm:$0xff]
          %v1965 = vld [vmem:[#allocation12 + $0x5b8] sm:$0xff]
          %v1966 = vld [vmem:[#allocation12 + $0x5c0] sm:$0xff]
          %v1967 = vld [vmem:[#allocation12 + $0x5c8] sm:$0xff]
          %v1968 = vld [vmem:[#allocation12 + $0x5d0] sm:$0xff]
          %v1969 = vld [vmem:[#allocation12 + $0x5d8] sm:$0xff]
          %v1970 = vld [vmem:[#allocation12 + $0x5e0] sm:$0xff]
          %v1971 = vld [vmem:[#allocation12 + $0x5e8] sm:$0xff]
          %v1972 = vld [vmem:[#allocation12 + $0x5f0] sm:$0xff]
          %v1973 = vld [vmem:[#allocation12 + $0x5f8] sm:$0xff]
          %v1974 = vld [vmem:[#allocation12 + $0x600] sm:$0xff]
          %v1975 = vld [vmem:[#allocation12 + $0x608] sm:$0xff]
          %v1976 = vld [vmem:[#allocation12 + $0x610] sm:$0xff]
          %v1977 = vld [vmem:[#allocation12 + $0x618] sm:$0xff]
          %v1978 = vld [vmem:[#allocation12 + $0x620] sm:$0xff]
          %v1979 = vld [vmem:[#allocation12 + $0x628] sm:$0xff]
          %v1980 = vld [vmem:[#allocation12 + $0x630] sm:$0xff]
          %v1981 = vld [vmem:[#allocation12 + $0x638] sm:$0xff]
          %v1982 = vld [vmem:[#allocation12 + $0x640] sm:$0xff]
          %v1983 = vld [vmem:[#allocation12 + $0x648] sm:$0xff]
          %v1984 = vld [vmem:[#allocation12 + $0x650] sm:$0xff]
          %v1985 = vld [vmem:[#allocation12 + $0x658] sm:$0xff]
          %v1986 = vld [vmem:[#allocation12 + $0x660] sm:$0xff]
          %v1987 = vld [vmem:[#allocation12 + $0x668] sm:$0xff]
          %v1988 = vld [vmem:[#allocation12 + $0x670] sm:$0xff]
          %v1989 = vld [vmem:[#allocation12 + $0x678] sm:$0xff]
          %v1990 = vld [vmem:[#allocation12 + $0x680] sm:$0xff]
          %v1991 = vld [vmem:[#allocation12 + $0x688] sm:$0xff]
          %v1992 = vld [vmem:[#allocation12 + $0x690] sm:$0xff]
          %v1993 = vld [vmem:[#allocation12 + $0x698] sm:$0xff]
          %v1994 = vld [vmem:[#allocation12 + $0x6a0] sm:$0xff]
          %v1995 = vld [vmem:[#allocation12 + $0x6a8] sm:$0xff]
          %v1996 = vld [vmem:[#allocation12 + $0x6b0] sm:$0xff]
          %v1997 = vld [vmem:[#allocation12 + $0x6b8] sm:$0xff]
          %v1998 = vld [vmem:[#allocation12 + $0x6c0] sm:$0xff]
          %v1999 = vld [vmem:[#allocation12 + $0x6c8] sm:$0xff]
          %v2000 = vld [vmem:[#allocation12 + $0x6d0] sm:$0xff]
          %v2001 = vld [vmem:[#allocation12 + $0x6d8] sm:$0xff]
          %v2002 = vld [vmem:[#allocation12 + $0x6e0] sm:$0xff]
          %v2003 = vld [vmem:[#allocation12 + $0x6e8] sm:$0xff]
          %v2004 = vld [vmem:[#allocation12 + $0x6f0] sm:$0xff]
          %v2005 = vld [vmem:[#allocation12 + $0x6f8] sm:$0xff]
          %v2006 = vld [vmem:[#allocation12 + $0x700] sm:$0xff]
          %v2007 = vld [vmem:[#allocation12 + $0x708] sm:$0xff]
          %v2008 = vld [vmem:[#allocation12 + $0x710] sm:$0xff]
          %v2009 = vld [vmem:[#allocation12 + $0x718] sm:$0xff]
          %v2010 = vld [vmem:[#allocation12 + $0x720] sm:$0xff]
          %v2011 = vld [vmem:[#allocation12 + $0x728] sm:$0xff]
          %v2012 = vld [vmem:[#allocation12 + $0x730] sm:$0xff]
          %v2013 = vld [vmem:[#allocation12 + $0x738] sm:$0xff]
          %v2014 = vld [vmem:[#allocation12 + $0x740] sm:$0xff]
          %v2015 = vld [vmem:[#allocation12 + $0x748] sm:$0xff]
          %v2016 = vld [vmem:[#allocation12 + $0x750] sm:$0xff]
          %v2017 = vld [vmem:[#allocation12 + $0x758] sm:$0xff]
          %v2018 = vld [vmem:[#allocation12 + $0x760] sm:$0xff]
          %v2019 = vld [vmem:[#allocation12 + $0x768] sm:$0xff]
          %v2020 = vld [vmem:[#allocation12 + $0x770] sm:$0xff]
          %v2021 = vld [vmem:[#allocation12 + $0x778] sm:$0xff]
          %v2022 = vld [vmem:[#allocation12 + $0x780] sm:$0xff]
          %v2023 = vld [vmem:[#allocation12 + $0x788] sm:$0xff]
          %v2024 = vld [vmem:[#allocation12 + $0x790] sm:$0xff]
          %v2025 = vld [vmem:[#allocation12 + $0x798] sm:$0xff]
          %v2026 = vld [vmem:[#allocation12 + $0x7a0] sm:$0xff]
          %v2027 = vld [vmem:[#allocation12 + $0x7a8] sm:$0xff]
          %v2028 = vld [vmem:[#allocation12 + $0x7b0] sm:$0xff]
          %v2029 = vld [vmem:[#allocation12 + $0x7b8] sm:$0xff]
          %v2030 = vld [vmem:[#allocation12 + $0x7c0] sm:$0xff]
          %v2031 = vld [vmem:[#allocation12 + $0x7c8] sm:$0xff]
          %v2032 = vld [vmem:[#allocation12 + $0x7d0] sm:$0xff]
          %v2033 = vld [vmem:[#allocation12 + $0x7d8] sm:$0xff]
          %v2034 = vld [vmem:[#allocation12 + $0x7e0] sm:$0xff]
          %v2035 = vld [vmem:[#allocation12 + $0x7e8] sm:$0xff]
          %v2036 = vld [vmem:[#allocation12 + $0x7f0] sm:$0xff]
          %v2037 = vld [vmem:[#allocation12 + $0x7f8] sm:$0xff]
          %v2038 = vld [vmem:[#allocation14] sm:$0xf]
          %v2040 = vperm.slane %v2038, 0
          %v2041 = vperm.slane %v2038, 1
          %v2042 = vperm.slane %v2038, 2
          %v2043 = vperm.slane %v2038, 3
          %v2304 = vunpack.c.l.b16 %v1782
          %v2305 = vunpack.c.h.b16 %v1782
          %v2306 = vunpack.c.l.b16 %v1783
          %v2307 = vunpack.c.h.b16 %v1783
          %v2308 = vunpack.c.l.b16 %v1784
          %v2309 = vunpack.c.h.b16 %v1784
          %v2310 = vunpack.c.l.b16 %v1785
          %v2311 = vunpack.c.h.b16 %v1785
          %v2312 = vunpack.c.l.b16 %v1786
          %v2313 = vunpack.c.h.b16 %v1786
          %v2314 = vunpack.c.l.b16 %v1787
          %v2315 = vunpack.c.h.b16 %v1787
          %v2316 = vunpack.c.l.b16 %v1788
          %v2317 = vunpack.c.h.b16 %v1788
          %v2318 = vunpack.c.l.b16 %v1789
          %v2319 = vunpack.c.h.b16 %v1789
          %v2320 = vunpack.c.l.b16 %v1790
          %v2321 = vunpack.c.h.b16 %v1790
          %v2322 = vunpack.c.l.b16 %v1791
          %v2323 = vunpack.c.h.b16 %v1791
          %v2324 = vunpack.c.l.b16 %v1792
          %v2325 = vunpack.c.h.b16 %v1792
          %v2326 = vunpack.c.l.b16 %v1793
          %v2327 = vunpack.c.h.b16 %v1793
          %v2328 = vunpack.c.l.b16 %v1794
          %v2329 = vunpack.c.h.b16 %v1794
          %v2330 = vunpack.c.l.b16 %v1795
          %v2331 = vunpack.c.h.b16 %v1795
          %v2332 = vunpack.c.l.b16 %v1796
          %v2333 = vunpack.c.h.b16 %v1796
          %v2334 = vunpack.c.l.b16 %v1797
          %v2335 = vunpack.c.h.b16 %v1797
          %v2336 = vunpack.c.l.b16 %v1798
          %v2337 = vunpack.c.h.b16 %v1798
          %v2338 = vunpack.c.l.b16 %v1799
          %v2339 = vunpack.c.h.b16 %v1799
          %v2340 = vunpack.c.l.b16 %v1800
          %v2341 = vunpack.c.h.b16 %v1800
          %v2342 = vunpack.c.l.b16 %v1801
          %v2343 = vunpack.c.h.b16 %v1801
          %v2344 = vunpack.c.l.b16 %v1802
          %v2345 = vunpack.c.h.b16 %v1802
          %v2346 = vunpack.c.l.b16 %v1803
          %v2347 = vunpack.c.h.b16 %v1803
          %v2348 = vunpack.c.l.b16 %v1804
          %v2349 = vunpack.c.h.b16 %v1804
          %v2350 = vunpack.c.l.b16 %v1805
          %v2351 = vunpack.c.h.b16 %v1805
          %v2352 = vunpack.c.l.b16 %v1806
          %v2353 = vunpack.c.h.b16 %v1806
          %v2354 = vunpack.c.l.b16 %v1807
          %v2355 = vunpack.c.h.b16 %v1807
          %v2356 = vunpack.c.l.b16 %v1808
          %v2357 = vunpack.c.h.b16 %v1808
          %v2358 = vunpack.c.l.b16 %v1809
          %v2359 = vunpack.c.h.b16 %v1809
          %v2360 = vunpack.c.l.b16 %v1810
          %v2361 = vunpack.c.h.b16 %v1810
          %v2362 = vunpack.c.l.b16 %v1811
          %v2363 = vunpack.c.h.b16 %v1811
          %v2364 = vunpack.c.l.b16 %v1812
          %v2365 = vunpack.c.h.b16 %v1812
          %v2366 = vunpack.c.l.b16 %v1813
          %v2367 = vunpack.c.h.b16 %v1813
          %v2368 = vunpack.c.l.b16 %v1814
          %v2369 = vunpack.c.h.b16 %v1814
          %v2370 = vunpack.c.l.b16 %v1815
          %v2371 = vunpack.c.h.b16 %v1815
          %v2372 = vunpack.c.l.b16 %v1816
          %v2373 = vunpack.c.h.b16 %v1816
          %v2374 = vunpack.c.l.b16 %v1817
          %v2375 = vunpack.c.h.b16 %v1817
          %v2376 = vunpack.c.l.b16 %v1818
          %v2377 = vunpack.c.h.b16 %v1818
          %v2378 = vunpack.c.l.b16 %v1819
          %v2379 = vunpack.c.h.b16 %v1819
          %v2380 = vunpack.c.l.b16 %v1820
          %v2381 = vunpack.c.h.b16 %v1820
          %v2382 = vunpack.c.l.b16 %v1821
          %v2383 = vunpack.c.h.b16 %v1821
          %v2384 = vunpack.c.l.b16 %v1822
          %v2385 = vunpack.c.h.b16 %v1822
          %v2386 = vunpack.c.l.b16 %v1823
          %v2387 = vunpack.c.h.b16 %v1823
          %v2388 = vunpack.c.l.b16 %v1824
          %v2389 = vunpack.c.h.b16 %v1824
          %v2390 = vunpack.c.l.b16 %v1825
          %v2391 = vunpack.c.h.b16 %v1825
          %v2392 = vunpack.c.l.b16 %v1826
          %v2393 = vunpack.c.h.b16 %v1826
          %v2394 = vunpack.c.l.b16 %v1827
          %v2395 = vunpack.c.h.b16 %v1827
          %v2396 = vunpack.c.l.b16 %v1828
          %v2397 = vunpack.c.h.b16 %v1828
          %v2398 = vunpack.c.l.b16 %v1829
          %v2399 = vunpack.c.h.b16 %v1829
          %v2400 = vunpack.c.l.b16 %v1830
          %v2401 = vunpack.c.h.b16 %v1830
          %v2402 = vunpack.c.l.b16 %v1831
          %v2403 = vunpack.c.h.b16 %v1831
          %v2404 = vunpack.c.l.b16 %v1832
          %v2405 = vunpack.c.h.b16 %v1832
          %v2406 = vunpack.c.l.b16 %v1833
          %v2407 = vunpack.c.h.b16 %v1833
          %v2408 = vunpack.c.l.b16 %v1834
          %v2409 = vunpack.c.h.b16 %v1834
          %v2410 = vunpack.c.l.b16 %v1835
          %v2411 = vunpack.c.h.b16 %v1835
          %v2412 = vunpack.c.l.b16 %v1836
          %v2413 = vunpack.c.h.b16 %v1836
          %v2414 = vunpack.c.l.b16 %v1837
          %v2415 = vunpack.c.h.b16 %v1837
          %v2416 = vunpack.c.l.b16 %v1838
          %v2417 = vunpack.c.h.b16 %v1838
          %v2418 = vunpack.c.l.b16 %v1839
          %v2419 = vunpack.c.h.b16 %v1839
          %v2420 = vunpack.c.l.b16 %v1840
          %v2421 = vunpack.c.h.b16 %v1840
          %v2422 = vunpack.c.l.b16 %v1841
          %v2423 = vunpack.c.h.b16 %v1841
          %v2424 = vunpack.c.l.b16 %v1842
          %v2425 = vunpack.c.h.b16 %v1842
          %v2426 = vunpack.c.l.b16 %v1843
          %v2427 = vunpack.c.h.b16 %v1843
          %v2428 = vunpack.c.l.b16 %v1844
          %v2429 = vunpack.c.h.b16 %v1844
          %v2430 = vunpack.c.l.b16 %v1845
          %v2431 = vunpack.c.h.b16 %v1845
          %v2432 = vunpack.c.l.b16 %v1846
          %v2433 = vunpack.c.h.b16 %v1846
          %v2434 = vunpack.c.l.b16 %v1847
          %v2435 = vunpack.c.h.b16 %v1847
          %v2436 = vunpack.c.l.b16 %v1848
          %v2437 = vunpack.c.h.b16 %v1848
          %v2438 = vunpack.c.l.b16 %v1849
          %v2439 = vunpack.c.h.b16 %v1849
          %v2440 = vunpack.c.l.b16 %v1850
          %v2441 = vunpack.c.h.b16 %v1850
          %v2442 = vunpack.c.l.b16 %v1851
          %v2443 = vunpack.c.h.b16 %v1851
          %v2444 = vunpack.c.l.b16 %v1852
          %v2445 = vunpack.c.h.b16 %v1852
          %v2446 = vunpack.c.l.b16 %v1853
          %v2447 = vunpack.c.h.b16 %v1853
          %v2448 = vunpack.c.l.b16 %v1854
          %v2449 = vunpack.c.h.b16 %v1854
          %v2450 = vunpack.c.l.b16 %v1855
          %v2451 = vunpack.c.h.b16 %v1855
          %v2452 = vunpack.c.l.b16 %v1856
          %v2453 = vunpack.c.h.b16 %v1856
          %v2454 = vunpack.c.l.b16 %v1857
          %v2455 = vunpack.c.h.b16 %v1857
          %v2456 = vunpack.c.l.b16 %v1858
          %v2457 = vunpack.c.h.b16 %v1858
          %v2458 = vunpack.c.l.b16 %v1859
          %v2459 = vunpack.c.h.b16 %v1859
          %v2460 = vunpack.c.l.b16 %v1860
          %v2461 = vunpack.c.h.b16 %v1860
          %v2462 = vunpack.c.l.b16 %v1861
          %v2463 = vunpack.c.h.b16 %v1861
          %v2464 = vunpack.c.l.b16 %v1862
          %v2465 = vunpack.c.h.b16 %v1862
          %v2466 = vunpack.c.l.b16 %v1863
          %v2467 = vunpack.c.h.b16 %v1863
          %v2468 = vunpack.c.l.b16 %v1864
          %v2469 = vunpack.c.h.b16 %v1864
          %v2470 = vunpack.c.l.b16 %v1865
          %v2471 = vunpack.c.h.b16 %v1865
          %v2472 = vunpack.c.l.b16 %v1866
          %v2473 = vunpack.c.h.b16 %v1866
          %v2474 = vunpack.c.l.b16 %v1867
          %v2475 = vunpack.c.h.b16 %v1867
          %v2476 = vunpack.c.l.b16 %v1868
          %v2477 = vunpack.c.h.b16 %v1868
          %v2478 = vunpack.c.l.b16 %v1869
          %v2479 = vunpack.c.h.b16 %v1869
          %v2480 = vunpack.c.l.b16 %v1870
          %v2481 = vunpack.c.h.b16 %v1870
          %v2482 = vunpack.c.l.b16 %v1871
          %v2483 = vunpack.c.h.b16 %v1871
          %v2484 = vunpack.c.l.b16 %v1872
          %v2485 = vunpack.c.h.b16 %v1872
          %v2486 = vunpack.c.l.b16 %v1873
          %v2487 = vunpack.c.h.b16 %v1873
          %v2488 = vunpack.c.l.b16 %v1874
          %v2489 = vunpack.c.h.b16 %v1874
          %v2490 = vunpack.c.l.b16 %v1875
          %v2491 = vunpack.c.h.b16 %v1875
          %v2492 = vunpack.c.l.b16 %v1876
          %v2493 = vunpack.c.h.b16 %v1876
          %v2494 = vunpack.c.l.b16 %v1877
          %v2495 = vunpack.c.h.b16 %v1877
          %v2496 = vunpack.c.l.b16 %v1878
          %v2497 = vunpack.c.h.b16 %v1878
          %v2498 = vunpack.c.l.b16 %v1879
          %v2499 = vunpack.c.h.b16 %v1879
          %v2500 = vunpack.c.l.b16 %v1880
          %v2501 = vunpack.c.h.b16 %v1880
          %v2502 = vunpack.c.l.b16 %v1881
          %v2503 = vunpack.c.h.b16 %v1881
          %v2504 = vunpack.c.l.b16 %v1882
          %v2505 = vunpack.c.h.b16 %v1882
          %v2506 = vunpack.c.l.b16 %v1883
          %v2507 = vunpack.c.h.b16 %v1883
          %v2508 = vunpack.c.l.b16 %v1884
          %v2509 = vunpack.c.h.b16 %v1884
          %v2510 = vunpack.c.l.b16 %v1885
          %v2511 = vunpack.c.h.b16 %v1885
          %v2512 = vunpack.c.l.b16 %v1886
          %v2513 = vunpack.c.h.b16 %v1886
          %v2514 = vunpack.c.l.b16 %v1887
          %v2515 = vunpack.c.h.b16 %v1887
          %v2516 = vunpack.c.l.b16 %v1888
          %v2517 = vunpack.c.h.b16 %v1888
          %v2518 = vunpack.c.l.b16 %v1889
          %v2519 = vunpack.c.h.b16 %v1889
          %v2520 = vunpack.c.l.b16 %v1890
          %v2521 = vunpack.c.h.b16 %v1890
          %v2522 = vunpack.c.l.b16 %v1891
          %v2523 = vunpack.c.h.b16 %v1891
          %v2524 = vunpack.c.l.b16 %v1892
          %v2525 = vunpack.c.h.b16 %v1892
          %v2526 = vunpack.c.l.b16 %v1893
          %v2527 = vunpack.c.h.b16 %v1893
          %v2528 = vunpack.c.l.b16 %v1894
          %v2529 = vunpack.c.h.b16 %v1894
          %v2530 = vunpack.c.l.b16 %v1895
          %v2531 = vunpack.c.h.b16 %v1895
          %v2532 = vunpack.c.l.b16 %v1896
          %v2533 = vunpack.c.h.b16 %v1896
          %v2534 = vunpack.c.l.b16 %v1897
          %v2535 = vunpack.c.h.b16 %v1897
          %v2536 = vunpack.c.l.b16 %v1898
          %v2537 = vunpack.c.h.b16 %v1898
          %v2538 = vunpack.c.l.b16 %v1899
          %v2539 = vunpack.c.h.b16 %v1899
          %v2540 = vunpack.c.l.b16 %v1900
          %v2541 = vunpack.c.h.b16 %v1900
          %v2542 = vunpack.c.l.b16 %v1901
          %v2543 = vunpack.c.h.b16 %v1901
          %v2544 = vunpack.c.l.b16 %v1902
          %v2545 = vunpack.c.h.b16 %v1902
          %v2546 = vunpack.c.l.b16 %v1903
          %v2547 = vunpack.c.h.b16 %v1903
          %v2548 = vunpack.c.l.b16 %v1904
          %v2549 = vunpack.c.h.b16 %v1904
          %v2550 = vunpack.c.l.b16 %v1905
          %v2551 = vunpack.c.h.b16 %v1905
          %v2552 = vunpack.c.l.b16 %v1906
          %v2553 = vunpack.c.h.b16 %v1906
          %v2554 = vunpack.c.l.b16 %v1907
          %v2555 = vunpack.c.h.b16 %v1907
          %v2556 = vunpack.c.l.b16 %v1908
          %v2557 = vunpack.c.h.b16 %v1908
          %v2558 = vunpack.c.l.b16 %v1909
          %v2559 = vunpack.c.h.b16 %v1909
          %v2560 = vunpack.c.l.b16 %v1910
          %v2561 = vunpack.c.h.b16 %v1910
          %v2562 = vunpack.c.l.b16 %v1911
          %v2563 = vunpack.c.h.b16 %v1911
          %v2564 = vunpack.c.l.b16 %v1912
          %v2565 = vunpack.c.h.b16 %v1912
          %v2566 = vunpack.c.l.b16 %v1913
          %v2567 = vunpack.c.h.b16 %v1913
          %v2568 = vunpack.c.l.b16 %v1914
          %v2569 = vunpack.c.h.b16 %v1914
          %v2570 = vunpack.c.l.b16 %v1915
          %v2571 = vunpack.c.h.b16 %v1915
          %v2572 = vunpack.c.l.b16 %v1916
          %v2573 = vunpack.c.h.b16 %v1916
          %v2574 = vunpack.c.l.b16 %v1917
          %v2575 = vunpack.c.h.b16 %v1917
          %v2576 = vunpack.c.l.b16 %v1918
          %v2577 = vunpack.c.h.b16 %v1918
          %v2578 = vunpack.c.l.b16 %v1919
          %v2579 = vunpack.c.h.b16 %v1919
          %v2580 = vunpack.c.l.b16 %v1920
          %v2581 = vunpack.c.h.b16 %v1920
          %v2582 = vunpack.c.l.b16 %v1921
          %v2583 = vunpack.c.h.b16 %v1921
          %v2584 = vunpack.c.l.b16 %v1922
          %v2585 = vunpack.c.h.b16 %v1922
          %v2586 = vunpack.c.l.b16 %v1923
          %v2587 = vunpack.c.h.b16 %v1923
          %v2588 = vunpack.c.l.b16 %v1924
          %v2589 = vunpack.c.h.b16 %v1924
          %v2590 = vunpack.c.l.b16 %v1925
          %v2591 = vunpack.c.h.b16 %v1925
          %v2592 = vunpack.c.l.b16 %v1926
          %v2593 = vunpack.c.h.b16 %v1926
          %v2594 = vunpack.c.l.b16 %v1927
          %v2595 = vunpack.c.h.b16 %v1927
          %v2596 = vunpack.c.l.b16 %v1928
          %v2597 = vunpack.c.h.b16 %v1928
          %v2598 = vunpack.c.l.b16 %v1929
          %v2599 = vunpack.c.h.b16 %v1929
          %v2600 = vunpack.c.l.b16 %v1930
          %v2601 = vunpack.c.h.b16 %v1930
          %v2602 = vunpack.c.l.b16 %v1931
          %v2603 = vunpack.c.h.b16 %v1931
          %v2604 = vunpack.c.l.b16 %v1932
          %v2605 = vunpack.c.h.b16 %v1932
          %v2606 = vunpack.c.l.b16 %v1933
          %v2607 = vunpack.c.h.b16 %v1933
          %v2608 = vunpack.c.l.b16 %v1934
          %v2609 = vunpack.c.h.b16 %v1934
          %v2610 = vunpack.c.l.b16 %v1935
          %v2611 = vunpack.c.h.b16 %v1935
          %v2612 = vunpack.c.l.b16 %v1936
          %v2613 = vunpack.c.h.b16 %v1936
          %v2614 = vunpack.c.l.b16 %v1937
          %v2615 = vunpack.c.h.b16 %v1937
          %v2616 = vunpack.c.l.b16 %v1938
          %v2617 = vunpack.c.h.b16 %v1938
          %v2618 = vunpack.c.l.b16 %v1939
          %v2619 = vunpack.c.h.b16 %v1939
          %v2620 = vunpack.c.l.b16 %v1940
          %v2621 = vunpack.c.h.b16 %v1940
          %v2622 = vunpack.c.l.b16 %v1941
          %v2623 = vunpack.c.h.b16 %v1941
          %v2624 = vunpack.c.l.b16 %v1942
          %v2625 = vunpack.c.h.b16 %v1942
          %v2626 = vunpack.c.l.b16 %v1943
          %v2627 = vunpack.c.h.b16 %v1943
          %v2628 = vunpack.c.l.b16 %v1944
          %v2629 = vunpack.c.h.b16 %v1944
          %v2630 = vunpack.c.l.b16 %v1945
          %v2631 = vunpack.c.h.b16 %v1945
          %v2632 = vunpack.c.l.b16 %v1946
          %v2633 = vunpack.c.h.b16 %v1946
          %v2634 = vunpack.c.l.b16 %v1947
          %v2635 = vunpack.c.h.b16 %v1947
          %v2636 = vunpack.c.l.b16 %v1948
          %v2637 = vunpack.c.h.b16 %v1948
          %v2638 = vunpack.c.l.b16 %v1949
          %v2639 = vunpack.c.h.b16 %v1949
          %v2640 = vunpack.c.l.b16 %v1950
          %v2641 = vunpack.c.h.b16 %v1950
          %v2642 = vunpack.c.l.b16 %v1951
          %v2643 = vunpack.c.h.b16 %v1951
          %v2644 = vunpack.c.l.b16 %v1952
          %v2645 = vunpack.c.h.b16 %v1952
          %v2646 = vunpack.c.l.b16 %v1953
          %v2647 = vunpack.c.h.b16 %v1953
          %v2648 = vunpack.c.l.b16 %v1954
          %v2649 = vunpack.c.h.b16 %v1954
          %v2650 = vunpack.c.l.b16 %v1955
          %v2651 = vunpack.c.h.b16 %v1955
          %v2652 = vunpack.c.l.b16 %v1956
          %v2653 = vunpack.c.h.b16 %v1956
          %v2654 = vunpack.c.l.b16 %v1957
          %v2655 = vunpack.c.h.b16 %v1957
          %v2656 = vunpack.c.l.b16 %v1958
          %v2657 = vunpack.c.h.b16 %v1958
          %v2658 = vunpack.c.l.b16 %v1959
          %v2659 = vunpack.c.h.b16 %v1959
          %v2660 = vunpack.c.l.b16 %v1960
          %v2661 = vunpack.c.h.b16 %v1960
          %v2662 = vunpack.c.l.b16 %v1961
          %v2663 = vunpack.c.h.b16 %v1961
          %v2664 = vunpack.c.l.b16 %v1962
          %v2665 = vunpack.c.h.b16 %v1962
          %v2666 = vunpack.c.l.b16 %v1963
          %v2667 = vunpack.c.h.b16 %v1963
          %v2668 = vunpack.c.l.b16 %v1964
          %v2669 = vunpack.c.h.b16 %v1964
          %v2670 = vunpack.c.l.b16 %v1965
          %v2671 = vunpack.c.h.b16 %v1965
          %v2672 = vunpack.c.l.b16 %v1966
          %v2673 = vunpack.c.h.b16 %v1966
          %v2674 = vunpack.c.l.b16 %v1967
          %v2675 = vunpack.c.h.b16 %v1967
          %v2676 = vunpack.c.l.b16 %v1968
          %v2677 = vunpack.c.h.b16 %v1968
          %v2678 = vunpack.c.l.b16 %v1969
          %v2679 = vunpack.c.h.b16 %v1969
          %v2680 = vunpack.c.l.b16 %v1970
          %v2681 = vunpack.c.h.b16 %v1970
          %v2682 = vunpack.c.l.b16 %v1971
          %v2683 = vunpack.c.h.b16 %v1971
          %v2684 = vunpack.c.l.b16 %v1972
          %v2685 = vunpack.c.h.b16 %v1972
          %v2686 = vunpack.c.l.b16 %v1973
          %v2687 = vunpack.c.h.b16 %v1973
          %v2688 = vunpack.c.l.b16 %v1974
          %v2689 = vunpack.c.h.b16 %v1974
          %v2690 = vunpack.c.l.b16 %v1975
          %v2691 = vunpack.c.h.b16 %v1975
          %v2692 = vunpack.c.l.b16 %v1976
          %v2693 = vunpack.c.h.b16 %v1976
          %v2694 = vunpack.c.l.b16 %v1977
          %v2695 = vunpack.c.h.b16 %v1977
          %v2696 = vunpack.c.l.b16 %v1978
          %v2697 = vunpack.c.h.b16 %v1978
          %v2698 = vunpack.c.l.b16 %v1979
          %v2699 = vunpack.c.h.b16 %v1979
          %v2700 = vunpack.c.l.b16 %v1980
          %v2701 = vunpack.c.h.b16 %v1980
          %v2702 = vunpack.c.l.b16 %v1981
          %v2703 = vunpack.c.h.b16 %v1981
          %v2704 = vunpack.c.l.b16 %v1982
          %v2705 = vunpack.c.h.b16 %v1982
          %v2706 = vunpack.c.l.b16 %v1983
          %v2707 = vunpack.c.h.b16 %v1983
          %v2708 = vunpack.c.l.b16 %v1984
          %v2709 = vunpack.c.h.b16 %v1984
          %v2710 = vunpack.c.l.b16 %v1985
          %v2711 = vunpack.c.h.b16 %v1985
          %v2712 = vunpack.c.l.b16 %v1986
          %v2713 = vunpack.c.h.b16 %v1986
          %v2714 = vunpack.c.l.b16 %v1987
          %v2715 = vunpack.c.h.b16 %v1987
          %v2716 = vunpack.c.l.b16 %v1988
          %v2717 = vunpack.c.h.b16 %v1988
          %v2718 = vunpack.c.l.b16 %v1989
          %v2719 = vunpack.c.h.b16 %v1989
          %v2720 = vunpack.c.l.b16 %v1990
          %v2721 = vunpack.c.h.b16 %v1990
          %v2722 = vunpack.c.l.b16 %v1991
          %v2723 = vunpack.c.h.b16 %v1991
          %v2724 = vunpack.c.l.b16 %v1992
          %v2725 = vunpack.c.h.b16 %v1992
          %v2726 = vunpack.c.l.b16 %v1993
          %v2727 = vunpack.c.h.b16 %v1993
          %v2728 = vunpack.c.l.b16 %v1994
          %v2729 = vunpack.c.h.b16 %v1994
          %v2730 = vunpack.c.l.b16 %v1995
          %v2731 = vunpack.c.h.b16 %v1995
          %v2732 = vunpack.c.l.b16 %v1996
          %v2733 = vunpack.c.h.b16 %v1996
          %v2734 = vunpack.c.l.b16 %v1997
          %v2735 = vunpack.c.h.b16 %v1997
          %v2736 = vunpack.c.l.b16 %v1998
          %v2737 = vunpack.c.h.b16 %v1998
          %v2738 = vunpack.c.l.b16 %v1999
          %v2739 = vunpack.c.h.b16 %v1999
          %v2740 = vunpack.c.l.b16 %v2000
          %v2741 = vunpack.c.h.b16 %v2000
          %v2742 = vunpack.c.l.b16 %v2001
          %v2743 = vunpack.c.h.b16 %v2001
          %v2744 = vunpack.c.l.b16 %v2002
          %v2745 = vunpack.c.h.b16 %v2002
          %v2746 = vunpack.c.l.b16 %v2003
          %v2747 = vunpack.c.h.b16 %v2003
          %v2748 = vunpack.c.l.b16 %v2004
          %v2749 = vunpack.c.h.b16 %v2004
          %v2750 = vunpack.c.l.b16 %v2005
          %v2751 = vunpack.c.h.b16 %v2005
          %v2752 = vunpack.c.l.b16 %v2006
          %v2753 = vunpack.c.h.b16 %v2006
          %v2754 = vunpack.c.l.b16 %v2007
          %v2755 = vunpack.c.h.b16 %v2007
          %v2756 = vunpack.c.l.b16 %v2008
          %v2757 = vunpack.c.h.b16 %v2008
          %v2758 = vunpack.c.l.b16 %v2009
          %v2759 = vunpack.c.h.b16 %v2009
          %v2760 = vunpack.c.l.b16 %v2010
          %v2761 = vunpack.c.h.b16 %v2010
          %v2762 = vunpack.c.l.b16 %v2011
          %v2763 = vunpack.c.h.b16 %v2011
          %v2764 = vunpack.c.l.b16 %v2012
          %v2765 = vunpack.c.h.b16 %v2012
          %v2766 = vunpack.c.l.b16 %v2013
          %v2767 = vunpack.c.h.b16 %v2013
          %v2768 = vunpack.c.l.b16 %v2014
          %v2769 = vunpack.c.h.b16 %v2014
          %v2770 = vunpack.c.l.b16 %v2015
          %v2771 = vunpack.c.h.b16 %v2015
          %v2772 = vunpack.c.l.b16 %v2016
          %v2773 = vunpack.c.h.b16 %v2016
          %v2774 = vunpack.c.l.b16 %v2017
          %v2775 = vunpack.c.h.b16 %v2017
          %v2776 = vunpack.c.l.b16 %v2018
          %v2777 = vunpack.c.h.b16 %v2018
          %v2778 = vunpack.c.l.b16 %v2019
          %v2779 = vunpack.c.h.b16 %v2019
          %v2780 = vunpack.c.l.b16 %v2020
          %v2781 = vunpack.c.h.b16 %v2020
          %v2782 = vunpack.c.l.b16 %v2021
          %v2783 = vunpack.c.h.b16 %v2021
          %v2784 = vunpack.c.l.b16 %v2022
          %v2785 = vunpack.c.h.b16 %v2022
          %v2786 = vunpack.c.l.b16 %v2023
          %v2787 = vunpack.c.h.b16 %v2023
          %v2788 = vunpack.c.l.b16 %v2024
          %v2789 = vunpack.c.h.b16 %v2024
          %v2790 = vunpack.c.l.b16 %v2025
          %v2791 = vunpack.c.h.b16 %v2025
          %v2792 = vunpack.c.l.b16 %v2026
          %v2793 = vunpack.c.h.b16 %v2026
          %v2794 = vunpack.c.l.b16 %v2027
          %v2795 = vunpack.c.h.b16 %v2027
          %v2796 = vunpack.c.l.b16 %v2028
          %v2797 = vunpack.c.h.b16 %v2028
          %v2798 = vunpack.c.l.b16 %v2029
          %v2799 = vunpack.c.h.b16 %v2029
          %v2800 = vunpack.c.l.b16 %v2030
          %v2801 = vunpack.c.h.b16 %v2030
          %v2802 = vunpack.c.l.b16 %v2031
          %v2803 = vunpack.c.h.b16 %v2031
          %v2804 = vunpack.c.l.b16 %v2032
          %v2805 = vunpack.c.h.b16 %v2032
          %v2806 = vunpack.c.l.b16 %v2033
          %v2807 = vunpack.c.h.b16 %v2033
          %v2808 = vunpack.c.l.b16 %v2034
          %v2809 = vunpack.c.h.b16 %v2034
          %v2810 = vunpack.c.l.b16 %v2035
          %v2811 = vunpack.c.h.b16 %v2035
          %v2812 = vunpack.c.l.b16 %v2036
          %v2813 = vunpack.c.h.b16 %v2036
          %v2814 = vunpack.c.l.b16 %v2037
          %v2815 = vunpack.c.h.b16 %v2037
          %v2816 = vpack.c.b16 %v2308, %v2304
          %v2817 = vpack.c.b16 %v2309, %v2305
          %v2818 = vpack.c.b16 %v2310, %v2306
          %v2819 = vpack.c.b16 %v2311, %v2307
          %v2820 = vpack.c.b16 %v2316, %v2312
          %v2821 = vpack.c.b16 %v2317, %v2313
          %v2822 = vpack.c.b16 %v2318, %v2314
          %v2823 = vpack.c.b16 %v2319, %v2315
          %v2824 = vpack.c.b16 %v2324, %v2320
          %v2825 = vpack.c.b16 %v2325, %v2321
          %v2826 = vpack.c.b16 %v2326, %v2322
          %v2827 = vpack.c.b16 %v2327, %v2323
          %v2828 = vpack.c.b16 %v2332, %v2328
          %v2829 = vpack.c.b16 %v2333, %v2329
          %v2830 = vpack.c.b16 %v2334, %v2330
          %v2831 = vpack.c.b16 %v2335, %v2331
          %v2832 = vpack.c.b16 %v2340, %v2336
          %v2833 = vpack.c.b16 %v2341, %v2337
          %v2834 = vpack.c.b16 %v2342, %v2338
          %v2835 = vpack.c.b16 %v2343, %v2339
          %v2836 = vpack.c.b16 %v2348, %v2344
          %v2837 = vpack.c.b16 %v2349, %v2345
          %v2838 = vpack.c.b16 %v2350, %v2346
          %v2839 = vpack.c.b16 %v2351, %v2347
          %v2840 = vpack.c.b16 %v2356, %v2352
          %v2841 = vpack.c.b16 %v2357, %v2353
          %v2842 = vpack.c.b16 %v2358, %v2354
          %v2843 = vpack.c.b16 %v2359, %v2355
          %v2844 = vpack.c.b16 %v2364, %v2360
          %v2845 = vpack.c.b16 %v2365, %v2361
          %v2846 = vpack.c.b16 %v2366, %v2362
          %v2847 = vpack.c.b16 %v2367, %v2363
          %v2848 = vpack.c.b16 %v2372, %v2368
          %v2849 = vpack.c.b16 %v2373, %v2369
          %v2850 = vpack.c.b16 %v2374, %v2370
          %v2851 = vpack.c.b16 %v2375, %v2371
          %v2852 = vpack.c.b16 %v2380, %v2376
          %v2853 = vpack.c.b16 %v2381, %v2377
          %v2854 = vpack.c.b16 %v2382, %v2378
          %v2855 = vpack.c.b16 %v2383, %v2379
          %v2856 = vpack.c.b16 %v2388, %v2384
          %v2857 = vpack.c.b16 %v2389, %v2385
          %v2858 = vpack.c.b16 %v2390, %v2386
          %v2859 = vpack.c.b16 %v2391, %v2387
          %v2860 = vpack.c.b16 %v2396, %v2392
          %v2861 = vpack.c.b16 %v2397, %v2393
          %v2862 = vpack.c.b16 %v2398, %v2394
          %v2863 = vpack.c.b16 %v2399, %v2395
          %v2864 = vpack.c.b16 %v2404, %v2400
          %v2865 = vpack.c.b16 %v2405, %v2401
          %v2866 = vpack.c.b16 %v2406, %v2402
          %v2867 = vpack.c.b16 %v2407, %v2403
          %v2868 = vpack.c.b16 %v2412, %v2408
          %v2869 = vpack.c.b16 %v2413, %v2409
          %v2870 = vpack.c.b16 %v2414, %v2410
          %v2871 = vpack.c.b16 %v2415, %v2411
          %v2872 = vpack.c.b16 %v2420, %v2416
          %v2873 = vpack.c.b16 %v2421, %v2417
          %v2874 = vpack.c.b16 %v2422, %v2418
          %v2875 = vpack.c.b16 %v2423, %v2419
          %v2876 = vpack.c.b16 %v2428, %v2424
          %v2877 = vpack.c.b16 %v2429, %v2425
          %v2878 = vpack.c.b16 %v2430, %v2426
          %v2879 = vpack.c.b16 %v2431, %v2427
          %v2880 = vpack.c.b16 %v2436, %v2432
          %v2881 = vpack.c.b16 %v2437, %v2433
          %v2882 = vpack.c.b16 %v2438, %v2434
          %v2883 = vpack.c.b16 %v2439, %v2435
          %v2884 = vpack.c.b16 %v2444, %v2440
          %v2885 = vpack.c.b16 %v2445, %v2441
          %v2886 = vpack.c.b16 %v2446, %v2442
          %v2887 = vpack.c.b16 %v2447, %v2443
          %v2888 = vpack.c.b16 %v2452, %v2448
          %v2889 = vpack.c.b16 %v2453, %v2449
          %v2890 = vpack.c.b16 %v2454, %v2450
          %v2891 = vpack.c.b16 %v2455, %v2451
          %v2892 = vpack.c.b16 %v2460, %v2456
          %v2893 = vpack.c.b16 %v2461, %v2457
          %v2894 = vpack.c.b16 %v2462, %v2458
          %v2895 = vpack.c.b16 %v2463, %v2459
          %v2896 = vpack.c.b16 %v2468, %v2464
          %v2897 = vpack.c.b16 %v2469, %v2465
          %v2898 = vpack.c.b16 %v2470, %v2466
          %v2899 = vpack.c.b16 %v2471, %v2467
          %v2900 = vpack.c.b16 %v2476, %v2472
          %v2901 = vpack.c.b16 %v2477, %v2473
          %v2902 = vpack.c.b16 %v2478, %v2474
          %v2903 = vpack.c.b16 %v2479, %v2475
          %v2904 = vpack.c.b16 %v2484, %v2480
          %v2905 = vpack.c.b16 %v2485, %v2481
          %v2906 = vpack.c.b16 %v2486, %v2482
          %v2907 = vpack.c.b16 %v2487, %v2483
          %v2908 = vpack.c.b16 %v2492, %v2488
          %v2909 = vpack.c.b16 %v2493, %v2489
          %v2910 = vpack.c.b16 %v2494, %v2490
          %v2911 = vpack.c.b16 %v2495, %v2491
          %v2912 = vpack.c.b16 %v2500, %v2496
          %v2913 = vpack.c.b16 %v2501, %v2497
          %v2914 = vpack.c.b16 %v2502, %v2498
          %v2915 = vpack.c.b16 %v2503, %v2499
          %v2916 = vpack.c.b16 %v2508, %v2504
          %v2917 = vpack.c.b16 %v2509, %v2505
          %v2918 = vpack.c.b16 %v2510, %v2506
          %v2919 = vpack.c.b16 %v2511, %v2507
          %v2920 = vpack.c.b16 %v2516, %v2512
          %v2921 = vpack.c.b16 %v2517, %v2513
          %v2922 = vpack.c.b16 %v2518, %v2514
          %v2923 = vpack.c.b16 %v2519, %v2515
          %v2924 = vpack.c.b16 %v2524, %v2520
          %v2925 = vpack.c.b16 %v2525, %v2521
          %v2926 = vpack.c.b16 %v2526, %v2522
          %v2927 = vpack.c.b16 %v2527, %v2523
          %v2928 = vpack.c.b16 %v2532, %v2528
          %v2929 = vpack.c.b16 %v2533, %v2529
          %v2930 = vpack.c.b16 %v2534, %v2530
          %v2931 = vpack.c.b16 %v2535, %v2531
          %v2932 = vpack.c.b16 %v2540, %v2536
          %v2933 = vpack.c.b16 %v2541, %v2537
          %v2934 = vpack.c.b16 %v2542, %v2538
          %v2935 = vpack.c.b16 %v2543, %v2539
          %v2936 = vpack.c.b16 %v2548, %v2544
          %v2937 = vpack.c.b16 %v2549, %v2545
          %v2938 = vpack.c.b16 %v2550, %v2546
          %v2939 = vpack.c.b16 %v2551, %v2547
          %v2940 = vpack.c.b16 %v2556, %v2552
          %v2941 = vpack.c.b16 %v2557, %v2553
          %v2942 = vpack.c.b16 %v2558, %v2554
          %v2943 = vpack.c.b16 %v2559, %v2555
          %v2944 = vpack.c.b16 %v2564, %v2560
          %v2945 = vpack.c.b16 %v2565, %v2561
          %v2946 = vpack.c.b16 %v2566, %v2562
          %v2947 = vpack.c.b16 %v2567, %v2563
          %v2948 = vpack.c.b16 %v2572, %v2568
          %v2949 = vpack.c.b16 %v2573, %v2569
          %v2950 = vpack.c.b16 %v2574, %v2570
          %v2951 = vpack.c.b16 %v2575, %v2571
          %v2952 = vpack.c.b16 %v2580, %v2576
          %v2953 = vpack.c.b16 %v2581, %v2577
          %v2954 = vpack.c.b16 %v2582, %v2578
          %v2955 = vpack.c.b16 %v2583, %v2579
          %v2956 = vpack.c.b16 %v2588, %v2584
          %v2957 = vpack.c.b16 %v2589, %v2585
          %v2958 = vpack.c.b16 %v2590, %v2586
          %v2959 = vpack.c.b16 %v2591, %v2587
          %v2960 = vpack.c.b16 %v2596, %v2592
          %v2961 = vpack.c.b16 %v2597, %v2593
          %v2962 = vpack.c.b16 %v2598, %v2594
          %v2963 = vpack.c.b16 %v2599, %v2595
          %v2964 = vpack.c.b16 %v2604, %v2600
          %v2965 = vpack.c.b16 %v2605, %v2601
          %v2966 = vpack.c.b16 %v2606, %v2602
          %v2967 = vpack.c.b16 %v2607, %v2603
          %v2968 = vpack.c.b16 %v2612, %v2608
          %v2969 = vpack.c.b16 %v2613, %v2609
          %v2970 = vpack.c.b16 %v2614, %v2610
          %v2971 = vpack.c.b16 %v2615, %v2611
          %v2972 = vpack.c.b16 %v2620, %v2616
          %v2973 = vpack.c.b16 %v2621, %v2617
          %v2974 = vpack.c.b16 %v2622, %v2618
          %v2975 = vpack.c.b16 %v2623, %v2619
          %v2976 = vpack.c.b16 %v2628, %v2624
          %v2977 = vpack.c.b16 %v2629, %v2625
          %v2978 = vpack.c.b16 %v2630, %v2626
          %v2979 = vpack.c.b16 %v2631, %v2627
          %v2980 = vpack.c.b16 %v2636, %v2632
          %v2981 = vpack.c.b16 %v2637, %v2633
          %v2982 = vpack.c.b16 %v2638, %v2634
          %v2983 = vpack.c.b16 %v2639, %v2635
          %v2984 = vpack.c.b16 %v2644, %v2640
          %v2985 = vpack.c.b16 %v2645, %v2641
          %v2986 = vpack.c.b16 %v2646, %v2642
          %v2987 = vpack.c.b16 %v2647, %v2643
          %v2988 = vpack.c.b16 %v2652, %v2648
          %v2989 = vpack.c.b16 %v2653, %v2649
          %v2990 = vpack.c.b16 %v2654, %v2650
          %v2991 = vpack.c.b16 %v2655, %v2651
          %v2992 = vpack.c.b16 %v2660, %v2656
          %v2993 = vpack.c.b16 %v2661, %v2657
          %v2994 = vpack.c.b16 %v2662, %v2658
          %v2995 = vpack.c.b16 %v2663, %v2659
          %v2996 = vpack.c.b16 %v2668, %v2664
          %v2997 = vpack.c.b16 %v2669, %v2665
          %v2998 = vpack.c.b16 %v2670, %v2666
          %v2999 = vpack.c.b16 %v2671, %v2667
          %v3000 = vpack.c.b16 %v2676, %v2672
          %v3001 = vpack.c.b16 %v2677, %v2673
          %v3002 = vpack.c.b16 %v2678, %v2674
          %v3003 = vpack.c.b16 %v2679, %v2675
          %v3004 = vpack.c.b16 %v2684, %v2680
          %v3005 = vpack.c.b16 %v2685, %v2681
          %v3006 = vpack.c.b16 %v2686, %v2682
          %v3007 = vpack.c.b16 %v2687, %v2683
          %v3008 = vpack.c.b16 %v2692, %v2688
          %v3009 = vpack.c.b16 %v2693, %v2689
          %v3010 = vpack.c.b16 %v2694, %v2690
          %v3011 = vpack.c.b16 %v2695, %v2691
          %v3012 = vpack.c.b16 %v2700, %v2696
          %v3013 = vpack.c.b16 %v2701, %v2697
          %v3014 = vpack.c.b16 %v2702, %v2698
          %v3015 = vpack.c.b16 %v2703, %v2699
          %v3016 = vpack.c.b16 %v2708, %v2704
          %v3017 = vpack.c.b16 %v2709, %v2705
          %v3018 = vpack.c.b16 %v2710, %v2706
          %v3019 = vpack.c.b16 %v2711, %v2707
          %v3020 = vpack.c.b16 %v2716, %v2712
          %v3021 = vpack.c.b16 %v2717, %v2713
          %v3022 = vpack.c.b16 %v2718, %v2714
          %v3023 = vpack.c.b16 %v2719, %v2715
          %v3024 = vpack.c.b16 %v2724, %v2720
          %v3025 = vpack.c.b16 %v2725, %v2721
          %v3026 = vpack.c.b16 %v2726, %v2722
          %v3027 = vpack.c.b16 %v2727, %v2723
          %v3028 = vpack.c.b16 %v2732, %v2728
          %v3029 = vpack.c.b16 %v2733, %v2729
          %v3030 = vpack.c.b16 %v2734, %v2730
          %v3031 = vpack.c.b16 %v2735, %v2731
          %v3032 = vpack.c.b16 %v2740, %v2736
          %v3033 = vpack.c.b16 %v2741, %v2737
          %v3034 = vpack.c.b16 %v2742, %v2738
          %v3035 = vpack.c.b16 %v2743, %v2739
          %v3036 = vpack.c.b16 %v2748, %v2744
          %v3037 = vpack.c.b16 %v2749, %v2745
          %v3038 = vpack.c.b16 %v2750, %v2746
          %v3039 = vpack.c.b16 %v2751, %v2747
          %v3040 = vpack.c.b16 %v2756, %v2752
          %v3041 = vpack.c.b16 %v2757, %v2753
          %v3042 = vpack.c.b16 %v2758, %v2754
          %v3043 = vpack.c.b16 %v2759, %v2755
          %v3044 = vpack.c.b16 %v2764, %v2760
          %v3045 = vpack.c.b16 %v2765, %v2761
          %v3046 = vpack.c.b16 %v2766, %v2762
          %v3047 = vpack.c.b16 %v2767, %v2763
          %v3048 = vpack.c.b16 %v2772, %v2768
          %v3049 = vpack.c.b16 %v2773, %v2769
          %v3050 = vpack.c.b16 %v2774, %v2770
          %v3051 = vpack.c.b16 %v2775, %v2771
          %v3052 = vpack.c.b16 %v2780, %v2776
          %v3053 = vpack.c.b16 %v2781, %v2777
          %v3054 = vpack.c.b16 %v2782, %v2778
          %v3055 = vpack.c.b16 %v2783, %v2779
          %v3056 = vpack.c.b16 %v2788, %v2784
          %v3057 = vpack.c.b16 %v2789, %v2785
          %v3058 = vpack.c.b16 %v2790, %v2786
          %v3059 = vpack.c.b16 %v2791, %v2787
          %v3060 = vpack.c.b16 %v2796, %v2792
          %v3061 = vpack.c.b16 %v2797, %v2793
          %v3062 = vpack.c.b16 %v2798, %v2794
          %v3063 = vpack.c.b16 %v2799, %v2795
          %v3064 = vpack.c.b16 %v2804, %v2800
          %v3065 = vpack.c.b16 %v2805, %v2801
          %v3066 = vpack.c.b16 %v2806, %v2802
          %v3067 = vpack.c.b16 %v2807, %v2803
          %v3068 = vpack.c.b16 %v2812, %v2808
          %v3069 = vpack.c.b16 %v2813, %v2809
          %v3070 = vpack.c.b16 %v2814, %v2810
          %v3071 = vpack.c.b16 %v2815, %v2811
          %3328 = vmatpush.bf16.msra.mxu0 %v2844
          %3329 = vmatpush.bf16.msra.mxu0 %v2840
          %3330 = vmatpush.bf16.msra.mxu0 %v2836
          %3331 = vmatpush.bf16.msra.mxu0 %v2832
          %3332 = vmatpush.bf16.msra.mxu0 %v2828
          %3333 = vmatpush.bf16.msra.mxu0 %v2824
          %3334 = vmatpush.bf16.msra.mxu0 %v2820
          %3335 = vmatpush.bf16.msra.mxu0 %v2816
          %3336 = vmatmul.bf16.gmra.mxu0 %v1774
          %v3337 = vpop.f32.mrf.mxu0
          %v3338 = vadd.f32 %v2040, %v3337
          %v3339 = vpop.f32.mrf.mxu0
          %3340 = vdwg.mxu0
          %3341 = vmatpush.bf16.msra.mxu0 %v2876
          %3342 = vmatpush.bf16.msra.mxu0 %v2872
          %3343 = vmatpush.bf16.msra.mxu0 %v2868
          %3344 = vmatpush.bf16.msra.mxu0 %v2864
          %3345 = vmatpush.bf16.msra.mxu0 %v2860
          %3346 = vmatpush.bf16.msra.mxu0 %v2856
          %3347 = vmatpush.bf16.msra.mxu0 %v2852
          %3348 = vmatpush.bf16.msra.mxu0 %v2848
          %3349 = vmatmul.bf16.gmra.mxu0 %v1775
          %v3350 = vpop.f32.mrf.mxu0
          %v3351 = vadd.f32 %v3338, %v3350
          %v3352 = vpop.f32.mrf.mxu0
          %3353 = vdwg.mxu0
          %3354 = vmatpush.bf16.msra.mxu0 %v2908
          %3355 = vmatpush.bf16.msra.mxu0 %v2904
          %3356 = vmatpush.bf16.msra.mxu0 %v2900
          %3357 = vmatpush.bf16.msra.mxu0 %v2896
          %3358 = vmatpush.bf16.msra.mxu0 %v2892
          %3359 = vmatpush.bf16.msra.mxu0 %v2888
          %3360 = vmatpush.bf16.msra.mxu0 %v2884
          %3361 = vmatpush.bf16.msra.mxu0 %v2880
          %3362 = vmatmul.bf16.gmra.mxu0 %v1776
          %v3363 = vpop.f32.mrf.mxu0
          %v3364 = vadd.f32 %v3351, %v3363
          %v3365 = vpop.f32.mrf.mxu0
          %3366 = vdwg.mxu0
          %3367 = vmatpush.bf16.msra.mxu0 %v2940
          %3368 = vmatpush.bf16.msra.mxu0 %v2936
          %3369 = vmatpush.bf16.msra.mxu0 %v2932
          %3370 = vmatpush.bf16.msra.mxu0 %v2928
          %3371 = vmatpush.bf16.msra.mxu0 %v2924
          %3372 = vmatpush.bf16.msra.mxu0 %v2920
          %3373 = vmatpush.bf16.msra.mxu0 %v2916
          %3374 = vmatpush.bf16.msra.mxu0 %v2912
          %3375 = vmatmul.bf16.gmra.mxu0 %v1777
          %v3376 = vpop.f32.mrf.mxu0
          %v3377 = vadd.f32 %v3364, %v3376
          %v3378 = vpop.f32.mrf.mxu0
          %3379 = vdwg.mxu0
          %3380 = vmatpush.bf16.msra.mxu0 %v2972
          %3381 = vmatpush.bf16.msra.mxu0 %v2968
          %3382 = vmatpush.bf16.msra.mxu0 %v2964
          %3383 = vmatpush.bf16.msra.mxu0 %v2960
          %3384 = vmatpush.bf16.msra.mxu0 %v2956
          %3385 = vmatpush.bf16.msra.mxu0 %v2952
          %3386 = vmatpush.bf16.msra.mxu0 %v2948
          %3387 = vmatpush.bf16.msra.mxu0 %v2944
          %3388 = vmatmul.bf16.gmra.mxu0 %v1778
          %v3389 = vpop.f32.mrf.mxu0
          %v3390 = vadd.f32 %v3377, %v3389
          %v3391 = vpop.f32.mrf.mxu0
          %3392 = vdwg.mxu0
          %3393 = vmatpush.bf16.msra.mxu0 %v3004
          %3394 = vmatpush.bf16.msra.mxu0 %v3000
          %3395 = vmatpush.bf16.msra.mxu0 %v2996
          %3396 = vmatpush.bf16.msra.mxu0 %v2992
          %3397 = vmatpush.bf16.msra.mxu0 %v2988
          %3398 = vmatpush.bf16.msra.mxu0 %v2984
          %3399 = vmatpush.bf16.msra.mxu0 %v2980
          %3400 = vmatpush.bf16.msra.mxu0 %v2976
          %3401 = vmatmul.bf16.gmra.mxu0 %v1779
          %v3402 = vpop.f32.mrf.mxu0
          %v3403 = vadd.f32 %v3390, %v3402
          %v3404 = vpop.f32.mrf.mxu0
          %3405 = vdwg.mxu0
          %3406 = vmatpush.bf16.msra.mxu0 %v3036
          %3407 = vmatpush.bf16.msra.mxu0 %v3032
          %3408 = vmatpush.bf16.msra.mxu0 %v3028
          %3409 = vmatpush.bf16.msra.mxu0 %v3024
          %3410 = vmatpush.bf16.msra.mxu0 %v3020
          %3411 = vmatpush.bf16.msra.mxu0 %v3016
          %3412 = vmatpush.bf16.msra.mxu0 %v3012
          %3413 = vmatpush.bf16.msra.mxu0 %v3008
          %3414 = vmatmul.bf16.gmra.mxu0 %v1780
          %v3415 = vpop.f32.mrf.mxu0
          %v3416 = vadd.f32 %v3403, %v3415
          %v3417 = vpop.f32.mrf.mxu0
          %3418 = vdwg.mxu0
          %3419 = vmatpush.bf16.msra.mxu0 %v3068
          %3420 = vmatpush.bf16.msra.mxu0 %v3064
          %3421 = vmatpush.bf16.msra.mxu0 %v3060
          %3422 = vmatpush.bf16.msra.mxu0 %v3056
          %3423 = vmatpush.bf16.msra.mxu0 %v3052
          %3424 = vmatpush.bf16.msra.mxu0 %v3048
          %3425 = vmatpush.bf16.msra.mxu0 %v3044
          %3426 = vmatpush.bf16.msra.mxu0 %v3040
          %3427 = vmatmul.bf16.gmra.mxu0 %v1781
          %v3428 = vpop.f32.mrf.mxu0
          %v3429 = vadd.f32 %v3416, %v3428
          %v3430 = vpop.f32.mrf.mxu0
          %3431 = vdwg.mxu0
          %3432 = vmatpush.bf16.msra.mxu0 %v2845
          %3433 = vmatpush.bf16.msra.mxu0 %v2841
          %3434 = vmatpush.bf16.msra.mxu0 %v2837
          %3435 = vmatpush.bf16.msra.mxu0 %v2833
          %3436 = vmatpush.bf16.msra.mxu0 %v2829
          %3437 = vmatpush.bf16.msra.mxu0 %v2825
          %3438 = vmatpush.bf16.msra.mxu0 %v2821
          %3439 = vmatpush.bf16.msra.mxu0 %v2817
          %3440 = vmatmul.bf16.gmra.mxu0 %v1774
          %v3441 = vpop.f32.mrf.mxu0
          %v3442 = vadd.f32 %v2041, %v3441
          %v3443 = vpop.f32.mrf.mxu0
          %3444 = vdwg.mxu0
          %3445 = vmatpush.bf16.msra.mxu0 %v2877
          %3446 = vmatpush.bf16.msra.mxu0 %v2873
          %3447 = vmatpush.bf16.msra.mxu0 %v2869
          %3448 = vmatpush.bf16.msra.mxu0 %v2865
          %3449 = vmatpush.bf16.msra.mxu0 %v2861
          %3450 = vmatpush.bf16.msra.mxu0 %v2857
          %3451 = vmatpush.bf16.msra.mxu0 %v2853
          %3452 = vmatpush.bf16.msra.mxu0 %v2849
          %3453 = vmatmul.bf16.gmra.mxu0 %v1775
          %v3454 = vpop.f32.mrf.mxu0
          %v3455 = vadd.f32 %v3442, %v3454
          %v3456 = vpop.f32.mrf.mxu0
          %3457 = vdwg.mxu0
          %3458 = vmatpush.bf16.msra.mxu0 %v2909
          %3459 = vmatpush.bf16.msra.mxu0 %v2905
          %3460 = vmatpush.bf16.msra.mxu0 %v2901
          %3461 = vmatpush.bf16.msra.mxu0 %v2897
          %3462 = vmatpush.bf16.msra.mxu0 %v2893
          %3463 = vmatpush.bf16.msra.mxu0 %v2889
          %3464 = vmatpush.bf16.msra.mxu0 %v2885
          %3465 = vmatpush.bf16.msra.mxu0 %v2881
          %3466 = vmatmul.bf16.gmra.mxu0 %v1776
          %v3467 = vpop.f32.mrf.mxu0
          %v3468 = vadd.f32 %v3455, %v3467
          %v3469 = vpop.f32.mrf.mxu0
          %3470 = vdwg.mxu0
          %3471 = vmatpush.bf16.msra.mxu0 %v2941
          %3472 = vmatpush.bf16.msra.mxu0 %v2937
          %3473 = vmatpush.bf16.msra.mxu0 %v2933
          %3474 = vmatpush.bf16.msra.mxu0 %v2929
          %3475 = vmatpush.bf16.msra.mxu0 %v2925
          %3476 = vmatpush.bf16.msra.mxu0 %v2921
          %3477 = vmatpush.bf16.msra.mxu0 %v2917
          %3478 = vmatpush.bf16.msra.mxu0 %v2913
          %3479 = vmatmul.bf16.gmra.mxu0 %v1777
          %v3480 = vpop.f32.mrf.mxu0
          %v3481 = vadd.f32 %v3468, %v3480
          %v3482 = vpop.f32.mrf.mxu0
          %3483 = vdwg.mxu0
          %3484 = vmatpush.bf16.msra.mxu0 %v2973
          %3485 = vmatpush.bf16.msra.mxu0 %v2969
          %3486 = vmatpush.bf16.msra.mxu0 %v2965
          %3487 = vmatpush.bf16.msra.mxu0 %v2961
          %3488 = vmatpush.bf16.msra.mxu0 %v2957
          %3489 = vmatpush.bf16.msra.mxu0 %v2953
          %3490 = vmatpush.bf16.msra.mxu0 %v2949
          %3491 = vmatpush.bf16.msra.mxu0 %v2945
          %3492 = vmatmul.bf16.gmra.mxu0 %v1778
          %v3493 = vpop.f32.mrf.mxu0
          %v3494 = vadd.f32 %v3481, %v3493
          %v3495 = vpop.f32.mrf.mxu0
          %3496 = vdwg.mxu0
          %3497 = vmatpush.bf16.msra.mxu0 %v3005
          %3498 = vmatpush.bf16.msra.mxu0 %v3001
          %3499 = vmatpush.bf16.msra.mxu0 %v2997
          %3500 = vmatpush.bf16.msra.mxu0 %v2993
          %3501 = vmatpush.bf16.msra.mxu0 %v2989
          %3502 = vmatpush.bf16.msra.mxu0 %v2985
          %3503 = vmatpush.bf16.msra.mxu0 %v2981
          %3504 = vmatpush.bf16.msra.mxu0 %v2977
          %3505 = vmatmul.bf16.gmra.mxu0 %v1779
          %v3506 = vpop.f32.mrf.mxu0
          %v3507 = vadd.f32 %v3494, %v3506
          %v3508 = vpop.f32.mrf.mxu0
          %3509 = vdwg.mxu0
          %3510 = vmatpush.bf16.msra.mxu0 %v3037
          %3511 = vmatpush.bf16.msra.mxu0 %v3033
          %3512 = vmatpush.bf16.msra.mxu0 %v3029
          %3513 = vmatpush.bf16.msra.mxu0 %v3025
          %3514 = vmatpush.bf16.msra.mxu0 %v3021
          %3515 = vmatpush.bf16.msra.mxu0 %v3017
          %3516 = vmatpush.bf16.msra.mxu0 %v3013
          %3517 = vmatpush.bf16.msra.mxu0 %v3009
          %3518 = vmatmul.bf16.gmra.mxu0 %v1780
          %v3519 = vpop.f32.mrf.mxu0
          %v3520 = vadd.f32 %v3507, %v3519
          %v3521 = vpop.f32.mrf.mxu0
          %3522 = vdwg.mxu0
          %3523 = vmatpush.bf16.msra.mxu0 %v3069
          %3524 = vmatpush.bf16.msra.mxu0 %v3065
          %3525 = vmatpush.bf16.msra.mxu0 %v3061
          %3526 = vmatpush.bf16.msra.mxu0 %v3057
          %3527 = vmatpush.bf16.msra.mxu0 %v3053
          %3528 = vmatpush.bf16.msra.mxu0 %v3049
          %3529 = vmatpush.bf16.msra.mxu0 %v3045
          %3530 = vmatpush.bf16.msra.mxu0 %v3041
          %3531 = vmatmul.bf16.gmra.mxu0 %v1781
          %v3532 = vpop.f32.mrf.mxu0
          %v3533 = vadd.f32 %v3520, %v3532
          %v3534 = vpop.f32.mrf.mxu0
          %3535 = vdwg.mxu0
          %3536 = vmatpush.bf16.msra.mxu0 %v2846
          %3537 = vmatpush.bf16.msra.mxu0 %v2842
          %3538 = vmatpush.bf16.msra.mxu0 %v2838
          %3539 = vmatpush.bf16.msra.mxu0 %v2834
          %3540 = vmatpush.bf16.msra.mxu0 %v2830
          %3541 = vmatpush.bf16.msra.mxu0 %v2826
          %3542 = vmatpush.bf16.msra.mxu0 %v2822
          %3543 = vmatpush.bf16.msra.mxu0 %v2818
          %3544 = vmatmul.bf16.gmra.mxu0 %v1774
          %v3545 = vpop.f32.mrf.mxu0
          %v3546 = vadd.f32 %v2042, %v3545
          %v3547 = vpop.f32.mrf.mxu0
          %3548 = vdwg.mxu0
          %3549 = vmatpush.bf16.msra.mxu0 %v2878
          %3550 = vmatpush.bf16.msra.mxu0 %v2874
          %3551 = vmatpush.bf16.msra.mxu0 %v2870
          %3552 = vmatpush.bf16.msra.mxu0 %v2866
          %3553 = vmatpush.bf16.msra.mxu0 %v2862
          %3554 = vmatpush.bf16.msra.mxu0 %v2858
          %3555 = vmatpush.bf16.msra.mxu0 %v2854
          %3556 = vmatpush.bf16.msra.mxu0 %v2850
          %3557 = vmatmul.bf16.gmra.mxu0 %v1775
          %v3558 = vpop.f32.mrf.mxu0
          %v3559 = vadd.f32 %v3546, %v3558
          %v3560 = vpop.f32.mrf.mxu0
          %3561 = vdwg.mxu0
          %3562 = vmatpush.bf16.msra.mxu0 %v2910
          %3563 = vmatpush.bf16.msra.mxu0 %v2906
          %3564 = vmatpush.bf16.msra.mxu0 %v2902
          %3565 = vmatpush.bf16.msra.mxu0 %v2898
          %3566 = vmatpush.bf16.msra.mxu0 %v2894
          %3567 = vmatpush.bf16.msra.mxu0 %v2890
          %3568 = vmatpush.bf16.msra.mxu0 %v2886
          %3569 = vmatpush.bf16.msra.mxu0 %v2882
          %3570 = vmatmul.bf16.gmra.mxu0 %v1776
          %v3571 = vpop.f32.mrf.mxu0
          %v3572 = vadd.f32 %v3559, %v3571
          %v3573 = vpop.f32.mrf.mxu0
          %3574 = vdwg.mxu0
          %3575 = vmatpush.bf16.msra.mxu0 %v2942
          %3576 = vmatpush.bf16.msra.mxu0 %v2938
          %3577 = vmatpush.bf16.msra.mxu0 %v2934
          %3578 = vmatpush.bf16.msra.mxu0 %v2930
          %3579 = vmatpush.bf16.msra.mxu0 %v2926
          %3580 = vmatpush.bf16.msra.mxu0 %v2922
          %3581 = vmatpush.bf16.msra.mxu0 %v2918
          %3582 = vmatpush.bf16.msra.mxu0 %v2914
          %3583 = vmatmul.bf16.gmra.mxu0 %v1777
          %v3584 = vpop.f32.mrf.mxu0
          %v3585 = vadd.f32 %v3572, %v3584
          %v3586 = vpop.f32.mrf.mxu0
          %3587 = vdwg.mxu0
          %3588 = vmatpush.bf16.msra.mxu0 %v2974
          %3589 = vmatpush.bf16.msra.mxu0 %v2970
          %3590 = vmatpush.bf16.msra.mxu0 %v2966
          %3591 = vmatpush.bf16.msra.mxu0 %v2962
          %3592 = vmatpush.bf16.msra.mxu0 %v2958
          %3593 = vmatpush.bf16.msra.mxu0 %v2954
          %3594 = vmatpush.bf16.msra.mxu0 %v2950
          %3595 = vmatpush.bf16.msra.mxu0 %v2946
          %3596 = vmatmul.bf16.gmra.mxu0 %v1778
          %v3597 = vpop.f32.mrf.mxu0
          %v3598 = vadd.f32 %v3585, %v3597
          %v3599 = vpop.f32.mrf.mxu0
          %3600 = vdwg.mxu0
          %3601 = vmatpush.bf16.msra.mxu0 %v3006
          %3602 = vmatpush.bf16.msra.mxu0 %v3002
          %3603 = vmatpush.bf16.msra.mxu0 %v2998
          %3604 = vmatpush.bf16.msra.mxu0 %v2994
          %3605 = vmatpush.bf16.msra.mxu0 %v2990
          %3606 = vmatpush.bf16.msra.mxu0 %v2986
          %3607 = vmatpush.bf16.msra.mxu0 %v2982
          %3608 = vmatpush.bf16.msra.mxu0 %v2978
          %3609 = vmatmul.bf16.gmra.mxu0 %v1779
          %v3610 = vpop.f32.mrf.mxu0
          %v3611 = vadd.f32 %v3598, %v3610
          %v3612 = vpop.f32.mrf.mxu0
          %3613 = vdwg.mxu0
          %3614 = vmatpush.bf16.msra.mxu0 %v3038
          %3615 = vmatpush.bf16.msra.mxu0 %v3034
          %3616 = vmatpush.bf16.msra.mxu0 %v3030
          %3617 = vmatpush.bf16.msra.mxu0 %v3026
          %3618 = vmatpush.bf16.msra.mxu0 %v3022
          %3619 = vmatpush.bf16.msra.mxu0 %v3018
          %3620 = vmatpush.bf16.msra.mxu0 %v3014
          %3621 = vmatpush.bf16.msra.mxu0 %v3010
          %3622 = vmatmul.bf16.gmra.mxu0 %v1780
          %v3623 = vpop.f32.mrf.mxu0
          %v3624 = vadd.f32 %v3611, %v3623
          %v3625 = vpop.f32.mrf.mxu0
          %3626 = vdwg.mxu0
          %3627 = vmatpush.bf16.msra.mxu0 %v3070
          %3628 = vmatpush.bf16.msra.mxu0 %v3066
          %3629 = vmatpush.bf16.msra.mxu0 %v3062
          %3630 = vmatpush.bf16.msra.mxu0 %v3058
          %3631 = vmatpush.bf16.msra.mxu0 %v3054
          %3632 = vmatpush.bf16.msra.mxu0 %v3050
          %3633 = vmatpush.bf16.msra.mxu0 %v3046
          %3634 = vmatpush.bf16.msra.mxu0 %v3042
          %3635 = vmatmul.bf16.gmra.mxu0 %v1781
          %v3636 = vpop.f32.mrf.mxu0
          %v3637 = vadd.f32 %v3624, %v3636
          %v3638 = vpop.f32.mrf.mxu0
          %3639 = vdwg.mxu0
          %3640 = vmatpush.bf16.msra.mxu0 %v2847
          %3641 = vmatpush.bf16.msra.mxu0 %v2843
          %3642 = vmatpush.bf16.msra.mxu0 %v2839
          %3643 = vmatpush.bf16.msra.mxu0 %v2835
          %3644 = vmatpush.bf16.msra.mxu0 %v2831
          %3645 = vmatpush.bf16.msra.mxu0 %v2827
          %3646 = vmatpush.bf16.msra.mxu0 %v2823
          %3647 = vmatpush.bf16.msra.mxu0 %v2819
          %3648 = vmatmul.bf16.gmra.mxu0 %v1774
          %v3649 = vpop.f32.mrf.mxu0
          %v3650 = vadd.f32 %v2043, %v3649
          %v3651 = vpop.f32.mrf.mxu0
          %3652 = vdwg.mxu0
          %3653 = vmatpush.bf16.msra.mxu0 %v2879
          %3654 = vmatpush.bf16.msra.mxu0 %v2875
          %3655 = vmatpush.bf16.msra.mxu0 %v2871
          %3656 = vmatpush.bf16.msra.mxu0 %v2867
          %3657 = vmatpush.bf16.msra.mxu0 %v2863
          %3658 = vmatpush.bf16.msra.mxu0 %v2859
          %3659 = vmatpush.bf16.msra.mxu0 %v2855
          %3660 = vmatpush.bf16.msra.mxu0 %v2851
          %3661 = vmatmul.bf16.gmra.mxu0 %v1775
          %v3662 = vpop.f32.mrf.mxu0
          %v3663 = vadd.f32 %v3650, %v3662
          %v3664 = vpop.f32.mrf.mxu0
          %3665 = vdwg.mxu0
          %3666 = vmatpush.bf16.msra.mxu0 %v2911
          %3667 = vmatpush.bf16.msra.mxu0 %v2907
          %3668 = vmatpush.bf16.msra.mxu0 %v2903
          %3669 = vmatpush.bf16.msra.mxu0 %v2899
          %3670 = vmatpush.bf16.msra.mxu0 %v2895
          %3671 = vmatpush.bf16.msra.mxu0 %v2891
          %3672 = vmatpush.bf16.msra.mxu0 %v2887
          %3673 = vmatpush.bf16.msra.mxu0 %v2883
          %3674 = vmatmul.bf16.gmra.mxu0 %v1776
          %v3675 = vpop.f32.mrf.mxu0
          %v3676 = vadd.f32 %v3663, %v3675
          %v3677 = vpop.f32.mrf.mxu0
          %3678 = vdwg.mxu0
          %3679 = vmatpush.bf16.msra.mxu0 %v2943
          %3680 = vmatpush.bf16.msra.mxu0 %v2939
          %3681 = vmatpush.bf16.msra.mxu0 %v2935
          %3682 = vmatpush.bf16.msra.mxu0 %v2931
          %3683 = vmatpush.bf16.msra.mxu0 %v2927
          %3684 = vmatpush.bf16.msra.mxu0 %v2923
          %3685 = vmatpush.bf16.msra.mxu0 %v2919
          %3686 = vmatpush.bf16.msra.mxu0 %v2915
          %3687 = vmatmul.bf16.gmra.mxu0 %v1777
          %v3688 = vpop.f32.mrf.mxu0
          %v3689 = vadd.f32 %v3676, %v3688
          %v3690 = vpop.f32.mrf.mxu0
          %3691 = vdwg.mxu0
          %3692 = vmatpush.bf16.msra.mxu0 %v2975
          %3693 = vmatpush.bf16.msra.mxu0 %v2971
          %3694 = vmatpush.bf16.msra.mxu0 %v2967
          %3695 = vmatpush.bf16.msra.mxu0 %v2963
          %3696 = vmatpush.bf16.msra.mxu0 %v2959
          %3697 = vmatpush.bf16.msra.mxu0 %v2955
          %3698 = vmatpush.bf16.msra.mxu0 %v2951
          %3699 = vmatpush.bf16.msra.mxu0 %v2947
          %3700 = vmatmul.bf16.gmra.mxu0 %v1778
          %v3701 = vpop.f32.mrf.mxu0
          %v3702 = vadd.f32 %v3689, %v3701
          %v3703 = vpop.f32.mrf.mxu0
          %3704 = vdwg.mxu0
          %3705 = vmatpush.bf16.msra.mxu0 %v3007
          %3706 = vmatpush.bf16.msra.mxu0 %v3003
          %3707 = vmatpush.bf16.msra.mxu0 %v2999
          %3708 = vmatpush.bf16.msra.mxu0 %v2995
          %3709 = vmatpush.bf16.msra.mxu0 %v2991
          %3710 = vmatpush.bf16.msra.mxu0 %v2987
          %3711 = vmatpush.bf16.msra.mxu0 %v2983
          %3712 = vmatpush.bf16.msra.mxu0 %v2979
          %3713 = vmatmul.bf16.gmra.mxu0 %v1779
          %v3714 = vpop.f32.mrf.mxu0
          %v3715 = vadd.f32 %v3702, %v3714
          %v3716 = vpop.f32.mrf.mxu0
          %3717 = vdwg.mxu0
          %3718 = vmatpush.bf16.msra.mxu0 %v3039
          %3719 = vmatpush.bf16.msra.mxu0 %v3035
          %3720 = vmatpush.bf16.msra.mxu0 %v3031
          %3721 = vmatpush.bf16.msra.mxu0 %v3027
          %3722 = vmatpush.bf16.msra.mxu0 %v3023
          %3723 = vmatpush.bf16.msra.mxu0 %v3019
          %3724 = vmatpush.bf16.msra.mxu0 %v3015
          %3725 = vmatpush.bf16.msra.mxu0 %v3011
          %3726 = vmatmul.bf16.gmra.mxu0 %v1780
          %v3727 = vpop.f32.mrf.mxu0
          %v3728 = vadd.f32 %v3715, %v3727
          %v3729 = vpop.f32.mrf.mxu0
          %3730 = vdwg.mxu0
          %3731 = vmatpush.bf16.msra.mxu0 %v3071
          %3732 = vmatpush.bf16.msra.mxu0 %v3067
          %3733 = vmatpush.bf16.msra.mxu0 %v3063
          %3734 = vmatpush.bf16.msra.mxu0 %v3059
          %3735 = vmatpush.bf16.msra.mxu0 %v3055
          %3736 = vmatpush.bf16.msra.mxu0 %v3051
          %3737 = vmatpush.bf16.msra.mxu0 %v3047
          %3738 = vmatpush.bf16.msra.mxu0 %v3043
          %3739 = vmatmul.bf16.gmra.mxu0 %v1781
          %v3740 = vpop.f32.mrf.mxu0
          %v3741 = vadd.f32 %v3728, %v3740
          %v3742 = vpop.f32.mrf.mxu0
          %3743 = vdwg.mxu0
          %v3744 = vadd.f32 %v3429, %v3533
          %v3745 = vadd.f32 %v3744, %v3637
          %v3746 = vadd.f32 %v3745, %v3741
          %3747 = vadd.xlane.f32.xlu0 %v3746
          %v3748 = vpop.xlane.xlu0 %3747
          %v3749 = vrcp.pop 512.0
          %v3750 = vmul.f32 512.0, %v3749
          %v3751 = vsub.f32 1.0, %v3750
          %v3752 = vmul.f32 %v3749, %v3751
          %v3753 = vadd.f32 %v3749, %v3752
          %vm3754 = vweird.f32 %v3749
          %v3755 = vsel %vm3754, %v3749, %v3753
          %v3756 = vmul.f32 %v3748, %v3755
          %v3757 = vsub.f32 %v3429, %v3756
          %v3758 = vsub.f32 %v3533, %v3756
          %v3759 = vsub.f32 %v3637, %v3756
          %v3760 = vsub.f32 %v3741, %v3756
          %v3761 = vmul.f32 %v3757, %v3757
          %v3762 = vmul.f32 %v3758, %v3758
          %v3763 = vmul.f32 %v3759, %v3759
          %v3764 = vmul.f32 %v3760, %v3760
          %v3765 = vadd.f32 %v3761, %v3762
          %v3766 = vadd.f32 %v3765, %v3763
          %v3767 = vadd.f32 %v3766, %v3764
          %3768 = vadd.xlane.f32.xlu0 %v3767
          %v3769 = vpop.xlane.xlu0 %3768
          %v3770 = vmul.f32 %v3769, %v3755
          %v3771 = vadd.f32 %v3770, 1e-05
          %v3772 = vrsqrt.pop %v3771
          %v3773 = vmul.f32 %v3772, %v3771
          %v3774 = vmul.f32 %v3773, %v3772
          %v3775 = vmul.f32 0.5, %v3774
          %v3776 = vsub.f32 1.5, %v3775
          %v3777 = vmul.f32 %v3772, %v3776
          %vm3778 = vweird.f32 %v3771
          %vm3779 = vweird.f32 %v3772
          %vm3780 = vmor %vm3778, %vm3779
          %v3781 = vsel %vm3780, %v3772, %v3777
          %v3782 = vmul.f32 %v3757, %v3781
          %v3783 = vmul.f32 %v3758, %v3781
          %v3784 = vmul.f32 %v3759, %v3781
          %v3785 = vmul.f32 %v3760, %v3781
          %v3786 = vld [vmem:[#allocation15] sm:$0xf]
          %v3788 = vperm.slane %v3786, 0
          %v3789 = vperm.slane %v3786, 1
          %v3790 = vperm.slane %v3786, 2
          %v3791 = vperm.slane %v3786, 3
          %v3796 = vmul.f32 %v3782, %v3788
          %v3797 = vmul.f32 %v3783, %v3789
          %v3798 = vmul.f32 %v3784, %v3790
          %v3799 = vmul.f32 %v3785, %v3791
          %v3800 = vld [vmem:[#allocation17] sm:$0xf]
          %v3802 = vperm.slane %v3800, 0
          %v3803 = vperm.slane %v3800, 1
          %v3804 = vperm.slane %v3800, 2
          %v3805 = vperm.slane %v3800, 3
          %v3810 = vadd.f32 %v3796, %v3802
          %v3811 = vadd.f32 %v3797, %v3803
          %v3812 = vadd.f32 %v3798, %v3804
          %v3813 = vadd.f32 %v3799, %v3805
          %v3814 = vmax.f32 %v3810, 0.0
          %v3815 = vmax.f32 %v3811, 0.0
          %v3816 = vmax.f32 %v3812, 0.0
          %v3817 = vmax.f32 %v3813, 0.0
          %v3818 = vpack.c.bf16 %v3814, %v3814
          %v3819 = vpack.c.bf16 %v3815, %v3815
          %v3820 = vpack.c.bf16 %v3816, %v3816
          %v3821 = vpack.c.bf16 %v3817, %v3817
          %v3822 = vld [vmem:[#allocation18] sm:$0xf]
          %v3823 = vld [vmem:[#allocation18 + $0x4] sm:$0xf]
          %v3824 = vld [vmem:[#allocation18 + $0x8] sm:$0xf]
          %v3825 = vld [vmem:[#allocation18 + $0xc] sm:$0xf]
          %v3826 = vld [vmem:[#allocation18 + $0x10] sm:$0xf]
          %v3827 = vld [vmem:[#allocation18 + $0x14] sm:$0xf]
          %v3828 = vld [vmem:[#allocation18 + $0x18] sm:$0xf]
          %v3829 = vld [vmem:[#allocation18 + $0x1c] sm:$0xf]
          %v3830 = vld [vmem:[#allocation18 + $0x20] sm:$0xf]
          %v3831 = vld [vmem:[#allocation18 + $0x24] sm:$0xf]
          %v3832 = vld [vmem:[#allocation18 + $0x28] sm:$0xf]
          %v3833 = vld [vmem:[#allocation18 + $0x2c] sm:$0xf]
          %v3834 = vld [vmem:[#allocation18 + $0x30] sm:$0xf]
          %v3835 = vld [vmem:[#allocation18 + $0x34] sm:$0xf]
          %v3836 = vld [vmem:[#allocation18 + $0x38] sm:$0xf]
          %v3837 = vld [vmem:[#allocation18 + $0x3c] sm:$0xf]
          %v3838 = vld [vmem:[#allocation18 + $0x40] sm:$0xf]
          %v3839 = vld [vmem:[#allocation18 + $0x44] sm:$0xf]
          %v3840 = vld [vmem:[#allocation18 + $0x48] sm:$0xf]
          %v3841 = vld [vmem:[#allocation18 + $0x4c] sm:$0xf]
          %v3842 = vld [vmem:[#allocation18 + $0x50] sm:$0xf]
          %v3843 = vld [vmem:[#allocation18 + $0x54] sm:$0xf]
          %v3844 = vld [vmem:[#allocation18 + $0x58] sm:$0xf]
          %v3845 = vld [vmem:[#allocation18 + $0x5c] sm:$0xf]
          %v3846 = vld [vmem:[#allocation18 + $0x60] sm:$0xf]
          %v3847 = vld [vmem:[#allocation18 + $0x64] sm:$0xf]
          %v3848 = vld [vmem:[#allocation18 + $0x68] sm:$0xf]
          %v3849 = vld [vmem:[#allocation18 + $0x6c] sm:$0xf]
          %v3850 = vld [vmem:[#allocation18 + $0x70] sm:$0xf]
          %v3851 = vld [vmem:[#allocation18 + $0x74] sm:$0xf]
          %v3852 = vld [vmem:[#allocation18 + $0x78] sm:$0xf]
          %v3853 = vld [vmem:[#allocation18 + $0x7c] sm:$0xf]
          %v3854 = vld [vmem:[#allocation18 + $0x80] sm:$0xf]
          %v3855 = vld [vmem:[#allocation18 + $0x84] sm:$0xf]
          %v3856 = vld [vmem:[#allocation18 + $0x88] sm:$0xf]
          %v3857 = vld [vmem:[#allocation18 + $0x8c] sm:$0xf]
          %v3858 = vld [vmem:[#allocation18 + $0x90] sm:$0xf]
          %v3859 = vld [vmem:[#allocation18 + $0x94] sm:$0xf]
          %v3860 = vld [vmem:[#allocation18 + $0x98] sm:$0xf]
          %v3861 = vld [vmem:[#allocation18 + $0x9c] sm:$0xf]
          %v3862 = vld [vmem:[#allocation18 + $0xa0] sm:$0xf]
          %v3863 = vld [vmem:[#allocation18 + $0xa4] sm:$0xf]
          %v3864 = vld [vmem:[#allocation18 + $0xa8] sm:$0xf]
          %v3865 = vld [vmem:[#allocation18 + $0xac] sm:$0xf]
          %v3866 = vld [vmem:[#allocation18 + $0xb0] sm:$0xf]
          %v3867 = vld [vmem:[#allocation18 + $0xb4] sm:$0xf]
          %v3868 = vld [vmem:[#allocation18 + $0xb8] sm:$0xf]
          %v3869 = vld [vmem:[#allocation18 + $0xbc] sm:$0xf]
          %v3870 = vld [vmem:[#allocation18 + $0xc0] sm:$0xf]
          %v3871 = vld [vmem:[#allocation18 + $0xc4] sm:$0xf]
          %v3872 = vld [vmem:[#allocation18 + $0xc8] sm:$0xf]
          %v3873 = vld [vmem:[#allocation18 + $0xcc] sm:$0xf]
          %v3874 = vld [vmem:[#allocation18 + $0xd0] sm:$0xf]
          %v3875 = vld [vmem:[#allocation18 + $0xd4] sm:$0xf]
          %v3876 = vld [vmem:[#allocation18 + $0xd8] sm:$0xf]
          %v3877 = vld [vmem:[#allocation18 + $0xdc] sm:$0xf]
          %v3878 = vld [vmem:[#allocation18 + $0xe0] sm:$0xf]
          %v3879 = vld [vmem:[#allocation18 + $0xe4] sm:$0xf]
          %v3880 = vld [vmem:[#allocation18 + $0xe8] sm:$0xf]
          %v3881 = vld [vmem:[#allocation18 + $0xec] sm:$0xf]
          %v3882 = vld [vmem:[#allocation18 + $0xf0] sm:$0xf]
          %v3883 = vld [vmem:[#allocation18 + $0xf4] sm:$0xf]
          %v3884 = vld [vmem:[#allocation18 + $0xf8] sm:$0xf]
          %v3885 = vld [vmem:[#allocation18 + $0xfc] sm:$0xf]
          %v3886 = vld [vmem:[#allocation20] sm:$0x1]
          %v3888 = vperm.slane %v3886, 0
          %v3954 = vunpack.c.l.b16 %v3822
          %v3955 = vunpack.c.l.b16 %v3823
          %v3956 = vunpack.c.l.b16 %v3824
          %v3957 = vunpack.c.l.b16 %v3825
          %v3958 = vunpack.c.l.b16 %v3826
          %v3959 = vunpack.c.l.b16 %v3827
          %v3960 = vunpack.c.l.b16 %v3828
          %v3961 = vunpack.c.l.b16 %v3829
          %v3962 = vunpack.c.l.b16 %v3830
          %v3963 = vunpack.c.l.b16 %v3831
          %v3964 = vunpack.c.l.b16 %v3832
          %v3965 = vunpack.c.l.b16 %v3833
          %v3966 = vunpack.c.l.b16 %v3834
          %v3967 = vunpack.c.l.b16 %v3835
          %v3968 = vunpack.c.l.b16 %v3836
          %v3969 = vunpack.c.l.b16 %v3837
          %v3970 = vunpack.c.l.b16 %v3838
          %v3971 = vunpack.c.l.b16 %v3839
          %v3972 = vunpack.c.l.b16 %v3840
          %v3973 = vunpack.c.l.b16 %v3841
          %v3974 = vunpack.c.l.b16 %v3842
          %v3975 = vunpack.c.l.b16 %v3843
          %v3976 = vunpack.c.l.b16 %v3844
          %v3977 = vunpack.c.l.b16 %v3845
          %v3978 = vunpack.c.l.b16 %v3846
          %v3979 = vunpack.c.l.b16 %v3847
          %v3980 = vunpack.c.l.b16 %v3848
          %v3981 = vunpack.c.l.b16 %v3849
          %v3982 = vunpack.c.l.b16 %v3850
          %v3983 = vunpack.c.l.b16 %v3851
          %v3984 = vunpack.c.l.b16 %v3852
          %v3985 = vunpack.c.l.b16 %v3853
          %v3986 = vunpack.c.l.b16 %v3854
          %v3987 = vunpack.c.l.b16 %v3855
          %v3988 = vunpack.c.l.b16 %v3856
          %v3989 = vunpack.c.l.b16 %v3857
          %v3990 = vunpack.c.l.b16 %v3858
          %v3991 = vunpack.c.l.b16 %v3859
          %v3992 = vunpack.c.l.b16 %v3860
          %v3993 = vunpack.c.l.b16 %v3861
          %v3994 = vunpack.c.l.b16 %v3862
          %v3995 = vunpack.c.l.b16 %v3863
          %v3996 = vunpack.c.l.b16 %v3864
          %v3997 = vunpack.c.l.b16 %v3865
          %v3998 = vunpack.c.l.b16 %v3866
          %v3999 = vunpack.c.l.b16 %v3867
          %v4000 = vunpack.c.l.b16 %v3868
          %v4001 = vunpack.c.l.b16 %v3869
          %v4002 = vunpack.c.l.b16 %v3870
          %v4003 = vunpack.c.l.b16 %v3871
          %v4004 = vunpack.c.l.b16 %v3872
          %v4005 = vunpack.c.l.b16 %v3873
          %v4006 = vunpack.c.l.b16 %v3874
          %v4007 = vunpack.c.l.b16 %v3875
          %v4008 = vunpack.c.l.b16 %v3876
          %v4009 = vunpack.c.l.b16 %v3877
          %v4010 = vunpack.c.l.b16 %v3878
          %v4011 = vunpack.c.l.b16 %v3879
          %v4012 = vunpack.c.l.b16 %v3880
          %v4013 = vunpack.c.l.b16 %v3881
          %v4014 = vunpack.c.l.b16 %v3882
          %v4015 = vunpack.c.l.b16 %v3883
          %v4016 = vunpack.c.l.b16 %v3884
          %v4017 = vunpack.c.l.b16 %v3885
          %v4018 = vpack.c.b16 %v3955, %v3954
          %v4019 = vpack.c.b16 %v3957, %v3956
          %v4020 = vpack.c.b16 %v3959, %v3958
          %v4021 = vpack.c.b16 %v3961, %v3960
          %v4022 = vpack.c.b16 %v3963, %v3962
          %v4023 = vpack.c.b16 %v3965, %v3964
          %v4024 = vpack.c.b16 %v3967, %v3966
          %v4025 = vpack.c.b16 %v3969, %v3968
          %v4026 = vpack.c.b16 %v3971, %v3970
          %v4027 = vpack.c.b16 %v3973, %v3972
          %v4028 = vpack.c.b16 %v3975, %v3974
          %v4029 = vpack.c.b16 %v3977, %v3976
          %v4030 = vpack.c.b16 %v3979, %v3978
          %v4031 = vpack.c.b16 %v3981, %v3980
          %v4032 = vpack.c.b16 %v3983, %v3982
          %v4033 = vpack.c.b16 %v3985, %v3984
          %v4034 = vpack.c.b16 %v3987, %v3986
          %v4035 = vpack.c.b16 %v3989, %v3988
          %v4036 = vpack.c.b16 %v3991, %v3990
          %v4037 = vpack.c.b16 %v3993, %v3992
          %v4038 = vpack.c.b16 %v3995, %v3994
          %v4039 = vpack.c.b16 %v3997, %v3996
          %v4040 = vpack.c.b16 %v3999, %v3998
          %v4041 = vpack.c.b16 %v4001, %v4000
          %v4042 = vpack.c.b16 %v4003, %v4002
          %v4043 = vpack.c.b16 %v4005, %v4004
          %v4044 = vpack.c.b16 %v4007, %v4006
          %v4045 = vpack.c.b16 %v4009, %v4008
          %v4046 = vpack.c.b16 %v4011, %v4010
          %v4047 = vpack.c.b16 %v4013, %v4012
          %v4048 = vpack.c.b16 %v4015, %v4014
          %v4049 = vpack.c.b16 %v4017, %v4016
          %4082 = vmatpush.bf16.msra.mxu0 %v4025
          %4083 = vmatpush.bf16.msra.mxu0 %v4024
          %4084 = vmatpush.bf16.msra.mxu0 %v4023
          %4085 = vmatpush.bf16.msra.mxu0 %v4022
          %4086 = vmatpush.bf16.msra.mxu0 %v4021
          %4087 = vmatpush.bf16.msra.mxu0 %v4020
          %4088 = vmatpush.bf16.msra.mxu0 %v4019
          %4089 = vmatpush.bf16.msra.mxu0 %v4018
          %4090 = vmatmul.bf16.gmra.mxu0 %v3818
          %v4091 = vpop.f32.mrf.mxu0
          %v4092 = vadd.f32 %v3888, %v4091
          %v4093 = vpop.f32.mrf.mxu0
          %4094 = vdwg.mxu0
          %4095 = vmatpush.bf16.msra.mxu0 %v4033
          %4096 = vmatpush.bf16.msra.mxu0 %v4032
          %4097 = vmatpush.bf16.msra.mxu0 %v4031
          %4098 = vmatpush.bf16.msra.mxu0 %v4030
          %4099 = vmatpush.bf16.msra.mxu0 %v4029
          %4100 = vmatpush.bf16.msra.mxu0 %v4028
          %4101 = vmatpush.bf16.msra.mxu0 %v4027
          %4102 = vmatpush.bf16.msra.mxu0 %v4026
          %4103 = vmatmul.bf16.gmra.mxu0 %v3819
          %v4104 = vpop.f32.mrf.mxu0
          %v4105 = vadd.f32 %v4092, %v4104
          %v4106 = vpop.f32.mrf.mxu0
          %4107 = vdwg.mxu0
          %4108 = vmatpush.bf16.msra.mxu0 %v4041
          %4109 = vmatpush.bf16.msra.mxu0 %v4040
          %4110 = vmatpush.bf16.msra.mxu0 %v4039
          %4111 = vmatpush.bf16.msra.mxu0 %v4038
          %4112 = vmatpush.bf16.msra.mxu0 %v4037
          %4113 = vmatpush.bf16.msra.mxu0 %v4036
          %4114 = vmatpush.bf16.msra.mxu0 %v4035
          %4115 = vmatpush.bf16.msra.mxu0 %v4034
          %4116 = vmatmul.bf16.gmra.mxu0 %v3820
          %v4117 = vpop.f32.mrf.mxu0
          %v4118 = vadd.f32 %v4105, %v4117
          %v4119 = vpop.f32.mrf.mxu0
          %4120 = vdwg.mxu0
          %4121 = vmatpush.bf16.msra.mxu0 %v4049
          %4122 = vmatpush.bf16.msra.mxu0 %v4048
          %4123 = vmatpush.bf16.msra.mxu0 %v4047
          %4124 = vmatpush.bf16.msra.mxu0 %v4046
          %4125 = vmatpush.bf16.msra.mxu0 %v4045
          %4126 = vmatpush.bf16.msra.mxu0 %v4044
          %4127 = vmatpush.bf16.msra.mxu0 %v4043
          %4128 = vmatpush.bf16.msra.mxu0 %v4042
          %4129 = vmatmul.bf16.gmra.mxu0 %v3821
          %v4130 = vpop.f32.mrf.mxu0
          %v4131 = vadd.f32 %v4118, %v4130
          %v4132 = vpop.f32.mrf.mxu0
          %4133 = vdwg.mxu0
          %4134 = vst [vmem:[#allocation21] sm:$0xff] %v4131
        $region116: #{tpu_custom_call.1} parent=63 // pred_fallthru
          _
        // Predicated region
        $region117: #{tpu_custom_call.1} parent=63 // pred_check
          %p4135 = pneg %p299
        $region118: #{tpu_custom_call.1} parent=63 // pred_check_branch
          %4137 = sbr.rel (%p4135) target = $region120
        $region119: #{tpu_custom_call.1} parent=63 // pred_region
          %4139 = vsyncadd [#allocation5], 0
          %s4141 = sshll.u32 [#allocation21], 4
          %s4142 = int_to_ptr.vmem [resolvable:$true] %s4141
          %s4143 = sshll.u32 %s11, 4
          %s4144 = int_to_ptr.hbm [resolvable:$true] %s4143
          %4146 = dma.vmem_to_hbm [thread:$0]  %s4142, 128, %s4144, [#allocation5]
        $region120: #{tpu_custom_call.1} parent=63 // pred_fallthru
          _
        // Predicated region
        $region121: #{tpu_custom_call.1} parent=63 // pred_check
          %p4147 = pneg %p299
        $region122: #{tpu_custom_call.1} parent=63 // pred_check_branch
          %4149 = sbr.rel (%p4147) target = $region124
        $region123: #{tpu_custom_call.1} parent=63 // pred_region
          %4151 = dma.done [#allocation5], 128
        $region124: #{tpu_custom_call.1} parent=63 // pred_fallthru
          _
      $region64: #{tpu_custom_call.1} parent=5 // pred_fallthru
        _
      %p4152 = scmp.le.s32.totalorder 2, %s30
      // Predicated region
      $region125: #{tpu_custom_call.1} parent=5 // pred_check
        %p4153 = pneg %p4152
      $region126: #{tpu_custom_call.1} parent=5 // pred_check_branch
        %4155 = sbr.rel (%p4153) target = $region128
      $region127: #{tpu_custom_call.1} parent=5 // pred_region
        %s4156 = ssub.s32 %s30, 2
      $region128: #{tpu_custom_call.1} parent=5 // pred_fallthru
        _
    $region6: #{tpu_custom_call.1} parent=1 // loop_footer
      %s34 = sadd.s32 1, %s30
    $region7: #{tpu_custom_call.1} parent=1 // loop_footer_branch
      %29 = sbr.rel target = $region3
    $region8: #{tpu_custom_call.1} parent=1 // loop_exit
      _
    %4157 = vsyncpa [#allocation4], 1
    %s4158 = scalar_lea.sflag [#allocation4], 1
    %4159 = vsyncpa %s4158, 1
    %4160 = vsyncpa [#allocation7], 1
    %s4161 = scalar_lea.sflag [#allocation7], 1
    %4162 = vsyncpa %s4161, 1
    %4163 = vsyncpa [#allocation10], 1
    %s4164 = scalar_lea.sflag [#allocation10], 1
    %4165 = vsyncpa %s4164, 1
    %4166 = vsyncpa [#allocation13], 1
    %4167 = vsyncpa [#allocation16], 1
    %4168 = vsyncpa [#allocation19], 1
    %4169 = vsyncpa [#allocation5], 1
    %s4170 = scalar_lea.sflag [#allocation5], 1
    %4171 = vsyncpa %s4170, 1

</llo_original>
